<compile_context>
chip_gen: v5e
topology: v5e:2x2
jax: 0.10.0
libtpu: 0.0.40
codegen_flags: <defaults>
</compile_context>

<pallas_src>
import functools

import jax
import jax.numpy as jnp
from jax import lax
from jax.experimental import pallas as pl
from jax.experimental.pallas import tpu as pltpu


def _round_up(x, m):
    return (x + m - 1) // m * m


def _padded_vmem_bytes(shape, itemsize):
    """Bytes of a VMEM buffer in its padded (sublane, lane) layout."""
    if len(shape) == 0:
        return itemsize
    if len(shape) == 1:
        return _round_up(shape[0], 128) * itemsize
    sub = max(1, 32 // itemsize)
    lanes = _round_up(shape[-1], 128)
    subl = _round_up(shape[-2], sub)
    lead = 1
    for s in shape[:-2]:
        lead *= int(s)
    return lead * subl * lanes * itemsize


def _vmem_capacity_bytes():
    try:
        info = pltpu.get_tpu_info()
        for name in ("vmem_capacity_bytes", "vmem_bytes", "vmem_size_bytes"):
            v = getattr(info, name, None)
            if v:
                return int(v)
    except Exception:
        pass
    return 64 * 1024 * 1024          # conservative (v7x-sized) fallback


def _num_tensorcores():
    try:
        kind = jax.devices()[0].device_kind.lower()
        if "v7" in kind or "7x" in kind or "v4" in kind:
            return 2                 # two TensorCores share the parallel axis
    except Exception:
        pass
    return 1


def _build_tap_masks(H, W, K, pad):
    """(K*K, H*W) f32 validity mask per conv tap (handles zero padding and
    prevents column wrap-around in the flattened H*W layout)."""
    r = jnp.arange(H, dtype=jnp.int32)[:, None]
    c = jnp.arange(W, dtype=jnp.int32)[None, :]
    rows = []
    for dy in range(K):
        for dx in range(K):
            rr = r + (dy - pad)
            cc = c + (dx - pad)
            ok = (rr >= 0) & (rr < H) & (cc >= 0) & (cc < W)
            rows.append(ok.astype(jnp.float32).reshape(H * W))
    return jnp.stack(rows, axis=0)


def _spatial_attention_kernel(w_ref, mask_ref, x_ref, o_ref,
                              sum_acc, max_acc, pad_ref,
                              *, C, K, pad, W, HW, LPAD, nb):
    c_idx = pl.program_id(1)

    # ---- init running sum / max accumulators at the first channel block ----
    @pl.when(c_idx == 0)
    def _():
        sum_acc[...] = jnp.zeros(sum_acc.shape, sum_acc.dtype)
        max_acc[...] = jnp.full(max_acc.shape, -jnp.inf, max_acc.dtype)

    # ---- fused channel-sum and channel-max over this (nb, ct, HW) block ----
    blk = x_ref[...]
    sum_acc[...] = sum_acc[...] + jnp.sum(blk, axis=1, dtype=jnp.float32)
    max_acc[...] = jnp.maximum(max_acc[...],
                               jnp.max(blk, axis=1).astype(jnp.float32))

    # ---- finalize: KxK conv over [avg, max] (zero padding) + sigmoid ----
    @pl.when(c_idx == pl.num_programs(1) - 1)
    def _():
        # Flat, zero-haloed [avg, max] maps.  The halo only needs pad*(W+1)
        # lanes; LPAD rounds it to 128 so the interior store is lane-aligned.
        pad_ref[...] = jnp.zeros(pad_ref.shape, pad_ref.dtype)
        pad_ref[0, :, LPAD:LPAD + HW] = sum_acc[...] * (1.0 / C)   # channel mean
        pad_ref[1, :, LPAD:LPAD + HW] = max_acc[...]               # channel max

        acc = jnp.zeros((nb, HW), jnp.float32)
        for t in range(K * K):
            dy, dx = divmod(t, K)
            s = (dy - pad) * W + (dx - pad)                 # flat tap shift
            m = mask_ref[pl.ds(t, 1), :]                    # (1, HW) validity
            tap_avg = pad_ref[0, :, LPAD + s:LPAD + s + HW]
            tap_max = pad_ref[1, :, LPAD + s:LPAD + s + HW]
            acc = acc + m * (w_ref[t] * tap_avg + w_ref[K * K + t] * tap_max)

        o_ref[:, 0, :] = jax.nn.sigmoid(acc).astype(o_ref.dtype)


def _choose_tiles(N, C, HW, in_isz, out_isz, K, lflat, budget, blk_cap, two_tc):
    """Pick (nb, ct) dividing (N, C) exactly, with padded-layout VMEM accounting."""
    sub_in = max(1, 32 // in_isz)

    nb_cap = N
    if two_tc and N >= 2:
        nb_cap = max(1, N // 2)       # keep >=2 steps on the parallel axis
    nb_cap = min(nb_cap, 8)
    nb_cands = [d for d in range(nb_cap, 0, -1) if N % d == 0] or [1]

    # ct must equal C or be a sublane multiple (BlockSpec (8,128) rule).
    ct_cands = [d for d in range(C, 0, -1)
                if C % d == 0 and (d == C or d % sub_in == 0)] or [C]

    def footprint(nb, ct):
        xblk = _padded_vmem_bytes((nb, ct, HW), in_isz)
        fixed = (2 * _padded_vmem_bytes((nb, HW), 4)               # sum/max acc
                 + _padded_vmem_bytes((2, nb, lflat), 4)           # conv scratch
                 + 2 * _padded_vmem_bytes((K * K, HW), 4)          # tap masks
                 + 2 * _padded_vmem_bytes((nb, 1, HW), out_isz))   # out blocks
        return xblk, 2 * xblk + fixed          # double-buffered input

    best = None
    for nb in nb_cands:
        for ct in ct_cands:
            xblk, total = footprint(nb, ct)
            if total <= budget and xblk <= blk_cap:
                if best is None or nb * ct > best[0] * best[1]:
                    best = (nb, ct)
                break                           # largest fitting ct for this nb
    if best is None:                            # last resort: smallest tiles
        best = (1, ct_cands[-1])
    return best


def spatial_attention(x, conv_w):
    """x: (N, C, H, W); conv_w: (1, 2, K, K) Conv2d weight (bias-free).
    Returns sigmoid(conv2d(cat([mean_c(x), max_c(x)], 1), conv_w)) -> (N, 1, H, W)."""
    N, C, H, W = x.shape
    K = conv_w.shape[-1]
    assert conv_w.shape == (1, 2, K, K) and K in (3, 7)
    pad = K // 2
    HW = H * W
    in_isz = x.dtype.itemsize
    out_isz = in_isz

    LPAD = _round_up(pad * (W + 1), 128)        # flat halo, lane-aligned interior
    lflat = HW + 2 * LPAD

    cap = _vmem_capacity_bytes()
    vmem_limit = max(32 * 1024 * 1024, min((cap * 3) // 4, 112 * 1024 * 1024))
    budget = int(vmem_limit * 0.85)
    blk_cap = min(12 * 1024 * 1024, budget // 3)
    two_tc = _num_tensorcores() >= 2
    # TODO(synk): when N == 1 on a 2-TensorCore chip, additionally split H*W
    # onto a second "parallel" grid axis so both cores get work.
    nb, ct = _choose_tiles(N, C, HW, in_isz, out_isz, K, lflat,
                           budget, blk_cap, two_tc)

    grid = (N // nb, C // ct)

    x_flat = x.reshape(N, C, HW)                      # free view of contiguous NCHW
    w_flat = conv_w.reshape(2 * K * K).astype(jnp.float32)
    masks = _build_tap_masks(H, W, K, pad)            # (K*K, HW) f32

    kernel = functools.partial(
        _spatial_attention_kernel,
        C=C, K=K, pad=pad, W=W, HW=HW, LPAD=LPAD, nb=nb)

    out = pl.pallas_call(
        kernel,
        out_shape=jax.ShapeDtypeStruct((N, 1, HW), x.dtype),
        grid_spec=pltpu.PrefetchScalarGridSpec(
            num_scalar_prefetch=0,
            grid=grid,
            in_specs=[
                # Conv weights: 2*K*K scalars in SMEM (read per-tap as scalars).
                pl.BlockSpec(memory_space=pltpu.MemorySpace.SMEM),
                # Per-tap validity masks: full block, constant index -> resident.
                pl.BlockSpec((K * K, HW), lambda n, c: (0, 0)),
                # x streamed lane-dense: (nb, ct, H*W) per step.
                pl.BlockSpec((nb, ct, HW), lambda n, c: (n, c, 0)),
            ],
            out_specs=pl.BlockSpec((nb, 1, HW), lambda n, c: (n, 0, 0)),
            scratch_shapes=[
                pltpu.VMEM((nb, HW), jnp.float32),         # running channel sum
                pltpu.VMEM((nb, HW), jnp.float32),         # running channel max
                pltpu.VMEM((2, nb, lflat), jnp.float32),   # zero-haloed [avg,max]
            ],
        ),
        compiler_params=pltpu.CompilerParams(
            dimension_semantics=("parallel", "arbitrary"),
            vmem_limit_bytes=int(vmem_limit),
        ),
        cost_estimate=pl.CostEstimate(
            flops=int(2 * N * C * HW + N * HW * (4 * K * K + 2)),
            transcendentals=int(N * HW),
            bytes_accessed=int(N * C * HW * in_isz + N * HW * out_isz
                               + K * K * HW * 4 + 2 * K * K * 4),
        ),
    )(w_flat, masks, x_flat)

    return out.reshape(N, 1, H, W)


def spatial_attention_ref(x, conv_w):
    """Pure-JAX reference mirroring the PyTorch forward."""
    avg = jnp.mean(x, axis=1, keepdims=True)
    mx = jnp.max(x, axis=1, keepdims=True)
    s = jnp.concatenate([avg, mx], axis=1)
    pad = conv_w.shape[-1] // 2
    y = lax.conv_general_dilated(
        s, conv_w, window_strides=(1, 1), padding=((pad, pad), (pad, pad)),
        dimension_numbers=("NCHW", "OIHW", "NCHW"),
        precision=lax.Precision.HIGHEST)
    return jax.nn.sigmoid(y)


if __name__ == "__main__":
    N, C, H, W = 2, 32, 16, 16
    K = 7  # kernel_size must be 3 or 7 per the module

    key = jax.random.PRNGKey(0)
    kx, kw = jax.random.split(key)
    x = jax.random.normal(kx, (N, C, H, W), dtype=jnp.float32)
    conv_w = jax.random.normal(kw, (1, 2, K, K), dtype=jnp.float32) * 0.1

    out = spatial_attention(x, conv_w)
    out = jax.block_until_ready(out)

    ref = spatial_attention_ref(x, conv_w)
    assert out.shape == (N, 1, H, W)
    assert jnp.allclose(out, ref, atol=3e-5, rtol=1e-5), float(
        jnp.max(jnp.abs(out - ref)))

    print("KERNEL_OK")
</pallas_src>

<mosaic_0001>
module attributes {stable_mosaic.version = 11 : i64} {
  func.func @_spatial_attention_kernel(%arg0: i32, %arg1: i32, %arg2: memref<98xf32, #tpu.memory_space<smem>>, %arg3: memref<49x256xf32, #tpu.memory_space<vmem>>, %arg4: memref<2x32x256xf32, #tpu.memory_space<vmem>>, %arg5: memref<2x1x256xf32, #tpu.memory_space<vmem>>, %arg6: memref<2x256xf32, #tpu.memory_space<vmem>>, %arg7: memref<2x256xf32, #tpu.memory_space<vmem>>, %arg8: memref<2x2x512xf32, #tpu.memory_space<vmem>>) attributes {dimension_semantics = [#tpu.dimension_semantics<parallel>, #tpu.dimension_semantics<arbitrary>], iteration_bounds = array<i64: 1, 1>, scalar_prefetch = 0 : i64, scratch_operands = 3 : i64, tpu.core_type = #tpu.core_type<tc>, window_params = [{transform_indices = @transform_0, window_bounds = array<i64: 98>}, {pipeline_mode = #tpu.pipeline_mode<synchronous>, transform_indices = @transform_1, window_bounds = array<i64: 49, 256>}, {transform_indices = @transform_2, window_bounds = array<i64: 2, 32, 256>}, {transform_indices = @transform_3, window_bounds = array<i64: 2, 1, 256>}]} {
    %c0_i32 = arith.constant 0 : i32
    %0 = arith.cmpi eq, %arg1, %c0_i32 : i32
    %1 = arith.extui %0 : i1 to i32
    %c0_i32_0 = arith.constant 0 : i32
    %2 = arith.cmpi ne, %1, %c0_i32_0 : i32
    scf.if %2 {
      %cst_14 = arith.constant 0.000000e+00 : f32
      %15 = vector.broadcast %cst_14 : f32 to vector<2x256xf32>
      %c0_15 = arith.constant 0 : index
      %c0_16 = arith.constant 0 : index
      %16 = vector.load %arg6[%c0_15, %c0_16] : memref<2x256xf32, #tpu.memory_space<vmem>>, vector<2x256xf32>
      tpu.vector_store %arg6[%c0_15, %c0_16], %15 {strides = array<i32>} : memref<2x256xf32, #tpu.memory_space<vmem>>, vector<2x256xf32>,
      %cst_17 = arith.constant 0xFF800000 : f32
      %17 = vector.broadcast %cst_17 : f32 to vector<2x256xf32>
      %c0_18 = arith.constant 0 : index
      %c0_19 = arith.constant 0 : index
      %18 = vector.load %arg7[%c0_18, %c0_19] : memref<2x256xf32, #tpu.memory_space<vmem>>, vector<2x256xf32>
      tpu.vector_store %arg7[%c0_18, %c0_19], %17 {strides = array<i32>} : memref<2x256xf32, #tpu.memory_space<vmem>>, vector<2x256xf32>,
    } else {
    }
    %c0 = arith.constant 0 : index
    %c0_1 = arith.constant 0 : index
    %c0_2 = arith.constant 0 : index
    %3 = vector.load %arg4[%c0, %c0_1, %c0_2] : memref<2x32x256xf32, #tpu.memory_space<vmem>>, vector<2x32x256xf32>
    %c0_3 = arith.constant 0 : index
    %c0_4 = arith.constant 0 : index
    %4 = vector.load %arg6[%c0_3, %c0_4] : memref<2x256xf32, #tpu.memory_space<vmem>>, vector<2x256xf32>
    %cst = arith.constant dense<0.000000e+00> : vector<2x256xf32>
    %5 = vector.multi_reduction <add>, %3, %cst [1] : vector<2x32x256xf32> to vector<2x256xf32>
    %6 = arith.addf %4, %5 : vector<2x256xf32>
    %c0_5 = arith.constant 0 : index
    %c0_6 = arith.constant 0 : index
    %7 = vector.load %arg6[%c0_5, %c0_6] : memref<2x256xf32, #tpu.memory_space<vmem>>, vector<2x256xf32>
    tpu.vector_store %arg6[%c0_5, %c0_6], %6 {strides = array<i32>} : memref<2x256xf32, #tpu.memory_space<vmem>>, vector<2x256xf32>,
    %c0_7 = arith.constant 0 : index
    %c0_8 = arith.constant 0 : index
    %8 = vector.load %arg7[%c0_7, %c0_8] : memref<2x256xf32, #tpu.memory_space<vmem>>, vector<2x256xf32>
    %cst_9 = arith.constant dense<0xFF800000> : vector<2x256xf32>
    %9 = vector.multi_reduction <maximumf>, %3, %cst_9 [1] : vector<2x32x256xf32> to vector<2x256xf32>
    %10 = arith.maximumf %8, %9 : vector<2x256xf32>
    %c0_10 = arith.constant 0 : index
    %c0_11 = arith.constant 0 : index
    %11 = vector.load %arg7[%c0_10, %c0_11] : memref<2x256xf32, #tpu.memory_space<vmem>>, vector<2x256xf32>
    tpu.vector_store %arg7[%c0_10, %c0_11], %10 {strides = array<i32>} : memref<2x256xf32, #tpu.memory_space<vmem>>, vector<2x256xf32>,
    %c0_i32_12 = arith.constant 0 : i32
    %12 = arith.cmpi eq, %arg1, %c0_i32_12 : i32
    %13 = arith.extui %12 : i1 to i32
    %c0_i32_13 = arith.constant 0 : i32
    %14 = arith.cmpi ne, %13, %c0_i32_13 : i32
    scf.if %14 {
      %cst_14 = arith.constant 0.000000e+00 : f32
      %15 = vector.broadcast %cst_14 : f32 to vector<2x2x512xf32>
      %c0_15 = arith.constant 0 : index
      %c0_16 = arith.constant 0 : index
      %c0_17 = arith.constant 0 : index
      %16 = vector.load %arg8[%c0_15, %c0_16, %c0_17] : memref<2x2x512xf32, #tpu.memory_space<vmem>>, vector<2x2x512xf32>
      tpu.vector_store %arg8[%c0_15, %c0_16, %c0_17], %15 {strides = array<i32>} : memref<2x2x512xf32, #tpu.memory_space<vmem>>, vector<2x2x512xf32>,
      %c0_18 = arith.constant 0 : index
      %c0_19 = arith.constant 0 : index
      %17 = vector.load %arg6[%c0_18, %c0_19] : memref<2x256xf32, #tpu.memory_space<vmem>>, vector<2x256xf32>
      %cst_20 = arith.constant 3.125000e-02 : f32
      %18 = vector.broadcast %cst_20 : f32 to vector<2x256xf32>
      %19 = arith.mulf %17, %18 : vector<2x256xf32>
      %c0_21 = arith.constant 0 : index
      %c0_22 = arith.constant 0 : index
      %c128 = arith.constant 128 : index
      %20 = vector.load %arg8[%c0_21, %c0_22, %c128] : memref<2x2x512xf32, #tpu.memory_space<vmem>>, vector<1x2x256xf32>
      %21 = vector.shape_cast %20 : vector<1x2x256xf32> to vector<2x256xf32>
      %22 = vector.shape_cast %19 : vector<2x256xf32> to vector<1x2x256xf32>
      tpu.vector_store %arg8[%c0_21, %c0_22, %c128], %22 {strides = array<i32>} : memref<2x2x512xf32, #tpu.memory_space<vmem>>, vector<1x2x256xf32>,
      %c0_23 = arith.constant 0 : index
      %c0_24 = arith.constant 0 : index
      %23 = vector.load %arg7[%c0_23, %c0_24] : memref<2x256xf32, #tpu.memory_space<vmem>>, vector<2x256xf32>
      %c1 = arith.constant 1 : index
      %c0_25 = arith.constant 0 : index
      %c128_26 = arith.constant 128 : index
      %24 = vector.load %arg8[%c1, %c0_25, %c128_26] : memref<2x2x512xf32, #tpu.memory_space<vmem>>, vector<1x2x256xf32>
      %25 = vector.shape_cast %24 : vector<1x2x256xf32> to vector<2x256xf32>
      %26 = vector.shape_cast %23 : vector<2x256xf32> to vector<1x2x256xf32>
      tpu.vector_store %arg8[%c1, %c0_25, %c128_26], %26 {strides = array<i32>} : memref<2x2x512xf32, #tpu.memory_space<vmem>>, vector<1x2x256xf32>,
      %cst_27 = arith.constant 0.000000e+00 : f32
      %27 = vector.broadcast %cst_27 : f32 to vector<2x256xf32>
      %c0_28 = arith.constant 0 : index
      %c0_29 = arith.constant 0 : index
      %28 = vector.load %arg3[%c0_28, %c0_29] : memref<49x256xf32, #tpu.memory_space<vmem>>, vector<1x256xf32>
      %c0_30 = arith.constant 0 : index
      %c0_31 = arith.constant 0 : index
      %c77 = arith.constant 77 : index
      %29 = vector.load %arg8[%c0_30, %c0_31, %c77] : memref<2x2x512xf32, #tpu.memory_space<vmem>>, vector<1x2x256xf32>
      %30 = vector.shape_cast %29 : vector<1x2x256xf32> to vector<2x256xf32>
      %c1_32 = arith.constant 1 : index
      %c0_33 = arith.constant 0 : index
      %c77_34 = arith.constant 77 : index
      %31 = vector.load %arg8[%c1_32, %c0_33, %c77_34] : memref<2x2x512xf32, #tpu.memory_space<vmem>>, vector<1x2x256xf32>
      %32 = vector.shape_cast %31 : vector<1x2x256xf32> to vector<2x256xf32>
      %c0_35 = arith.constant 0 : index
      %33 = memref.load %arg2[%c0_35] : memref<98xf32, #tpu.memory_space<smem>>
      %34 = vector.broadcast %33 : f32 to vector<2x256xf32>
      %35 = arith.mulf %34, %30 : vector<2x256xf32>
      %c49 = arith.constant 49 : index
      %36 = memref.load %arg2[%c49] : memref<98xf32, #tpu.memory_space<smem>>
      %37 = vector.broadcast %36 : f32 to vector<2x256xf32>
      %38 = arith.mulf %37, %32 : vector<2x256xf32>
      %39 = arith.addf %35, %38 : vector<2x256xf32>
      %40 = vector.broadcast %28 : vector<1x256xf32> to vector<2x256xf32>
      %41 = arith.mulf %40, %39 : vector<2x256xf32>
      %42 = arith.addf %27, %41 : vector<2x256xf32>
      %c1_36 = arith.constant 1 : index
      %c0_37 = arith.constant 0 : index
      %43 = vector.load %arg3[%c1_36, %c0_37] : memref<49x256xf32, #tpu.memory_space<vmem>>, vector<1x256xf32>
      %c0_38 = arith.constant 0 : index
      %c0_39 = arith.constant 0 : index
      %c78 = arith.constant 78 : index
      %44 = vector.load %arg8[%c0_38, %c0_39, %c78] : memref<2x2x512xf32, #tpu.memory_space<vmem>>, vector<1x2x256xf32>
      %45 = vector.shape_cast %44 : vector<1x2x256xf32> to vector<2x256xf32>
      %c1_40 = arith.constant 1 : index
      %c0_41 = arith.constant 0 : index
      %c78_42 = arith.constant 78 : index
      %46 = vector.load %arg8[%c1_40, %c0_41, %c78_42] : memref<2x2x512xf32, #tpu.memory_space<vmem>>, vector<1x2x256xf32>
      %47 = vector.shape_cast %46 : vector<1x2x256xf32> to vector<2x256xf32>
      %c1_43 = arith.constant 1 : index
      %48 = memref.load %arg2[%c1_43] : memref<98xf32, #tpu.memory_space<smem>>
      %49 = vector.broadcast %48 : f32 to vector<2x256xf32>
      %50 = arith.mulf %49, %45 : vector<2x256xf32>
      %c50 = arith.constant 50 : index
      %51 = memref.load %arg2[%c50] : memref<98xf32, #tpu.memory_space<smem>>
      %52 = vector.broadcast %51 : f32 to vector<2x256xf32>
      %53 = arith.mulf %52, %47 : vector<2x256xf32>
      %54 = arith.addf %50, %53 : vector<2x256xf32>
      %55 = vector.broadcast %43 : vector<1x256xf32> to vector<2x256xf32>
      %56 = arith.mulf %55, %54 : vector<2x256xf32>
      %57 = arith.addf %42, %56 : vector<2x256xf32>
      %c2 = arith.constant 2 : index
      %c0_44 = arith.constant 0 : index
      %58 = vector.load %arg3[%c2, %c0_44] : memref<49x256xf32, #tpu.memory_space<vmem>>, vector<1x256xf32>
      %c0_45 = arith.constant 0 : index
      %c0_46 = arith.constant 0 : index
      %c79 = arith.constant 79 : index
      %59 = vector.load %arg8[%c0_45, %c0_46, %c79] : memref<2x2x512xf32, #tpu.memory_space<vmem>>, vector<1x2x256xf32>
      %60 = vector.shape_cast %59 : vector<1x2x256xf32> to vector<2x256xf32>
      %c1_47 = arith.constant 1 : index
      %c0_48 = arith.constant 0 : index
      %c79_49 = arith.constant 79 : index
      %61 = vector.load %arg8[%c1_47, %c0_48, %c79_49] : memref<2x2x512xf32, #tpu.memory_space<vmem>>, vector<1x2x256xf32>
      %62 = vector.shape_cast %61 : vector<1x2x256xf32> to vector<2x256xf32>
      %c2_50 = arith.constant 2 : index
      %63 = memref.load %arg2[%c2_50] : memref<98xf32, #tpu.memory_space<smem>>
      %64 = vector.broadcast %63 : f32 to vector<2x256xf32>
      %65 = arith.mulf %64, %60 : vector<2x256xf32>
      %c51 = arith.constant 51 : index
      %66 = memref.load %arg2[%c51] : memref<98xf32, #tpu.memory_space<smem>>
      %67 = vector.broadcast %66 : f32 to vector<2x256xf32>
      %68 = arith.mulf %67, %62 : vector<2x256xf32>
      %69 = arith.addf %65, %68 : vector<2x256xf32>
      %70 = vector.broadcast %58 : vector<1x256xf32> to vector<2x256xf32>
      %71 = arith.mulf %70, %69 : vector<2x256xf32>
      %72 = arith.addf %57, %71 : vector<2x256xf32>
      %c3 = arith.constant 3 : index
      %c0_51 = arith.constant 0 : index
      %73 = vector.load %arg3[%c3, %c0_51] : memref<49x256xf32, #tpu.memory_space<vmem>>, vector<1x256xf32>
      %c0_52 = arith.constant 0 : index
      %c0_53 = arith.constant 0 : index
      %c80 = arith.constant 80 : index
      %74 = vector.load %arg8[%c0_52, %c0_53, %c80] : memref<2x2x512xf32, #tpu.memory_space<vmem>>, vector<1x2x256xf32>
      %75 = vector.shape_cast %74 : vector<1x2x256xf32> to vector<2x256xf32>
      %c1_54 = arith.constant 1 : index
      %c0_55 = arith.constant 0 : index
      %c80_56 = arith.constant 80 : index
      %76 = vector.load %arg8[%c1_54, %c0_55, %c80_56] : memref<2x2x512xf32, #tpu.memory_space<vmem>>, vector<1x2x256xf32>
      %77 = vector.shape_cast %76 : vector<1x2x256xf32> to vector<2x256xf32>
      %c3_57 = arith.constant 3 : index
      %78 = memref.load %arg2[%c3_57] : memref<98xf32, #tpu.memory_space<smem>>
      %79 = vector.broadcast %78 : f32 to vector<2x256xf32>
      %80 = arith.mulf %79, %75 : vector<2x256xf32>
      %c52 = arith.constant 52 : index
      %81 = memref.load %arg2[%c52] : memref<98xf32, #tpu.memory_space<smem>>
      %82 = vector.broadcast %81 : f32 to vector<2x256xf32>
      %83 = arith.mulf %82, %77 : vector<2x256xf32>
      %84 = arith.addf %80, %83 : vector<2x256xf32>
      %85 = vector.broadcast %73 : vector<1x256xf32> to vector<2x256xf32>
      %86 = arith.mulf %85, %84 : vector<2x256xf32>
      %87 = arith.addf %72, %86 : vector<2x256xf32>
      %c4 = arith.constant 4 : index
      %c0_58 = arith.constant 0 : index
      %88 = vector.load %arg3[%c4, %c0_58] : memref<49x256xf32, #tpu.memory_space<vmem>>, vector<1x256xf32>
      %c0_59 = arith.constant 0 : index
      %c0_60 = arith.constant 0 : index
      %c81 = arith.constant 81 : index
      %89 = vector.load %arg8[%c0_59, %c0_60, %c81] : memref<2x2x512xf32, #tpu.memory_space<vmem>>, vector<1x2x256xf32>
      %90 = vector.shape_cast %89 : vector<1x2x256xf32> to vector<2x256xf32>
      %c1_61 = arith.constant 1 : index
      %c0_62 = arith.constant 0 : index
      %c81_63 = arith.constant 81 : index
      %91 = vector.load %arg8[%c1_61, %c0_62, %c81_63] : memref<2x2x512xf32, #tpu.memory_space<vmem>>, vector<1x2x256xf32>
      %92 = vector.shape_cast %91 : vector<1x2x256xf32> to vector<2x256xf32>
      %c4_64 = arith.constant 4 : index
      %93 = memref.load %arg2[%c4_64] : memref<98xf32, #tpu.memory_space<smem>>
      %94 = vector.broadcast %93 : f32 to vector<2x256xf32>
      %95 = arith.mulf %94, %90 : vector<2x256xf32>
      %c53 = arith.constant 53 : index
      %96 = memref.load %arg2[%c53] : memref<98xf32, #tpu.memory_space<smem>>
      %97 = vector.broadcast %96 : f32 to vector<2x256xf32>
      %98 = arith.mulf %97, %92 : vector<2x256xf32>
      %99 = arith.addf %95, %98 : vector<2x256xf32>
      %100 = vector.broadcast %88 : vector<1x256xf32> to vector<2x256xf32>
      %101 = arith.mulf %100, %99 : vector<2x256xf32>
      %102 = arith.addf %87, %101 : vector<2x256xf32>
      %c5 = arith.constant 5 : index
      %c0_65 = arith.constant 0 : index
      %103 = vector.load %arg3[%c5, %c0_65] : memref<49x256xf32, #tpu.memory_space<vmem>>, vector<1x256xf32>
      %c0_66 = arith.constant 0 : index
      %c0_67 = arith.constant 0 : index
      %c82 = arith.constant 82 : index
      %104 = vector.load %arg8[%c0_66, %c0_67, %c82] : memref<2x2x512xf32, #tpu.memory_space<vmem>>, vector<1x2x256xf32>
      %105 = vector.shape_cast %104 : vector<1x2x256xf32> to vector<2x256xf32>
      %c1_68 = arith.constant 1 : index
      %c0_69 = arith.constant 0 : index
      %c82_70 = arith.constant 82 : index
      %106 = vector.load %arg8[%c1_68, %c0_69, %c82_70] : memref<2x2x512xf32, #tpu.memory_space<vmem>>, vector<1x2x256xf32>
      %107 = vector.shape_cast %106 : vector<1x2x256xf32> to vector<2x256xf32>
      %c5_71 = arith.constant 5 : index
      %108 = memref.load %arg2[%c5_71] : memref<98xf32, #tpu.memory_space<smem>>
      %109 = vector.broadcast %108 : f32 to vector<2x256xf32>
      %110 = arith.mulf %109, %105 : vector<2x256xf32>
      %c54 = arith.constant 54 : index
      %111 = memref.load %arg2[%c54] : memref<98xf32, #tpu.memory_space<smem>>
      %112 = vector.broadcast %111 : f32 to vector<2x256xf32>
      %113 = arith.mulf %112, %107 : vector<2x256xf32>
      %114 = arith.addf %110, %113 : vector<2x256xf32>
      %115 = vector.broadcast %103 : vector<1x256xf32> to vector<2x256xf32>
      %116 = arith.mulf %115, %114 : vector<2x256xf32>
      %117 = arith.addf %102, %116 : vector<2x256xf32>
      %c6 = arith.constant 6 : index
      %c0_72 = arith.constant 0 : index
      %118 = vector.load %arg3[%c6, %c0_72] : memref<49x256xf32, #tpu.memory_space<vmem>>, vector<1x256xf32>
      %c0_73 = arith.constant 0 : index
      %c0_74 = arith.constant 0 : index
      %c83 = arith.constant 83 : index
      %119 = vector.load %arg8[%c0_73, %c0_74, %c83] : memref<2x2x512xf32, #tpu.memory_space<vmem>>, vector<1x2x256xf32>
      %120 = vector.shape_cast %119 : vector<1x2x256xf32> to vector<2x256xf32>
      %c1_75 = arith.constant 1 : index
      %c0_76 = arith.constant 0 : index
      %c83_77 = arith.constant 83 : index
      %121 = vector.load %arg8[%c1_75, %c0_76, %c83_77] : memref<2x2x512xf32, #tpu.memory_space<vmem>>, vector<1x2x256xf32>
      %122 = vector.shape_cast %121 : vector<1x2x256xf32> to vector<2x256xf32>
      %c6_78 = arith.constant 6 : index
      %123 = memref.load %arg2[%c6_78] : memref<98xf32, #tpu.memory_space<smem>>
      %124 = vector.broadcast %123 : f32 to vector<2x256xf32>
      %125 = arith.mulf %124, %120 : vector<2x256xf32>
      %c55 = arith.constant 55 : index
      %126 = memref.load %arg2[%c55] : memref<98xf32, #tpu.memory_space<smem>>
      %127 = vector.broadcast %126 : f32 to vector<2x256xf32>
      %128 = arith.mulf %127, %122 : vector<2x256xf32>
      %129 = arith.addf %125, %128 : vector<2x256xf32>
      %130 = vector.broadcast %118 : vector<1x256xf32> to vector<2x256xf32>
      %131 = arith.mulf %130, %129 : vector<2x256xf32>
      %132 = arith.addf %117, %131 : vector<2x256xf32>
      %c7 = arith.constant 7 : index
      %c0_79 = arith.constant 0 : index
      %133 = vector.load %arg3[%c7, %c0_79] : memref<49x256xf32, #tpu.memory_space<vmem>>, vector<1x256xf32>
      %c0_80 = arith.constant 0 : index
      %c0_81 = arith.constant 0 : index
      %c93 = arith.constant 93 : index
      %134 = vector.load %arg8[%c0_80, %c0_81, %c93] : memref<2x2x512xf32, #tpu.memory_space<vmem>>, vector<1x2x256xf32>
      %135 = vector.shape_cast %134 : vector<1x2x256xf32> to vector<2x256xf32>
      %c1_82 = arith.constant 1 : index
      %c0_83 = arith.constant 0 : index
      %c93_84 = arith.constant 93 : index
      %136 = vector.load %arg8[%c1_82, %c0_83, %c93_84] : memref<2x2x512xf32, #tpu.memory_space<vmem>>, vector<1x2x256xf32>
      %137 = vector.shape_cast %136 : vector<1x2x256xf32> to vector<2x256xf32>
      %c7_85 = arith.constant 7 : index
      %138 = memref.load %arg2[%c7_85] : memref<98xf32, #tpu.memory_space<smem>>
      %139 = vector.broadcast %138 : f32 to vector<2x256xf32>
      %140 = arith.mulf %139, %135 : vector<2x256xf32>
      %c56 = arith.constant 56 : index
      %141 = memref.load %arg2[%c56] : memref<98xf32, #tpu.memory_space<smem>>
      %142 = vector.broadcast %141 : f32 to vector<2x256xf32>
      %143 = arith.mulf %142, %137 : vector<2x256xf32>
      %144 = arith.addf %140, %143 : vector<2x256xf32>
      %145 = vector.broadcast %133 : vector<1x256xf32> to vector<2x256xf32>
      %146 = arith.mulf %145, %144 : vector<2x256xf32>
      %147 = arith.addf %132, %146 : vector<2x256xf32>
      %c8 = arith.constant 8 : index
      %c0_86 = arith.constant 0 : index
      %148 = vector.load %arg3[%c8, %c0_86] : memref<49x256xf32, #tpu.memory_space<vmem>>, vector<1x256xf32>
      %c0_87 = arith.constant 0 : index
      %c0_88 = arith.constant 0 : index
      %c94 = arith.constant 94 : index
      %149 = vector.load %arg8[%c0_87, %c0_88, %c94] : memref<2x2x512xf32, #tpu.memory_space<vmem>>, vector<1x2x256xf32>
      %150 = vector.shape_cast %149 : vector<1x2x256xf32> to vector<2x256xf32>
      %c1_89 = arith.constant 1 : index
      %c0_90 = arith.constant 0 : index
      %c94_91 = arith.constant 94 : index
      %151 = vector.load %arg8[%c1_89, %c0_90, %c94_91] : memref<2x2x512xf32, #tpu.memory_space<vmem>>, vector<1x2x256xf32>
      %152 = vector.shape_cast %151 : vector<1x2x256xf32> to vector<2x256xf32>
      %c8_92 = arith.constant 8 : index
      %153 = memref.load %arg2[%c8_92] : memref<98xf32, #tpu.memory_space<smem>>
      %154 = vector.broadcast %153 : f32 to vector<2x256xf32>
      %155 = arith.mulf %154, %150 : vector<2x256xf32>
      %c57 = arith.constant 57 : index
      %156 = memref.load %arg2[%c57] : memref<98xf32, #tpu.memory_space<smem>>
      %157 = vector.broadcast %156 : f32 to vector<2x256xf32>
      %158 = arith.mulf %157, %152 : vector<2x256xf32>
      %159 = arith.addf %155, %158 : vector<2x256xf32>
      %160 = vector.broadcast %148 : vector<1x256xf32> to vector<2x256xf32>
      %161 = arith.mulf %160, %159 : vector<2x256xf32>
      %162 = arith.addf %147, %161 : vector<2x256xf32>
      %c9 = arith.constant 9 : index
      %c0_93 = arith.constant 0 : index
      %163 = vector.load %arg3[%c9, %c0_93] : memref<49x256xf32, #tpu.memory_space<vmem>>, vector<1x256xf32>
      %c0_94 = arith.constant 0 : index
      %c0_95 = arith.constant 0 : index
      %c95 = arith.constant 95 : index
      %164 = vector.load %arg8[%c0_94, %c0_95, %c95] : memref<2x2x512xf32, #tpu.memory_space<vmem>>, vector<1x2x256xf32>
      %165 = vector.shape_cast %164 : vector<1x2x256xf32> to vector<2x256xf32>
      %c1_96 = arith.constant 1 : index
      %c0_97 = arith.constant 0 : index
      %c95_98 = arith.constant 95 : index
      %166 = vector.load %arg8[%c1_96, %c0_97, %c95_98] : memref<2x2x512xf32, #tpu.memory_space<vmem>>, vector<1x2x256xf32>
      %167 = vector.shape_cast %166 : vector<1x2x256xf32> to vector<2x256xf32>
      %c9_99 = arith.constant 9 : index
      %168 = memref.load %arg2[%c9_99] : memref<98xf32, #tpu.memory_space<smem>>
      %169 = vector.broadcast %168 : f32 to vector<2x256xf32>
      %170 = arith.mulf %169, %165 : vector<2x256xf32>
      %c58 = arith.constant 58 : index
      %171 = memref.load %arg2[%c58] : memref<98xf32, #tpu.memory_space<smem>>
      %172 = vector.broadcast %171 : f32 to vector<2x256xf32>
      %173 = arith.mulf %172, %167 : vector<2x256xf32>
      %174 = arith.addf %170, %173 : vector<2x256xf32>
      %175 = vector.broadcast %163 : vector<1x256xf32> to vector<2x256xf32>
      %176 = arith.mulf %175, %174 : vector<2x256xf32>
      %177 = arith.addf %162, %176 : vector<2x256xf32>
      %c10 = arith.constant 10 : index
      %c0_100 = arith.constant 0 : index
      %178 = vector.load %arg3[%c10, %c0_100] : memref<49x256xf32, #tpu.memory_space<vmem>>, vector<1x256xf32>
      %c0_101 = arith.constant 0 : index
      %c0_102 = arith.constant 0 : index
      %c96 = arith.constant 96 : index
      %179 = vector.load %arg8[%c0_101, %c0_102, %c96] : memref<2x2x512xf32, #tpu.memory_space<vmem>>, vector<1x2x256xf32>
      %180 = vector.shape_cast %179 : vector<1x2x256xf32> to vector<2x256xf32>
      %c1_103 = arith.constant 1 : index
      %c0_104 = arith.constant 0 : index
      %c96_105 = arith.constant 96 : index
      %181 = vector.load %arg8[%c1_103, %c0_104, %c96_105] : memref<2x2x512xf32, #tpu.memory_space<vmem>>, vector<1x2x256xf32>
      %182 = vector.shape_cast %181 : vector<1x2x256xf32> to vector<2x256xf32>
      %c10_106 = arith.constant 10 : index
      %183 = memref.load %arg2[%c10_106] : memref<98xf32, #tpu.memory_space<smem>>
      %184 = vector.broadcast %183 : f32 to vector<2x256xf32>
      %185 = arith.mulf %184, %180 : vector<2x256xf32>
      %c59 = arith.constant 59 : index
      %186 = memref.load %arg2[%c59] : memref<98xf32, #tpu.memory_space<smem>>
      %187 = vector.broadcast %186 : f32 to vector<2x256xf32>
      %188 = arith.mulf %187, %182 : vector<2x256xf32>
      %189 = arith.addf %185, %188 : vector<2x256xf32>
      %190 = vector.broadcast %178 : vector<1x256xf32> to vector<2x256xf32>
      %191 = arith.mulf %190, %189 : vector<2x256xf32>
      %192 = arith.addf %177, %191 : vector<2x256xf32>
      %c11 = arith.constant 11 : index
      %c0_107 = arith.constant 0 : index
      %193 = vector.load %arg3[%c11, %c0_107] : memref<49x256xf32, #tpu.memory_space<vmem>>, vector<1x256xf32>
      %c0_108 = arith.constant 0 : index
      %c0_109 = arith.constant 0 : index
      %c97 = arith.constant 97 : index
      %194 = vector.load %arg8[%c0_108, %c0_109, %c97] : memref<2x2x512xf32, #tpu.memory_space<vmem>>, vector<1x2x256xf32>
      %195 = vector.shape_cast %194 : vector<1x2x256xf32> to vector<2x256xf32>
      %c1_110 = arith.constant 1 : index
      %c0_111 = arith.constant 0 : index
      %c97_112 = arith.constant 97 : index
      %196 = vector.load %arg8[%c1_110, %c0_111, %c97_112] : memref<2x2x512xf32, #tpu.memory_space<vmem>>, vector<1x2x256xf32>
      %197 = vector.shape_cast %196 : vector<1x2x256xf32> to vector<2x256xf32>
      %c11_113 = arith.constant 11 : index
      %198 = memref.load %arg2[%c11_113] : memref<98xf32, #tpu.memory_space<smem>>
      %199 = vector.broadcast %198 : f32 to vector<2x256xf32>
      %200 = arith.mulf %199, %195 : vector<2x256xf32>
      %c60 = arith.constant 60 : index
      %201 = memref.load %arg2[%c60] : memref<98xf32, #tpu.memory_space<smem>>
      %202 = vector.broadcast %201 : f32 to vector<2x256xf32>
      %203 = arith.mulf %202, %197 : vector<2x256xf32>
      %204 = arith.addf %200, %203 : vector<2x256xf32>
      %205 = vector.broadcast %193 : vector<1x256xf32> to vector<2x256xf32>
      %206 = arith.mulf %205, %204 : vector<2x256xf32>
      %207 = arith.addf %192, %206 : vector<2x256xf32>
      %c12 = arith.constant 12 : index
      %c0_114 = arith.constant 0 : index
      %208 = vector.load %arg3[%c12, %c0_114] : memref<49x256xf32, #tpu.memory_space<vmem>>, vector<1x256xf32>
      %c0_115 = arith.constant 0 : index
      %c0_116 = arith.constant 0 : index
      %c98 = arith.constant 98 : index
      %209 = vector.load %arg8[%c0_115, %c0_116, %c98] : memref<2x2x512xf32, #tpu.memory_space<vmem>>, vector<1x2x256xf32>
      %210 = vector.shape_cast %209 : vector<1x2x256xf32> to vector<2x256xf32>
      %c1_117 = arith.constant 1 : index
      %c0_118 = arith.constant 0 : index
      %c98_119 = arith.constant 98 : index
      %211 = vector.load %arg8[%c1_117, %c0_118, %c98_119] : memref<2x2x512xf32, #tpu.memory_space<vmem>>, vector<1x2x256xf32>
      %212 = vector.shape_cast %211 : vector<1x2x256xf32> to vector<2x256xf32>
      %c12_120 = arith.constant 12 : index
      %213 = memref.load %arg2[%c12_120] : memref<98xf32, #tpu.memory_space<smem>>
      %214 = vector.broadcast %213 : f32 to vector<2x256xf32>
      %215 = arith.mulf %214, %210 : vector<2x256xf32>
      %c61 = arith.constant 61 : index
      %216 = memref.load %arg2[%c61] : memref<98xf32, #tpu.memory_space<smem>>
      %217 = vector.broadcast %216 : f32 to vector<2x256xf32>
      %218 = arith.mulf %217, %212 : vector<2x256xf32>
      %219 = arith.addf %215, %218 : vector<2x256xf32>
      %220 = vector.broadcast %208 : vector<1x256xf32> to vector<2x256xf32>
      %221 = arith.mulf %220, %219 : vector<2x256xf32>
      %222 = arith.addf %207, %221 : vector<2x256xf32>
      %c13 = arith.constant 13 : index
      %c0_121 = arith.constant 0 : index
      %223 = vector.load %arg3[%c13, %c0_121] : memref<49x256xf32, #tpu.memory_space<vmem>>, vector<1x256xf32>
      %c0_122 = arith.constant 0 : index
      %c0_123 = arith.constant 0 : index
      %c99 = arith.constant 99 : index
      %224 = vector.load %arg8[%c0_122, %c0_123, %c99] : memref<2x2x512xf32, #tpu.memory_space<vmem>>, vector<1x2x256xf32>
      %225 = vector.shape_cast %224 : vector<1x2x256xf32> to vector<2x256xf32>
      %c1_124 = arith.constant 1 : index
      %c0_125 = arith.constant 0 : index
      %c99_126 = arith.constant 99 : index
      %226 = vector.load %arg8[%c1_124, %c0_125, %c99_126] : memref<2x2x512xf32, #tpu.memory_space<vmem>>, vector<1x2x256xf32>
      %227 = vector.shape_cast %226 : vector<1x2x256xf32> to vector<2x256xf32>
      %c13_127 = arith.constant 13 : index
      %228 = memref.load %arg2[%c13_127] : memref<98xf32, #tpu.memory_space<smem>>
      %229 = vector.broadcast %228 : f32 to vector<2x256xf32>
      %230 = arith.mulf %229, %225 : vector<2x256xf32>
      %c62 = arith.constant 62 : index
      %231 = memref.load %arg2[%c62] : memref<98xf32, #tpu.memory_space<smem>>
      %232 = vector.broadcast %231 : f32 to vector<2x256xf32>
      %233 = arith.mulf %232, %227 : vector<2x256xf32>
      %234 = arith.addf %230, %233 : vector<2x256xf32>
      %235 = vector.broadcast %223 : vector<1x256xf32> to vector<2x256xf32>
      %236 = arith.mulf %235, %234 : vector<2x256xf32>
      %237 = arith.addf %222, %236 : vector<2x256xf32>
      %c14 = arith.constant 14 : index
      %c0_128 = arith.constant 0 : index
      %238 = vector.load %arg3[%c14, %c0_128] : memref<49x256xf32, #tpu.memory_space<vmem>>, vector<1x256xf32>
      %c0_129 = arith.constant 0 : index
      %c0_130 = arith.constant 0 : index
      %c109 = arith.constant 109 : index
      %239 = vector.load %arg8[%c0_129, %c0_130, %c109] : memref<2x2x512xf32, #tpu.memory_space<vmem>>, vector<1x2x256xf32>
      %240 = vector.shape_cast %239 : vector<1x2x256xf32> to vector<2x256xf32>
      %c1_131 = arith.constant 1 : index
      %c0_132 = arith.constant 0 : index
      %c109_133 = arith.constant 109 : index
      %241 = vector.load %arg8[%c1_131, %c0_132, %c109_133] : memref<2x2x512xf32, #tpu.memory_space<vmem>>, vector<1x2x256xf32>
      %242 = vector.shape_cast %241 : vector<1x2x256xf32> to vector<2x256xf32>
      %c14_134 = arith.constant 14 : index
      %243 = memref.load %arg2[%c14_134] : memref<98xf32, #tpu.memory_space<smem>>
      %244 = vector.broadcast %243 : f32 to vector<2x256xf32>
      %245 = arith.mulf %244, %240 : vector<2x256xf32>
      %c63 = arith.constant 63 : index
      %246 = memref.load %arg2[%c63] : memref<98xf32, #tpu.memory_space<smem>>
      %247 = vector.broadcast %246 : f32 to vector<2x256xf32>
      %248 = arith.mulf %247, %242 : vector<2x256xf32>
      %249 = arith.addf %245, %248 : vector<2x256xf32>
      %250 = vector.broadcast %238 : vector<1x256xf32> to vector<2x256xf32>
      %251 = arith.mulf %250, %249 : vector<2x256xf32>
      %252 = arith.addf %237, %251 : vector<2x256xf32>
      %c15 = arith.constant 15 : index
      %c0_135 = arith.constant 0 : index
      %253 = vector.load %arg3[%c15, %c0_135] : memref<49x256xf32, #tpu.memory_space<vmem>>, vector<1x256xf32>
      %c0_136 = arith.constant 0 : index
      %c0_137 = arith.constant 0 : index
      %c110 = arith.constant 110 : index
      %254 = vector.load %arg8[%c0_136, %c0_137, %c110] : memref<2x2x512xf32, #tpu.memory_space<vmem>>, vector<1x2x256xf32>
      %255 = vector.shape_cast %254 : vector<1x2x256xf32> to vector<2x256xf32>
      %c1_138 = arith.constant 1 : index
      %c0_139 = arith.constant 0 : index
      %c110_140 = arith.constant 110 : index
      %256 = vector.load %arg8[%c1_138, %c0_139, %c110_140] : memref<2x2x512xf32, #tpu.memory_space<vmem>>, vector<1x2x256xf32>
      %257 = vector.shape_cast %256 : vector<1x2x256xf32> to vector<2x256xf32>
      %c15_141 = arith.constant 15 : index
      %258 = memref.load %arg2[%c15_141] : memref<98xf32, #tpu.memory_space<smem>>
      %259 = vector.broadcast %258 : f32 to vector<2x256xf32>
      %260 = arith.mulf %259, %255 : vector<2x256xf32>
      %c64 = arith.constant 64 : index
      %261 = memref.load %arg2[%c64] : memref<98xf32, #tpu.memory_space<smem>>
      %262 = vector.broadcast %261 : f32 to vector<2x256xf32>
      %263 = arith.mulf %262, %257 : vector<2x256xf32>
      %264 = arith.addf %260, %263 : vector<2x256xf32>
      %265 = vector.broadcast %253 : vector<1x256xf32> to vector<2x256xf32>
      %266 = arith.mulf %265, %264 : vector<2x256xf32>
      %267 = arith.addf %252, %266 : vector<2x256xf32>
      %c16 = arith.constant 16 : index
      %c0_142 = arith.constant 0 : index
      %268 = vector.load %arg3[%c16, %c0_142] : memref<49x256xf32, #tpu.memory_space<vmem>>, vector<1x256xf32>
      %c0_143 = arith.constant 0 : index
      %c0_144 = arith.constant 0 : index
      %c111 = arith.constant 111 : index
      %269 = vector.load %arg8[%c0_143, %c0_144, %c111] : memref<2x2x512xf32, #tpu.memory_space<vmem>>, vector<1x2x256xf32>
      %270 = vector.shape_cast %269 : vector<1x2x256xf32> to vector<2x256xf32>
      %c1_145 = arith.constant 1 : index
      %c0_146 = arith.constant 0 : index
      %c111_147 = arith.constant 111 : index
      %271 = vector.load %arg8[%c1_145, %c0_146, %c111_147] : memref<2x2x512xf32, #tpu.memory_space<vmem>>, vector<1x2x256xf32>
      %272 = vector.shape_cast %271 : vector<1x2x256xf32> to vector<2x256xf32>
      %c16_148 = arith.constant 16 : index
      %273 = memref.load %arg2[%c16_148] : memref<98xf32, #tpu.memory_space<smem>>
      %274 = vector.broadcast %273 : f32 to vector<2x256xf32>
      %275 = arith.mulf %274, %270 : vector<2x256xf32>
      %c65 = arith.constant 65 : index
      %276 = memref.load %arg2[%c65] : memref<98xf32, #tpu.memory_space<smem>>
      %277 = vector.broadcast %276 : f32 to vector<2x256xf32>
      %278 = arith.mulf %277, %272 : vector<2x256xf32>
      %279 = arith.addf %275, %278 : vector<2x256xf32>
      %280 = vector.broadcast %268 : vector<1x256xf32> to vector<2x256xf32>
      %281 = arith.mulf %280, %279 : vector<2x256xf32>
      %282 = arith.addf %267, %281 : vector<2x256xf32>
      %c17 = arith.constant 17 : index
      %c0_149 = arith.constant 0 : index
      %283 = vector.load %arg3[%c17, %c0_149] : memref<49x256xf32, #tpu.memory_space<vmem>>, vector<1x256xf32>
      %c0_150 = arith.constant 0 : index
      %c0_151 = arith.constant 0 : index
      %c112 = arith.constant 112 : index
      %284 = vector.load %arg8[%c0_150, %c0_151, %c112] : memref<2x2x512xf32, #tpu.memory_space<vmem>>, vector<1x2x256xf32>
      %285 = vector.shape_cast %284 : vector<1x2x256xf32> to vector<2x256xf32>
      %c1_152 = arith.constant 1 : index
      %c0_153 = arith.constant 0 : index
      %c112_154 = arith.constant 112 : index
      %286 = vector.load %arg8[%c1_152, %c0_153, %c112_154] : memref<2x2x512xf32, #tpu.memory_space<vmem>>, vector<1x2x256xf32>
      %287 = vector.shape_cast %286 : vector<1x2x256xf32> to vector<2x256xf32>
      %c17_155 = arith.constant 17 : index
      %288 = memref.load %arg2[%c17_155] : memref<98xf32, #tpu.memory_space<smem>>
      %289 = vector.broadcast %288 : f32 to vector<2x256xf32>
      %290 = arith.mulf %289, %285 : vector<2x256xf32>
      %c66 = arith.constant 66 : index
      %291 = memref.load %arg2[%c66] : memref<98xf32, #tpu.memory_space<smem>>
      %292 = vector.broadcast %291 : f32 to vector<2x256xf32>
      %293 = arith.mulf %292, %287 : vector<2x256xf32>
      %294 = arith.addf %290, %293 : vector<2x256xf32>
      %295 = vector.broadcast %283 : vector<1x256xf32> to vector<2x256xf32>
      %296 = arith.mulf %295, %294 : vector<2x256xf32>
      %297 = arith.addf %282, %296 : vector<2x256xf32>
      %c18 = arith.constant 18 : index
      %c0_156 = arith.constant 0 : index
      %298 = vector.load %arg3[%c18, %c0_156] : memref<49x256xf32, #tpu.memory_space<vmem>>, vector<1x256xf32>
      %c0_157 = arith.constant 0 : index
      %c0_158 = arith.constant 0 : index
      %c113 = arith.constant 113 : index
      %299 = vector.load %arg8[%c0_157, %c0_158, %c113] : memref<2x2x512xf32, #tpu.memory_space<vmem>>, vector<1x2x256xf32>
      %300 = vector.shape_cast %299 : vector<1x2x256xf32> to vector<2x256xf32>
      %c1_159 = arith.constant 1 : index
      %c0_160 = arith.constant 0 : index
      %c113_161 = arith.constant 113 : index
      %301 = vector.load %arg8[%c1_159, %c0_160, %c113_161] : memref<2x2x512xf32, #tpu.memory_space<vmem>>, vector<1x2x256xf32>
      %302 = vector.shape_cast %301 : vector<1x2x256xf32> to vector<2x256xf32>
      %c18_162 = arith.constant 18 : index
      %303 = memref.load %arg2[%c18_162] : memref<98xf32, #tpu.memory_space<smem>>
      %304 = vector.broadcast %303 : f32 to vector<2x256xf32>
      %305 = arith.mulf %304, %300 : vector<2x256xf32>
      %c67 = arith.constant 67 : index
      %306 = memref.load %arg2[%c67] : memref<98xf32, #tpu.memory_space<smem>>
      %307 = vector.broadcast %306 : f32 to vector<2x256xf32>
      %308 = arith.mulf %307, %302 : vector<2x256xf32>
      %309 = arith.addf %305, %308 : vector<2x256xf32>
      %310 = vector.broadcast %298 : vector<1x256xf32> to vector<2x256xf32>
      %311 = arith.mulf %310, %309 : vector<2x256xf32>
      %312 = arith.addf %297, %311 : vector<2x256xf32>
      %c19 = arith.constant 19 : index
      %c0_163 = arith.constant 0 : index
      %313 = vector.load %arg3[%c19, %c0_163] : memref<49x256xf32, #tpu.memory_space<vmem>>, vector<1x256xf32>
      %c0_164 = arith.constant 0 : index
      %c0_165 = arith.constant 0 : index
      %c114 = arith.constant 114 : index
      %314 = vector.load %arg8[%c0_164, %c0_165, %c114] : memref<2x2x512xf32, #tpu.memory_space<vmem>>, vector<1x2x256xf32>
      %315 = vector.shape_cast %314 : vector<1x2x256xf32> to vector<2x256xf32>
      %c1_166 = arith.constant 1 : index
      %c0_167 = arith.constant 0 : index
      %c114_168 = arith.constant 114 : index
      %316 = vector.load %arg8[%c1_166, %c0_167, %c114_168] : memref<2x2x512xf32, #tpu.memory_space<vmem>>, vector<1x2x256xf32>
      %317 = vector.shape_cast %316 : vector<1x2x256xf32> to vector<2x256xf32>
      %c19_169 = arith.constant 19 : index
      %318 = memref.load %arg2[%c19_169] : memref<98xf32, #tpu.memory_space<smem>>
      %319 = vector.broadcast %318 : f32 to vector<2x256xf32>
      %320 = arith.mulf %319, %315 : vector<2x256xf32>
      %c68 = arith.constant 68 : index
      %321 = memref.load %arg2[%c68] : memref<98xf32, #tpu.memory_space<smem>>
      %322 = vector.broadcast %321 : f32 to vector<2x256xf32>
      %323 = arith.mulf %322, %317 : vector<2x256xf32>
      %324 = arith.addf %320, %323 : vector<2x256xf32>
      %325 = vector.broadcast %313 : vector<1x256xf32> to vector<2x256xf32>
      %326 = arith.mulf %325, %324 : vector<2x256xf32>
      %327 = arith.addf %312, %326 : vector<2x256xf32>
      %c20 = arith.constant 20 : index
      %c0_170 = arith.constant 0 : index
      %328 = vector.load %arg3[%c20, %c0_170] : memref<49x256xf32, #tpu.memory_space<vmem>>, vector<1x256xf32>
      %c0_171 = arith.constant 0 : index
      %c0_172 = arith.constant 0 : index
      %c115 = arith.constant 115 : index
      %329 = vector.load %arg8[%c0_171, %c0_172, %c115] : memref<2x2x512xf32, #tpu.memory_space<vmem>>, vector<1x2x256xf32>
      %330 = vector.shape_cast %329 : vector<1x2x256xf32> to vector<2x256xf32>
      %c1_173 = arith.constant 1 : index
      %c0_174 = arith.constant 0 : index
      %c115_175 = arith.constant 115 : index
      %331 = vector.load %arg8[%c1_173, %c0_174, %c115_175] : memref<2x2x512xf32, #tpu.memory_space<vmem>>, vector<1x2x256xf32>
      %332 = vector.shape_cast %331 : vector<1x2x256xf32> to vector<2x256xf32>
      %c20_176 = arith.constant 20 : index
      %333 = memref.load %arg2[%c20_176] : memref<98xf32, #tpu.memory_space<smem>>
      %334 = vector.broadcast %333 : f32 to vector<2x256xf32>
      %335 = arith.mulf %334, %330 : vector<2x256xf32>
      %c69 = arith.constant 69 : index
      %336 = memref.load %arg2[%c69] : memref<98xf32, #tpu.memory_space<smem>>
      %337 = vector.broadcast %336 : f32 to vector<2x256xf32>
      %338 = arith.mulf %337, %332 : vector<2x256xf32>
      %339 = arith.addf %335, %338 : vector<2x256xf32>
      %340 = vector.broadcast %328 : vector<1x256xf32> to vector<2x256xf32>
      %341 = arith.mulf %340, %339 : vector<2x256xf32>
      %342 = arith.addf %327, %341 : vector<2x256xf32>
      %c21 = arith.constant 21 : index
      %c0_177 = arith.constant 0 : index
      %343 = vector.load %arg3[%c21, %c0_177] : memref<49x256xf32, #tpu.memory_space<vmem>>, vector<1x256xf32>
      %c0_178 = arith.constant 0 : index
      %c0_179 = arith.constant 0 : index
      %c125 = arith.constant 125 : index
      %344 = vector.load %arg8[%c0_178, %c0_179, %c125] : memref<2x2x512xf32, #tpu.memory_space<vmem>>, vector<1x2x256xf32>
      %345 = vector.shape_cast %344 : vector<1x2x256xf32> to vector<2x256xf32>
      %c1_180 = arith.constant 1 : index
      %c0_181 = arith.constant 0 : index
      %c125_182 = arith.constant 125 : index
      %346 = vector.load %arg8[%c1_180, %c0_181, %c125_182] : memref<2x2x512xf32, #tpu.memory_space<vmem>>, vector<1x2x256xf32>
      %347 = vector.shape_cast %346 : vector<1x2x256xf32> to vector<2x256xf32>
      %c21_183 = arith.constant 21 : index
      %348 = memref.load %arg2[%c21_183] : memref<98xf32, #tpu.memory_space<smem>>
      %349 = vector.broadcast %348 : f32 to vector<2x256xf32>
      %350 = arith.mulf %349, %345 : vector<2x256xf32>
      %c70 = arith.constant 70 : index
      %351 = memref.load %arg2[%c70] : memref<98xf32, #tpu.memory_space<smem>>
      %352 = vector.broadcast %351 : f32 to vector<2x256xf32>
      %353 = arith.mulf %352, %347 : vector<2x256xf32>
      %354 = arith.addf %350, %353 : vector<2x256xf32>
      %355 = vector.broadcast %343 : vector<1x256xf32> to vector<2x256xf32>
      %356 = arith.mulf %355, %354 : vector<2x256xf32>
      %357 = arith.addf %342, %356 : vector<2x256xf32>
      %c22 = arith.constant 22 : index
      %c0_184 = arith.constant 0 : index
      %358 = vector.load %arg3[%c22, %c0_184] : memref<49x256xf32, #tpu.memory_space<vmem>>, vector<1x256xf32>
      %c0_185 = arith.constant 0 : index
      %c0_186 = arith.constant 0 : index
      %c126 = arith.constant 126 : index
      %359 = vector.load %arg8[%c0_185, %c0_186, %c126] : memref<2x2x512xf32, #tpu.memory_space<vmem>>, vector<1x2x256xf32>
      %360 = vector.shape_cast %359 : vector<1x2x256xf32> to vector<2x256xf32>
      %c1_187 = arith.constant 1 : index
      %c0_188 = arith.constant 0 : index
      %c126_189 = arith.constant 126 : index
      %361 = vector.load %arg8[%c1_187, %c0_188, %c126_189] : memref<2x2x512xf32, #tpu.memory_space<vmem>>, vector<1x2x256xf32>
      %362 = vector.shape_cast %361 : vector<1x2x256xf32> to vector<2x256xf32>
      %c22_190 = arith.constant 22 : index
      %363 = memref.load %arg2[%c22_190] : memref<98xf32, #tpu.memory_space<smem>>
      %364 = vector.broadcast %363 : f32 to vector<2x256xf32>
      %365 = arith.mulf %364, %360 : vector<2x256xf32>
      %c71 = arith.constant 71 : index
      %366 = memref.load %arg2[%c71] : memref<98xf32, #tpu.memory_space<smem>>
      %367 = vector.broadcast %366 : f32 to vector<2x256xf32>
      %368 = arith.mulf %367, %362 : vector<2x256xf32>
      %369 = arith.addf %365, %368 : vector<2x256xf32>
      %370 = vector.broadcast %358 : vector<1x256xf32> to vector<2x256xf32>
      %371 = arith.mulf %370, %369 : vector<2x256xf32>
      %372 = arith.addf %357, %371 : vector<2x256xf32>
      %c23 = arith.constant 23 : index
      %c0_191 = arith.constant 0 : index
      %373 = vector.load %arg3[%c23, %c0_191] : memref<49x256xf32, #tpu.memory_space<vmem>>, vector<1x256xf32>
      %c0_192 = arith.constant 0 : index
      %c0_193 = arith.constant 0 : index
      %c127 = arith.constant 127 : index
      %374 = vector.load %arg8[%c0_192, %c0_193, %c127] : memref<2x2x512xf32, #tpu.memory_space<vmem>>, vector<1x2x256xf32>
      %375 = vector.shape_cast %374 : vector<1x2x256xf32> to vector<2x256xf32>
      %c1_194 = arith.constant 1 : index
      %c0_195 = arith.constant 0 : index
      %c127_196 = arith.constant 127 : index
      %376 = vector.load %arg8[%c1_194, %c0_195, %c127_196] : memref<2x2x512xf32, #tpu.memory_space<vmem>>, vector<1x2x256xf32>
      %377 = vector.shape_cast %376 : vector<1x2x256xf32> to vector<2x256xf32>
      %c23_197 = arith.constant 23 : index
      %378 = memref.load %arg2[%c23_197] : memref<98xf32, #tpu.memory_space<smem>>
      %379 = vector.broadcast %378 : f32 to vector<2x256xf32>
      %380 = arith.mulf %379, %375 : vector<2x256xf32>
      %c72 = arith.constant 72 : index
      %381 = memref.load %arg2[%c72] : memref<98xf32, #tpu.memory_space<smem>>
      %382 = vector.broadcast %381 : f32 to vector<2x256xf32>
      %383 = arith.mulf %382, %377 : vector<2x256xf32>
      %384 = arith.addf %380, %383 : vector<2x256xf32>
      %385 = vector.broadcast %373 : vector<1x256xf32> to vector<2x256xf32>
      %386 = arith.mulf %385, %384 : vector<2x256xf32>
      %387 = arith.addf %372, %386 : vector<2x256xf32>
      %c24 = arith.constant 24 : index
      %c0_198 = arith.constant 0 : index
      %388 = vector.load %arg3[%c24, %c0_198] : memref<49x256xf32, #tpu.memory_space<vmem>>, vector<1x256xf32>
      %c0_199 = arith.constant 0 : index
      %c0_200 = arith.constant 0 : index
      %c128_201 = arith.constant 128 : index
      %389 = vector.load %arg8[%c0_199, %c0_200, %c128_201] : memref<2x2x512xf32, #tpu.memory_space<vmem>>, vector<1x2x256xf32>
      %390 = vector.shape_cast %389 : vector<1x2x256xf32> to vector<2x256xf32>
      %c1_202 = arith.constant 1 : index
      %c0_203 = arith.constant 0 : index
      %c128_204 = arith.constant 128 : index
      %391 = vector.load %arg8[%c1_202, %c0_203, %c128_204] : memref<2x2x512xf32, #tpu.memory_space<vmem>>, vector<1x2x256xf32>
      %392 = vector.shape_cast %391 : vector<1x2x256xf32> to vector<2x256xf32>
      %c24_205 = arith.constant 24 : index
      %393 = memref.load %arg2[%c24_205] : memref<98xf32, #tpu.memory_space<smem>>
      %394 = vector.broadcast %393 : f32 to vector<2x256xf32>
      %395 = arith.mulf %394, %390 : vector<2x256xf32>
      %c73 = arith.constant 73 : index
      %396 = memref.load %arg2[%c73] : memref<98xf32, #tpu.memory_space<smem>>
      %397 = vector.broadcast %396 : f32 to vector<2x256xf32>
      %398 = arith.mulf %397, %392 : vector<2x256xf32>
      %399 = arith.addf %395, %398 : vector<2x256xf32>
      %400 = vector.broadcast %388 : vector<1x256xf32> to vector<2x256xf32>
      %401 = arith.mulf %400, %399 : vector<2x256xf32>
      %402 = arith.addf %387, %401 : vector<2x256xf32>
      %c25 = arith.constant 25 : index
      %c0_206 = arith.constant 0 : index
      %403 = vector.load %arg3[%c25, %c0_206] : memref<49x256xf32, #tpu.memory_space<vmem>>, vector<1x256xf32>
      %c0_207 = arith.constant 0 : index
      %c0_208 = arith.constant 0 : index
      %c129 = arith.constant 129 : index
      %404 = vector.load %arg8[%c0_207, %c0_208, %c129] : memref<2x2x512xf32, #tpu.memory_space<vmem>>, vector<1x2x256xf32>
      %405 = vector.shape_cast %404 : vector<1x2x256xf32> to vector<2x256xf32>
      %c1_209 = arith.constant 1 : index
      %c0_210 = arith.constant 0 : index
      %c129_211 = arith.constant 129 : index
      %406 = vector.load %arg8[%c1_209, %c0_210, %c129_211] : memref<2x2x512xf32, #tpu.memory_space<vmem>>, vector<1x2x256xf32>
      %407 = vector.shape_cast %406 : vector<1x2x256xf32> to vector<2x256xf32>
      %c25_212 = arith.constant 25 : index
      %408 = memref.load %arg2[%c25_212] : memref<98xf32, #tpu.memory_space<smem>>
      %409 = vector.broadcast %408 : f32 to vector<2x256xf32>
      %410 = arith.mulf %409, %405 : vector<2x256xf32>
      %c74 = arith.constant 74 : index
      %411 = memref.load %arg2[%c74] : memref<98xf32, #tpu.memory_space<smem>>
      %412 = vector.broadcast %411 : f32 to vector<2x256xf32>
      %413 = arith.mulf %412, %407 : vector<2x256xf32>
      %414 = arith.addf %410, %413 : vector<2x256xf32>
      %415 = vector.broadcast %403 : vector<1x256xf32> to vector<2x256xf32>
      %416 = arith.mulf %415, %414 : vector<2x256xf32>
      %417 = arith.addf %402, %416 : vector<2x256xf32>
      %c26 = arith.constant 26 : index
      %c0_213 = arith.constant 0 : index
      %418 = vector.load %arg3[%c26, %c0_213] : memref<49x256xf32, #tpu.memory_space<vmem>>, vector<1x256xf32>
      %c0_214 = arith.constant 0 : index
      %c0_215 = arith.constant 0 : index
      %c130 = arith.constant 130 : index
      %419 = vector.load %arg8[%c0_214, %c0_215, %c130] : memref<2x2x512xf32, #tpu.memory_space<vmem>>, vector<1x2x256xf32>
      %420 = vector.shape_cast %419 : vector<1x2x256xf32> to vector<2x256xf32>
      %c1_216 = arith.constant 1 : index
      %c0_217 = arith.constant 0 : index
      %c130_218 = arith.constant 130 : index
      %421 = vector.load %arg8[%c1_216, %c0_217, %c130_218] : memref<2x2x512xf32, #tpu.memory_space<vmem>>, vector<1x2x256xf32>
      %422 = vector.shape_cast %421 : vector<1x2x256xf32> to vector<2x256xf32>
      %c26_219 = arith.constant 26 : index
      %423 = memref.load %arg2[%c26_219] : memref<98xf32, #tpu.memory_space<smem>>
      %424 = vector.broadcast %423 : f32 to vector<2x256xf32>
      %425 = arith.mulf %424, %420 : vector<2x256xf32>
      %c75 = arith.constant 75 : index
      %426 = memref.load %arg2[%c75] : memref<98xf32, #tpu.memory_space<smem>>
      %427 = vector.broadcast %426 : f32 to vector<2x256xf32>
      %428 = arith.mulf %427, %422 : vector<2x256xf32>
      %429 = arith.addf %425, %428 : vector<2x256xf32>
      %430 = vector.broadcast %418 : vector<1x256xf32> to vector<2x256xf32>
      %431 = arith.mulf %430, %429 : vector<2x256xf32>
      %432 = arith.addf %417, %431 : vector<2x256xf32>
      %c27 = arith.constant 27 : index
      %c0_220 = arith.constant 0 : index
      %433 = vector.load %arg3[%c27, %c0_220] : memref<49x256xf32, #tpu.memory_space<vmem>>, vector<1x256xf32>
      %c0_221 = arith.constant 0 : index
      %c0_222 = arith.constant 0 : index
      %c131 = arith.constant 131 : index
      %434 = vector.load %arg8[%c0_221, %c0_222, %c131] : memref<2x2x512xf32, #tpu.memory_space<vmem>>, vector<1x2x256xf32>
      %435 = vector.shape_cast %434 : vector<1x2x256xf32> to vector<2x256xf32>
      %c1_223 = arith.constant 1 : index
      %c0_224 = arith.constant 0 : index
      %c131_225 = arith.constant 131 : index
      %436 = vector.load %arg8[%c1_223, %c0_224, %c131_225] : memref<2x2x512xf32, #tpu.memory_space<vmem>>, vector<1x2x256xf32>
      %437 = vector.shape_cast %436 : vector<1x2x256xf32> to vector<2x256xf32>
      %c27_226 = arith.constant 27 : index
      %438 = memref.load %arg2[%c27_226] : memref<98xf32, #tpu.memory_space<smem>>
      %439 = vector.broadcast %438 : f32 to vector<2x256xf32>
      %440 = arith.mulf %439, %435 : vector<2x256xf32>
      %c76 = arith.constant 76 : index
      %441 = memref.load %arg2[%c76] : memref<98xf32, #tpu.memory_space<smem>>
      %442 = vector.broadcast %441 : f32 to vector<2x256xf32>
      %443 = arith.mulf %442, %437 : vector<2x256xf32>
      %444 = arith.addf %440, %443 : vector<2x256xf32>
      %445 = vector.broadcast %433 : vector<1x256xf32> to vector<2x256xf32>
      %446 = arith.mulf %445, %444 : vector<2x256xf32>
      %447 = arith.addf %432, %446 : vector<2x256xf32>
      %c28 = arith.constant 28 : index
      %c0_227 = arith.constant 0 : index
      %448 = vector.load %arg3[%c28, %c0_227] : memref<49x256xf32, #tpu.memory_space<vmem>>, vector<1x256xf32>
      %c0_228 = arith.constant 0 : index
      %c0_229 = arith.constant 0 : index
      %c141 = arith.constant 141 : index
      %449 = vector.load %arg8[%c0_228, %c0_229, %c141] : memref<2x2x512xf32, #tpu.memory_space<vmem>>, vector<1x2x256xf32>
      %450 = vector.shape_cast %449 : vector<1x2x256xf32> to vector<2x256xf32>
      %c1_230 = arith.constant 1 : index
      %c0_231 = arith.constant 0 : index
      %c141_232 = arith.constant 141 : index
      %451 = vector.load %arg8[%c1_230, %c0_231, %c141_232] : memref<2x2x512xf32, #tpu.memory_space<vmem>>, vector<1x2x256xf32>
      %452 = vector.shape_cast %451 : vector<1x2x256xf32> to vector<2x256xf32>
      %c28_233 = arith.constant 28 : index
      %453 = memref.load %arg2[%c28_233] : memref<98xf32, #tpu.memory_space<smem>>
      %454 = vector.broadcast %453 : f32 to vector<2x256xf32>
      %455 = arith.mulf %454, %450 : vector<2x256xf32>
      %c77_234 = arith.constant 77 : index
      %456 = memref.load %arg2[%c77_234] : memref<98xf32, #tpu.memory_space<smem>>
      %457 = vector.broadcast %456 : f32 to vector<2x256xf32>
      %458 = arith.mulf %457, %452 : vector<2x256xf32>
      %459 = arith.addf %455, %458 : vector<2x256xf32>
      %460 = vector.broadcast %448 : vector<1x256xf32> to vector<2x256xf32>
      %461 = arith.mulf %460, %459 : vector<2x256xf32>
      %462 = arith.addf %447, %461 : vector<2x256xf32>
      %c29 = arith.constant 29 : index
      %c0_235 = arith.constant 0 : index
      %463 = vector.load %arg3[%c29, %c0_235] : memref<49x256xf32, #tpu.memory_space<vmem>>, vector<1x256xf32>
      %c0_236 = arith.constant 0 : index
      %c0_237 = arith.constant 0 : index
      %c142 = arith.constant 142 : index
      %464 = vector.load %arg8[%c0_236, %c0_237, %c142] : memref<2x2x512xf32, #tpu.memory_space<vmem>>, vector<1x2x256xf32>
      %465 = vector.shape_cast %464 : vector<1x2x256xf32> to vector<2x256xf32>
      %c1_238 = arith.constant 1 : index
      %c0_239 = arith.constant 0 : index
      %c142_240 = arith.constant 142 : index
      %466 = vector.load %arg8[%c1_238, %c0_239, %c142_240] : memref<2x2x512xf32, #tpu.memory_space<vmem>>, vector<1x2x256xf32>
      %467 = vector.shape_cast %466 : vector<1x2x256xf32> to vector<2x256xf32>
      %c29_241 = arith.constant 29 : index
      %468 = memref.load %arg2[%c29_241] : memref<98xf32, #tpu.memory_space<smem>>
      %469 = vector.broadcast %468 : f32 to vector<2x256xf32>
      %470 = arith.mulf %469, %465 : vector<2x256xf32>
      %c78_242 = arith.constant 78 : index
      %471 = memref.load %arg2[%c78_242] : memref<98xf32, #tpu.memory_space<smem>>
      %472 = vector.broadcast %471 : f32 to vector<2x256xf32>
      %473 = arith.mulf %472, %467 : vector<2x256xf32>
      %474 = arith.addf %470, %473 : vector<2x256xf32>
      %475 = vector.broadcast %463 : vector<1x256xf32> to vector<2x256xf32>
      %476 = arith.mulf %475, %474 : vector<2x256xf32>
      %477 = arith.addf %462, %476 : vector<2x256xf32>
      %c30 = arith.constant 30 : index
      %c0_243 = arith.constant 0 : index
      %478 = vector.load %arg3[%c30, %c0_243] : memref<49x256xf32, #tpu.memory_space<vmem>>, vector<1x256xf32>
      %c0_244 = arith.constant 0 : index
      %c0_245 = arith.constant 0 : index
      %c143 = arith.constant 143 : index
      %479 = vector.load %arg8[%c0_244, %c0_245, %c143] : memref<2x2x512xf32, #tpu.memory_space<vmem>>, vector<1x2x256xf32>
      %480 = vector.shape_cast %479 : vector<1x2x256xf32> to vector<2x256xf32>
      %c1_246 = arith.constant 1 : index
      %c0_247 = arith.constant 0 : index
      %c143_248 = arith.constant 143 : index
      %481 = vector.load %arg8[%c1_246, %c0_247, %c143_248] : memref<2x2x512xf32, #tpu.memory_space<vmem>>, vector<1x2x256xf32>
      %482 = vector.shape_cast %481 : vector<1x2x256xf32> to vector<2x256xf32>
      %c30_249 = arith.constant 30 : index
      %483 = memref.load %arg2[%c30_249] : memref<98xf32, #tpu.memory_space<smem>>
      %484 = vector.broadcast %483 : f32 to vector<2x256xf32>
      %485 = arith.mulf %484, %480 : vector<2x256xf32>
      %c79_250 = arith.constant 79 : index
      %486 = memref.load %arg2[%c79_250] : memref<98xf32, #tpu.memory_space<smem>>
      %487 = vector.broadcast %486 : f32 to vector<2x256xf32>
      %488 = arith.mulf %487, %482 : vector<2x256xf32>
      %489 = arith.addf %485, %488 : vector<2x256xf32>
      %490 = vector.broadcast %478 : vector<1x256xf32> to vector<2x256xf32>
      %491 = arith.mulf %490, %489 : vector<2x256xf32>
      %492 = arith.addf %477, %491 : vector<2x256xf32>
      %c31 = arith.constant 31 : index
      %c0_251 = arith.constant 0 : index
      %493 = vector.load %arg3[%c31, %c0_251] : memref<49x256xf32, #tpu.memory_space<vmem>>, vector<1x256xf32>
      %c0_252 = arith.constant 0 : index
      %c0_253 = arith.constant 0 : index
      %c144 = arith.constant 144 : index
      %494 = vector.load %arg8[%c0_252, %c0_253, %c144] : memref<2x2x512xf32, #tpu.memory_space<vmem>>, vector<1x2x256xf32>
      %495 = vector.shape_cast %494 : vector<1x2x256xf32> to vector<2x256xf32>
      %c1_254 = arith.constant 1 : index
      %c0_255 = arith.constant 0 : index
      %c144_256 = arith.constant 144 : index
      %496 = vector.load %arg8[%c1_254, %c0_255, %c144_256] : memref<2x2x512xf32, #tpu.memory_space<vmem>>, vector<1x2x256xf32>
      %497 = vector.shape_cast %496 : vector<1x2x256xf32> to vector<2x256xf32>
      %c31_257 = arith.constant 31 : index
      %498 = memref.load %arg2[%c31_257] : memref<98xf32, #tpu.memory_space<smem>>
      %499 = vector.broadcast %498 : f32 to vector<2x256xf32>
      %500 = arith.mulf %499, %495 : vector<2x256xf32>
      %c80_258 = arith.constant 80 : index
      %501 = memref.load %arg2[%c80_258] : memref<98xf32, #tpu.memory_space<smem>>
      %502 = vector.broadcast %501 : f32 to vector<2x256xf32>
      %503 = arith.mulf %502, %497 : vector<2x256xf32>
      %504 = arith.addf %500, %503 : vector<2x256xf32>
      %505 = vector.broadcast %493 : vector<1x256xf32> to vector<2x256xf32>
      %506 = arith.mulf %505, %504 : vector<2x256xf32>
      %507 = arith.addf %492, %506 : vector<2x256xf32>
      %c32 = arith.constant 32 : index
      %c0_259 = arith.constant 0 : index
      %508 = vector.load %arg3[%c32, %c0_259] : memref<49x256xf32, #tpu.memory_space<vmem>>, vector<1x256xf32>
      %c0_260 = arith.constant 0 : index
      %c0_261 = arith.constant 0 : index
      %c145 = arith.constant 145 : index
      %509 = vector.load %arg8[%c0_260, %c0_261, %c145] : memref<2x2x512xf32, #tpu.memory_space<vmem>>, vector<1x2x256xf32>
      %510 = vector.shape_cast %509 : vector<1x2x256xf32> to vector<2x256xf32>
      %c1_262 = arith.constant 1 : index
      %c0_263 = arith.constant 0 : index
      %c145_264 = arith.constant 145 : index
      %511 = vector.load %arg8[%c1_262, %c0_263, %c145_264] : memref<2x2x512xf32, #tpu.memory_space<vmem>>, vector<1x2x256xf32>
      %512 = vector.shape_cast %511 : vector<1x2x256xf32> to vector<2x256xf32>
      %c32_265 = arith.constant 32 : index
      %513 = memref.load %arg2[%c32_265] : memref<98xf32, #tpu.memory_space<smem>>
      %514 = vector.broadcast %513 : f32 to vector<2x256xf32>
      %515 = arith.mulf %514, %510 : vector<2x256xf32>
      %c81_266 = arith.constant 81 : index
      %516 = memref.load %arg2[%c81_266] : memref<98xf32, #tpu.memory_space<smem>>
      %517 = vector.broadcast %516 : f32 to vector<2x256xf32>
      %518 = arith.mulf %517, %512 : vector<2x256xf32>
      %519 = arith.addf %515, %518 : vector<2x256xf32>
      %520 = vector.broadcast %508 : vector<1x256xf32> to vector<2x256xf32>
      %521 = arith.mulf %520, %519 : vector<2x256xf32>
      %522 = arith.addf %507, %521 : vector<2x256xf32>
      %c33 = arith.constant 33 : index
      %c0_267 = arith.constant 0 : index
      %523 = vector.load %arg3[%c33, %c0_267] : memref<49x256xf32, #tpu.memory_space<vmem>>, vector<1x256xf32>
      %c0_268 = arith.constant 0 : index
      %c0_269 = arith.constant 0 : index
      %c146 = arith.constant 146 : index
      %524 = vector.load %arg8[%c0_268, %c0_269, %c146] : memref<2x2x512xf32, #tpu.memory_space<vmem>>, vector<1x2x256xf32>
      %525 = vector.shape_cast %524 : vector<1x2x256xf32> to vector<2x256xf32>
      %c1_270 = arith.constant 1 : index
      %c0_271 = arith.constant 0 : index
      %c146_272 = arith.constant 146 : index
      %526 = vector.load %arg8[%c1_270, %c0_271, %c146_272] : memref<2x2x512xf32, #tpu.memory_space<vmem>>, vector<1x2x256xf32>
      %527 = vector.shape_cast %526 : vector<1x2x256xf32> to vector<2x256xf32>
      %c33_273 = arith.constant 33 : index
      %528 = memref.load %arg2[%c33_273] : memref<98xf32, #tpu.memory_space<smem>>
      %529 = vector.broadcast %528 : f32 to vector<2x256xf32>
      %530 = arith.mulf %529, %525 : vector<2x256xf32>
      %c82_274 = arith.constant 82 : index
      %531 = memref.load %arg2[%c82_274] : memref<98xf32, #tpu.memory_space<smem>>
      %532 = vector.broadcast %531 : f32 to vector<2x256xf32>
      %533 = arith.mulf %532, %527 : vector<2x256xf32>
      %534 = arith.addf %530, %533 : vector<2x256xf32>
      %535 = vector.broadcast %523 : vector<1x256xf32> to vector<2x256xf32>
      %536 = arith.mulf %535, %534 : vector<2x256xf32>
      %537 = arith.addf %522, %536 : vector<2x256xf32>
      %c34 = arith.constant 34 : index
      %c0_275 = arith.constant 0 : index
      %538 = vector.load %arg3[%c34, %c0_275] : memref<49x256xf32, #tpu.memory_space<vmem>>, vector<1x256xf32>
      %c0_276 = arith.constant 0 : index
      %c0_277 = arith.constant 0 : index
      %c147 = arith.constant 147 : index
      %539 = vector.load %arg8[%c0_276, %c0_277, %c147] : memref<2x2x512xf32, #tpu.memory_space<vmem>>, vector<1x2x256xf32>
      %540 = vector.shape_cast %539 : vector<1x2x256xf32> to vector<2x256xf32>
      %c1_278 = arith.constant 1 : index
      %c0_279 = arith.constant 0 : index
      %c147_280 = arith.constant 147 : index
      %541 = vector.load %arg8[%c1_278, %c0_279, %c147_280] : memref<2x2x512xf32, #tpu.memory_space<vmem>>, vector<1x2x256xf32>
      %542 = vector.shape_cast %541 : vector<1x2x256xf32> to vector<2x256xf32>
      %c34_281 = arith.constant 34 : index
      %543 = memref.load %arg2[%c34_281] : memref<98xf32, #tpu.memory_space<smem>>
      %544 = vector.broadcast %543 : f32 to vector<2x256xf32>
      %545 = arith.mulf %544, %540 : vector<2x256xf32>
      %c83_282 = arith.constant 83 : index
      %546 = memref.load %arg2[%c83_282] : memref<98xf32, #tpu.memory_space<smem>>
      %547 = vector.broadcast %546 : f32 to vector<2x256xf32>
      %548 = arith.mulf %547, %542 : vector<2x256xf32>
      %549 = arith.addf %545, %548 : vector<2x256xf32>
      %550 = vector.broadcast %538 : vector<1x256xf32> to vector<2x256xf32>
      %551 = arith.mulf %550, %549 : vector<2x256xf32>
      %552 = arith.addf %537, %551 : vector<2x256xf32>
      %c35 = arith.constant 35 : index
      %c0_283 = arith.constant 0 : index
      %553 = vector.load %arg3[%c35, %c0_283] : memref<49x256xf32, #tpu.memory_space<vmem>>, vector<1x256xf32>
      %c0_284 = arith.constant 0 : index
      %c0_285 = arith.constant 0 : index
      %c157 = arith.constant 157 : index
      %554 = vector.load %arg8[%c0_284, %c0_285, %c157] : memref<2x2x512xf32, #tpu.memory_space<vmem>>, vector<1x2x256xf32>
      %555 = vector.shape_cast %554 : vector<1x2x256xf32> to vector<2x256xf32>
      %c1_286 = arith.constant 1 : index
      %c0_287 = arith.constant 0 : index
      %c157_288 = arith.constant 157 : index
      %556 = vector.load %arg8[%c1_286, %c0_287, %c157_288] : memref<2x2x512xf32, #tpu.memory_space<vmem>>, vector<1x2x256xf32>
      %557 = vector.shape_cast %556 : vector<1x2x256xf32> to vector<2x256xf32>
      %c35_289 = arith.constant 35 : index
      %558 = memref.load %arg2[%c35_289] : memref<98xf32, #tpu.memory_space<smem>>
      %559 = vector.broadcast %558 : f32 to vector<2x256xf32>
      %560 = arith.mulf %559, %555 : vector<2x256xf32>
      %c84 = arith.constant 84 : index
      %561 = memref.load %arg2[%c84] : memref<98xf32, #tpu.memory_space<smem>>
      %562 = vector.broadcast %561 : f32 to vector<2x256xf32>
      %563 = arith.mulf %562, %557 : vector<2x256xf32>
      %564 = arith.addf %560, %563 : vector<2x256xf32>
      %565 = vector.broadcast %553 : vector<1x256xf32> to vector<2x256xf32>
      %566 = arith.mulf %565, %564 : vector<2x256xf32>
      %567 = arith.addf %552, %566 : vector<2x256xf32>
      %c36 = arith.constant 36 : index
      %c0_290 = arith.constant 0 : index
      %568 = vector.load %arg3[%c36, %c0_290] : memref<49x256xf32, #tpu.memory_space<vmem>>, vector<1x256xf32>
      %c0_291 = arith.constant 0 : index
      %c0_292 = arith.constant 0 : index
      %c158 = arith.constant 158 : index
      %569 = vector.load %arg8[%c0_291, %c0_292, %c158] : memref<2x2x512xf32, #tpu.memory_space<vmem>>, vector<1x2x256xf32>
      %570 = vector.shape_cast %569 : vector<1x2x256xf32> to vector<2x256xf32>
      %c1_293 = arith.constant 1 : index
      %c0_294 = arith.constant 0 : index
      %c158_295 = arith.constant 158 : index
      %571 = vector.load %arg8[%c1_293, %c0_294, %c158_295] : memref<2x2x512xf32, #tpu.memory_space<vmem>>, vector<1x2x256xf32>
      %572 = vector.shape_cast %571 : vector<1x2x256xf32> to vector<2x256xf32>
      %c36_296 = arith.constant 36 : index
      %573 = memref.load %arg2[%c36_296] : memref<98xf32, #tpu.memory_space<smem>>
      %574 = vector.broadcast %573 : f32 to vector<2x256xf32>
      %575 = arith.mulf %574, %570 : vector<2x256xf32>
      %c85 = arith.constant 85 : index
      %576 = memref.load %arg2[%c85] : memref<98xf32, #tpu.memory_space<smem>>
      %577 = vector.broadcast %576 : f32 to vector<2x256xf32>
      %578 = arith.mulf %577, %572 : vector<2x256xf32>
      %579 = arith.addf %575, %578 : vector<2x256xf32>
      %580 = vector.broadcast %568 : vector<1x256xf32> to vector<2x256xf32>
      %581 = arith.mulf %580, %579 : vector<2x256xf32>
      %582 = arith.addf %567, %581 : vector<2x256xf32>
      %c37 = arith.constant 37 : index
      %c0_297 = arith.constant 0 : index
      %583 = vector.load %arg3[%c37, %c0_297] : memref<49x256xf32, #tpu.memory_space<vmem>>, vector<1x256xf32>
      %c0_298 = arith.constant 0 : index
      %c0_299 = arith.constant 0 : index
      %c159 = arith.constant 159 : index
      %584 = vector.load %arg8[%c0_298, %c0_299, %c159] : memref<2x2x512xf32, #tpu.memory_space<vmem>>, vector<1x2x256xf32>
      %585 = vector.shape_cast %584 : vector<1x2x256xf32> to vector<2x256xf32>
      %c1_300 = arith.constant 1 : index
      %c0_301 = arith.constant 0 : index
      %c159_302 = arith.constant 159 : index
      %586 = vector.load %arg8[%c1_300, %c0_301, %c159_302] : memref<2x2x512xf32, #tpu.memory_space<vmem>>, vector<1x2x256xf32>
      %587 = vector.shape_cast %586 : vector<1x2x256xf32> to vector<2x256xf32>
      %c37_303 = arith.constant 37 : index
      %588 = memref.load %arg2[%c37_303] : memref<98xf32, #tpu.memory_space<smem>>
      %589 = vector.broadcast %588 : f32 to vector<2x256xf32>
      %590 = arith.mulf %589, %585 : vector<2x256xf32>
      %c86 = arith.constant 86 : index
      %591 = memref.load %arg2[%c86] : memref<98xf32, #tpu.memory_space<smem>>
      %592 = vector.broadcast %591 : f32 to vector<2x256xf32>
      %593 = arith.mulf %592, %587 : vector<2x256xf32>
      %594 = arith.addf %590, %593 : vector<2x256xf32>
      %595 = vector.broadcast %583 : vector<1x256xf32> to vector<2x256xf32>
      %596 = arith.mulf %595, %594 : vector<2x256xf32>
      %597 = arith.addf %582, %596 : vector<2x256xf32>
      %c38 = arith.constant 38 : index
      %c0_304 = arith.constant 0 : index
      %598 = vector.load %arg3[%c38, %c0_304] : memref<49x256xf32, #tpu.memory_space<vmem>>, vector<1x256xf32>
      %c0_305 = arith.constant 0 : index
      %c0_306 = arith.constant 0 : index
      %c160 = arith.constant 160 : index
      %599 = vector.load %arg8[%c0_305, %c0_306, %c160] : memref<2x2x512xf32, #tpu.memory_space<vmem>>, vector<1x2x256xf32>
      %600 = vector.shape_cast %599 : vector<1x2x256xf32> to vector<2x256xf32>
      %c1_307 = arith.constant 1 : index
      %c0_308 = arith.constant 0 : index
      %c160_309 = arith.constant 160 : index
      %601 = vector.load %arg8[%c1_307, %c0_308, %c160_309] : memref<2x2x512xf32, #tpu.memory_space<vmem>>, vector<1x2x256xf32>
      %602 = vector.shape_cast %601 : vector<1x2x256xf32> to vector<2x256xf32>
      %c38_310 = arith.constant 38 : index
      %603 = memref.load %arg2[%c38_310] : memref<98xf32, #tpu.memory_space<smem>>
      %604 = vector.broadcast %603 : f32 to vector<2x256xf32>
      %605 = arith.mulf %604, %600 : vector<2x256xf32>
      %c87 = arith.constant 87 : index
      %606 = memref.load %arg2[%c87] : memref<98xf32, #tpu.memory_space<smem>>
      %607 = vector.broadcast %606 : f32 to vector<2x256xf32>
      %608 = arith.mulf %607, %602 : vector<2x256xf32>
      %609 = arith.addf %605, %608 : vector<2x256xf32>
      %610 = vector.broadcast %598 : vector<1x256xf32> to vector<2x256xf32>
      %611 = arith.mulf %610, %609 : vector<2x256xf32>
      %612 = arith.addf %597, %611 : vector<2x256xf32>
      %c39 = arith.constant 39 : index
      %c0_311 = arith.constant 0 : index
      %613 = vector.load %arg3[%c39, %c0_311] : memref<49x256xf32, #tpu.memory_space<vmem>>, vector<1x256xf32>
      %c0_312 = arith.constant 0 : index
      %c0_313 = arith.constant 0 : index
      %c161 = arith.constant 161 : index
      %614 = vector.load %arg8[%c0_312, %c0_313, %c161] : memref<2x2x512xf32, #tpu.memory_space<vmem>>, vector<1x2x256xf32>
      %615 = vector.shape_cast %614 : vector<1x2x256xf32> to vector<2x256xf32>
      %c1_314 = arith.constant 1 : index
      %c0_315 = arith.constant 0 : index
      %c161_316 = arith.constant 161 : index
      %616 = vector.load %arg8[%c1_314, %c0_315, %c161_316] : memref<2x2x512xf32, #tpu.memory_space<vmem>>, vector<1x2x256xf32>
      %617 = vector.shape_cast %616 : vector<1x2x256xf32> to vector<2x256xf32>
      %c39_317 = arith.constant 39 : index
      %618 = memref.load %arg2[%c39_317] : memref<98xf32, #tpu.memory_space<smem>>
      %619 = vector.broadcast %618 : f32 to vector<2x256xf32>
      %620 = arith.mulf %619, %615 : vector<2x256xf32>
      %c88 = arith.constant 88 : index
      %621 = memref.load %arg2[%c88] : memref<98xf32, #tpu.memory_space<smem>>
      %622 = vector.broadcast %621 : f32 to vector<2x256xf32>
      %623 = arith.mulf %622, %617 : vector<2x256xf32>
      %624 = arith.addf %620, %623 : vector<2x256xf32>
      %625 = vector.broadcast %613 : vector<1x256xf32> to vector<2x256xf32>
      %626 = arith.mulf %625, %624 : vector<2x256xf32>
      %627 = arith.addf %612, %626 : vector<2x256xf32>
      %c40 = arith.constant 40 : index
      %c0_318 = arith.constant 0 : index
      %628 = vector.load %arg3[%c40, %c0_318] : memref<49x256xf32, #tpu.memory_space<vmem>>, vector<1x256xf32>
      %c0_319 = arith.constant 0 : index
      %c0_320 = arith.constant 0 : index
      %c162 = arith.constant 162 : index
      %629 = vector.load %arg8[%c0_319, %c0_320, %c162] : memref<2x2x512xf32, #tpu.memory_space<vmem>>, vector<1x2x256xf32>
      %630 = vector.shape_cast %629 : vector<1x2x256xf32> to vector<2x256xf32>
      %c1_321 = arith.constant 1 : index
      %c0_322 = arith.constant 0 : index
      %c162_323 = arith.constant 162 : index
      %631 = vector.load %arg8[%c1_321, %c0_322, %c162_323] : memref<2x2x512xf32, #tpu.memory_space<vmem>>, vector<1x2x256xf32>
      %632 = vector.shape_cast %631 : vector<1x2x256xf32> to vector<2x256xf32>
      %c40_324 = arith.constant 40 : index
      %633 = memref.load %arg2[%c40_324] : memref<98xf32, #tpu.memory_space<smem>>
      %634 = vector.broadcast %633 : f32 to vector<2x256xf32>
      %635 = arith.mulf %634, %630 : vector<2x256xf32>
      %c89 = arith.constant 89 : index
      %636 = memref.load %arg2[%c89] : memref<98xf32, #tpu.memory_space<smem>>
      %637 = vector.broadcast %636 : f32 to vector<2x256xf32>
      %638 = arith.mulf %637, %632 : vector<2x256xf32>
      %639 = arith.addf %635, %638 : vector<2x256xf32>
      %640 = vector.broadcast %628 : vector<1x256xf32> to vector<2x256xf32>
      %641 = arith.mulf %640, %639 : vector<2x256xf32>
      %642 = arith.addf %627, %641 : vector<2x256xf32>
      %c41 = arith.constant 41 : index
      %c0_325 = arith.constant 0 : index
      %643 = vector.load %arg3[%c41, %c0_325] : memref<49x256xf32, #tpu.memory_space<vmem>>, vector<1x256xf32>
      %c0_326 = arith.constant 0 : index
      %c0_327 = arith.constant 0 : index
      %c163 = arith.constant 163 : index
      %644 = vector.load %arg8[%c0_326, %c0_327, %c163] : memref<2x2x512xf32, #tpu.memory_space<vmem>>, vector<1x2x256xf32>
      %645 = vector.shape_cast %644 : vector<1x2x256xf32> to vector<2x256xf32>
      %c1_328 = arith.constant 1 : index
      %c0_329 = arith.constant 0 : index
      %c163_330 = arith.constant 163 : index
      %646 = vector.load %arg8[%c1_328, %c0_329, %c163_330] : memref<2x2x512xf32, #tpu.memory_space<vmem>>, vector<1x2x256xf32>
      %647 = vector.shape_cast %646 : vector<1x2x256xf32> to vector<2x256xf32>
      %c41_331 = arith.constant 41 : index
      %648 = memref.load %arg2[%c41_331] : memref<98xf32, #tpu.memory_space<smem>>
      %649 = vector.broadcast %648 : f32 to vector<2x256xf32>
      %650 = arith.mulf %649, %645 : vector<2x256xf32>
      %c90 = arith.constant 90 : index
      %651 = memref.load %arg2[%c90] : memref<98xf32, #tpu.memory_space<smem>>
      %652 = vector.broadcast %651 : f32 to vector<2x256xf32>
      %653 = arith.mulf %652, %647 : vector<2x256xf32>
      %654 = arith.addf %650, %653 : vector<2x256xf32>
      %655 = vector.broadcast %643 : vector<1x256xf32> to vector<2x256xf32>
      %656 = arith.mulf %655, %654 : vector<2x256xf32>
      %657 = arith.addf %642, %656 : vector<2x256xf32>
      %c42 = arith.constant 42 : index
      %c0_332 = arith.constant 0 : index
      %658 = vector.load %arg3[%c42, %c0_332] : memref<49x256xf32, #tpu.memory_space<vmem>>, vector<1x256xf32>
      %c0_333 = arith.constant 0 : index
      %c0_334 = arith.constant 0 : index
      %c173 = arith.constant 173 : index
      %659 = vector.load %arg8[%c0_333, %c0_334, %c173] : memref<2x2x512xf32, #tpu.memory_space<vmem>>, vector<1x2x256xf32>
      %660 = vector.shape_cast %659 : vector<1x2x256xf32> to vector<2x256xf32>
      %c1_335 = arith.constant 1 : index
      %c0_336 = arith.constant 0 : index
      %c173_337 = arith.constant 173 : index
      %661 = vector.load %arg8[%c1_335, %c0_336, %c173_337] : memref<2x2x512xf32, #tpu.memory_space<vmem>>, vector<1x2x256xf32>
      %662 = vector.shape_cast %661 : vector<1x2x256xf32> to vector<2x256xf32>
      %c42_338 = arith.constant 42 : index
      %663 = memref.load %arg2[%c42_338] : memref<98xf32, #tpu.memory_space<smem>>
      %664 = vector.broadcast %663 : f32 to vector<2x256xf32>
      %665 = arith.mulf %664, %660 : vector<2x256xf32>
      %c91 = arith.constant 91 : index
      %666 = memref.load %arg2[%c91] : memref<98xf32, #tpu.memory_space<smem>>
      %667 = vector.broadcast %666 : f32 to vector<2x256xf32>
      %668 = arith.mulf %667, %662 : vector<2x256xf32>
      %669 = arith.addf %665, %668 : vector<2x256xf32>
      %670 = vector.broadcast %658 : vector<1x256xf32> to vector<2x256xf32>
      %671 = arith.mulf %670, %669 : vector<2x256xf32>
      %672 = arith.addf %657, %671 : vector<2x256xf32>
      %c43 = arith.constant 43 : index
      %c0_339 = arith.constant 0 : index
      %673 = vector.load %arg3[%c43, %c0_339] : memref<49x256xf32, #tpu.memory_space<vmem>>, vector<1x256xf32>
      %c0_340 = arith.constant 0 : index
      %c0_341 = arith.constant 0 : index
      %c174 = arith.constant 174 : index
      %674 = vector.load %arg8[%c0_340, %c0_341, %c174] : memref<2x2x512xf32, #tpu.memory_space<vmem>>, vector<1x2x256xf32>
      %675 = vector.shape_cast %674 : vector<1x2x256xf32> to vector<2x256xf32>
      %c1_342 = arith.constant 1 : index
      %c0_343 = arith.constant 0 : index
      %c174_344 = arith.constant 174 : index
      %676 = vector.load %arg8[%c1_342, %c0_343, %c174_344] : memref<2x2x512xf32, #tpu.memory_space<vmem>>, vector<1x2x256xf32>
      %677 = vector.shape_cast %676 : vector<1x2x256xf32> to vector<2x256xf32>
      %c43_345 = arith.constant 43 : index
      %678 = memref.load %arg2[%c43_345] : memref<98xf32, #tpu.memory_space<smem>>
      %679 = vector.broadcast %678 : f32 to vector<2x256xf32>
      %680 = arith.mulf %679, %675 : vector<2x256xf32>
      %c92 = arith.constant 92 : index
      %681 = memref.load %arg2[%c92] : memref<98xf32, #tpu.memory_space<smem>>
      %682 = vector.broadcast %681 : f32 to vector<2x256xf32>
      %683 = arith.mulf %682, %677 : vector<2x256xf32>
      %684 = arith.addf %680, %683 : vector<2x256xf32>
      %685 = vector.broadcast %673 : vector<1x256xf32> to vector<2x256xf32>
      %686 = arith.mulf %685, %684 : vector<2x256xf32>
      %687 = arith.addf %672, %686 : vector<2x256xf32>
      %c44 = arith.constant 44 : index
      %c0_346 = arith.constant 0 : index
      %688 = vector.load %arg3[%c44, %c0_346] : memref<49x256xf32, #tpu.memory_space<vmem>>, vector<1x256xf32>
      %c0_347 = arith.constant 0 : index
      %c0_348 = arith.constant 0 : index
      %c175 = arith.constant 175 : index
      %689 = vector.load %arg8[%c0_347, %c0_348, %c175] : memref<2x2x512xf32, #tpu.memory_space<vmem>>, vector<1x2x256xf32>
      %690 = vector.shape_cast %689 : vector<1x2x256xf32> to vector<2x256xf32>
      %c1_349 = arith.constant 1 : index
      %c0_350 = arith.constant 0 : index
      %c175_351 = arith.constant 175 : index
      %691 = vector.load %arg8[%c1_349, %c0_350, %c175_351] : memref<2x2x512xf32, #tpu.memory_space<vmem>>, vector<1x2x256xf32>
      %692 = vector.shape_cast %691 : vector<1x2x256xf32> to vector<2x256xf32>
      %c44_352 = arith.constant 44 : index
      %693 = memref.load %arg2[%c44_352] : memref<98xf32, #tpu.memory_space<smem>>
      %694 = vector.broadcast %693 : f32 to vector<2x256xf32>
      %695 = arith.mulf %694, %690 : vector<2x256xf32>
      %c93_353 = arith.constant 93 : index
      %696 = memref.load %arg2[%c93_353] : memref<98xf32, #tpu.memory_space<smem>>
      %697 = vector.broadcast %696 : f32 to vector<2x256xf32>
      %698 = arith.mulf %697, %692 : vector<2x256xf32>
      %699 = arith.addf %695, %698 : vector<2x256xf32>
      %700 = vector.broadcast %688 : vector<1x256xf32> to vector<2x256xf32>
      %701 = arith.mulf %700, %699 : vector<2x256xf32>
      %702 = arith.addf %687, %701 : vector<2x256xf32>
      %c45 = arith.constant 45 : index
      %c0_354 = arith.constant 0 : index
      %703 = vector.load %arg3[%c45, %c0_354] : memref<49x256xf32, #tpu.memory_space<vmem>>, vector<1x256xf32>
      %c0_355 = arith.constant 0 : index
      %c0_356 = arith.constant 0 : index
      %c176 = arith.constant 176 : index
      %704 = vector.load %arg8[%c0_355, %c0_356, %c176] : memref<2x2x512xf32, #tpu.memory_space<vmem>>, vector<1x2x256xf32>
      %705 = vector.shape_cast %704 : vector<1x2x256xf32> to vector<2x256xf32>
      %c1_357 = arith.constant 1 : index
      %c0_358 = arith.constant 0 : index
      %c176_359 = arith.constant 176 : index
      %706 = vector.load %arg8[%c1_357, %c0_358, %c176_359] : memref<2x2x512xf32, #tpu.memory_space<vmem>>, vector<1x2x256xf32>
      %707 = vector.shape_cast %706 : vector<1x2x256xf32> to vector<2x256xf32>
      %c45_360 = arith.constant 45 : index
      %708 = memref.load %arg2[%c45_360] : memref<98xf32, #tpu.memory_space<smem>>
      %709 = vector.broadcast %708 : f32 to vector<2x256xf32>
      %710 = arith.mulf %709, %705 : vector<2x256xf32>
      %c94_361 = arith.constant 94 : index
      %711 = memref.load %arg2[%c94_361] : memref<98xf32, #tpu.memory_space<smem>>
      %712 = vector.broadcast %711 : f32 to vector<2x256xf32>
      %713 = arith.mulf %712, %707 : vector<2x256xf32>
      %714 = arith.addf %710, %713 : vector<2x256xf32>
      %715 = vector.broadcast %703 : vector<1x256xf32> to vector<2x256xf32>
      %716 = arith.mulf %715, %714 : vector<2x256xf32>
      %717 = arith.addf %702, %716 : vector<2x256xf32>
      %c46 = arith.constant 46 : index
      %c0_362 = arith.constant 0 : index
      %718 = vector.load %arg3[%c46, %c0_362] : memref<49x256xf32, #tpu.memory_space<vmem>>, vector<1x256xf32>
      %c0_363 = arith.constant 0 : index
      %c0_364 = arith.constant 0 : index
      %c177 = arith.constant 177 : index
      %719 = vector.load %arg8[%c0_363, %c0_364, %c177] : memref<2x2x512xf32, #tpu.memory_space<vmem>>, vector<1x2x256xf32>
      %720 = vector.shape_cast %719 : vector<1x2x256xf32> to vector<2x256xf32>
      %c1_365 = arith.constant 1 : index
      %c0_366 = arith.constant 0 : index
      %c177_367 = arith.constant 177 : index
      %721 = vector.load %arg8[%c1_365, %c0_366, %c177_367] : memref<2x2x512xf32, #tpu.memory_space<vmem>>, vector<1x2x256xf32>
      %722 = vector.shape_cast %721 : vector<1x2x256xf32> to vector<2x256xf32>
      %c46_368 = arith.constant 46 : index
      %723 = memref.load %arg2[%c46_368] : memref<98xf32, #tpu.memory_space<smem>>
      %724 = vector.broadcast %723 : f32 to vector<2x256xf32>
      %725 = arith.mulf %724, %720 : vector<2x256xf32>
      %c95_369 = arith.constant 95 : index
      %726 = memref.load %arg2[%c95_369] : memref<98xf32, #tpu.memory_space<smem>>
      %727 = vector.broadcast %726 : f32 to vector<2x256xf32>
      %728 = arith.mulf %727, %722 : vector<2x256xf32>
      %729 = arith.addf %725, %728 : vector<2x256xf32>
      %730 = vector.broadcast %718 : vector<1x256xf32> to vector<2x256xf32>
      %731 = arith.mulf %730, %729 : vector<2x256xf32>
      %732 = arith.addf %717, %731 : vector<2x256xf32>
      %c47 = arith.constant 47 : index
      %c0_370 = arith.constant 0 : index
      %733 = vector.load %arg3[%c47, %c0_370] : memref<49x256xf32, #tpu.memory_space<vmem>>, vector<1x256xf32>
      %c0_371 = arith.constant 0 : index
      %c0_372 = arith.constant 0 : index
      %c178 = arith.constant 178 : index
      %734 = vector.load %arg8[%c0_371, %c0_372, %c178] : memref<2x2x512xf32, #tpu.memory_space<vmem>>, vector<1x2x256xf32>
      %735 = vector.shape_cast %734 : vector<1x2x256xf32> to vector<2x256xf32>
      %c1_373 = arith.constant 1 : index
      %c0_374 = arith.constant 0 : index
      %c178_375 = arith.constant 178 : index
      %736 = vector.load %arg8[%c1_373, %c0_374, %c178_375] : memref<2x2x512xf32, #tpu.memory_space<vmem>>, vector<1x2x256xf32>
      %737 = vector.shape_cast %736 : vector<1x2x256xf32> to vector<2x256xf32>
      %c47_376 = arith.constant 47 : index
      %738 = memref.load %arg2[%c47_376] : memref<98xf32, #tpu.memory_space<smem>>
      %739 = vector.broadcast %738 : f32 to vector<2x256xf32>
      %740 = arith.mulf %739, %735 : vector<2x256xf32>
      %c96_377 = arith.constant 96 : index
      %741 = memref.load %arg2[%c96_377] : memref<98xf32, #tpu.memory_space<smem>>
      %742 = vector.broadcast %741 : f32 to vector<2x256xf32>
      %743 = arith.mulf %742, %737 : vector<2x256xf32>
      %744 = arith.addf %740, %743 : vector<2x256xf32>
      %745 = vector.broadcast %733 : vector<1x256xf32> to vector<2x256xf32>
      %746 = arith.mulf %745, %744 : vector<2x256xf32>
      %747 = arith.addf %732, %746 : vector<2x256xf32>
      %c48 = arith.constant 48 : index
      %c0_378 = arith.constant 0 : index
      %748 = vector.load %arg3[%c48, %c0_378] : memref<49x256xf32, #tpu.memory_space<vmem>>, vector<1x256xf32>
      %c0_379 = arith.constant 0 : index
      %c0_380 = arith.constant 0 : index
      %c179 = arith.constant 179 : index
      %749 = vector.load %arg8[%c0_379, %c0_380, %c179] : memref<2x2x512xf32, #tpu.memory_space<vmem>>, vector<1x2x256xf32>
      %750 = vector.shape_cast %749 : vector<1x2x256xf32> to vector<2x256xf32>
      %c1_381 = arith.constant 1 : index
      %c0_382 = arith.constant 0 : index
      %c179_383 = arith.constant 179 : index
      %751 = vector.load %arg8[%c1_381, %c0_382, %c179_383] : memref<2x2x512xf32, #tpu.memory_space<vmem>>, vector<1x2x256xf32>
      %752 = vector.shape_cast %751 : vector<1x2x256xf32> to vector<2x256xf32>
      %c48_384 = arith.constant 48 : index
      %753 = memref.load %arg2[%c48_384] : memref<98xf32, #tpu.memory_space<smem>>
      %754 = vector.broadcast %753 : f32 to vector<2x256xf32>
      %755 = arith.mulf %754, %750 : vector<2x256xf32>
      %c97_385 = arith.constant 97 : index
      %756 = memref.load %arg2[%c97_385] : memref<98xf32, #tpu.memory_space<smem>>
      %757 = vector.broadcast %756 : f32 to vector<2x256xf32>
      %758 = arith.mulf %757, %752 : vector<2x256xf32>
      %759 = arith.addf %755, %758 : vector<2x256xf32>
      %760 = vector.broadcast %748 : vector<1x256xf32> to vector<2x256xf32>
      %761 = arith.mulf %760, %759 : vector<2x256xf32>
      %762 = arith.addf %747, %761 : vector<2x256xf32>
      %763 = arith.negf %762 : vector<2x256xf32>
      %764 = math.exp %763 : vector<2x256xf32>
      %cst_386 = arith.constant 1.000000e+00 : f32
      %765 = vector.broadcast %cst_386 : f32 to vector<2x256xf32>
      %766 = arith.addf %765, %764 : vector<2x256xf32>
      %767 = arith.divf %765, %766 : vector<2x256xf32>
      %c0_387 = arith.constant 0 : index
      %c0_388 = arith.constant 0 : index
      %c0_389 = arith.constant 0 : index
      %768 = vector.load %arg5[%c0_387, %c0_388, %c0_389] : memref<2x1x256xf32, #tpu.memory_space<vmem>>, vector<2x1x256xf32>
      %769 = vector.shape_cast %768 : vector<2x1x256xf32> to vector<2x256xf32>
      %770 = vector.shape_cast %767 : vector<2x256xf32> to vector<2x1x256xf32>
      tpu.vector_store %arg5[%c0_387, %c0_388, %c0_389], %770 {strides = array<i32>} : memref<2x1x256xf32, #tpu.memory_space<vmem>>, vector<2x1x256xf32>,
    } else {
    }
    return
  }
  func.func @transform_0(%arg0: i32, %arg1: i32) -> i32 {
    %c0_i32 = arith.constant 0 : i32
    %c0_i32_0 = arith.constant 0 : i32
    return %c0_i32 : i32
  }
  func.func @transform_1(%arg0: i32, %arg1: i32) -> (i32, i32) {
    %c0_i32 = arith.constant 0 : i32
    %c0_i32_0 = arith.constant 0 : i32
    %c0_i32_1 = arith.constant 0 : i32
    return %c0_i32, %c0_i32_0 : i32, i32
  }
  func.func @transform_2(%arg0: i32, %arg1: i32) -> (i32, i32, i32) {
    %c0_i32 = arith.constant 0 : i32
    %c0_i32_0 = arith.constant 0 : i32
    return %arg0, %arg1, %c0_i32 : i32, i32, i32
  }
  func.func @transform_3(%arg0: i32, %arg1: i32) -> (i32, i32, i32) {
    %c0_i32 = arith.constant 0 : i32
    %c0_i32_0 = arith.constant 0 : i32
    %c0_i32_1 = arith.constant 0 : i32
    return %arg0, %c0_i32, %c0_i32_0 : i32, i32, i32
  }
}

</mosaic_0001>

<llo_original>
// kernel: tpu_custom_call.1
$region0: #{tpu_custom_call.1}
  #allocation0 [shape = 'u32[]', space=smem, size = 0x4, offset = 0x4, fixed_abs, tag = 'smem constant byte address 0x4 - core index']
  #allocation1 [shape = 'u32[72,128]{1,0:T(1,128)}', space=vmem, size = 0x9000, scoped, tag = 'internal scratch']
  #allocation2 [shape = 'f32[2,256]{1,0:T(2,128)}', space=vmem, size = 0x800, scoped, tag = 'scratch operand']
  #allocation3 [shape = 'f32[2,256]{1,0:T(2,128)}', space=vmem, size = 0x800, scoped, tag = 'scratch operand']
  #allocation4 [shape = 'f32[2,2,512]{2,1,0:T(2,128)}', space=vmem, size = 0x2000, scoped, tag = 'scratch operand']
  %s0 = inlined_call_operand.hbm [shape: f32[98], index: 0, kind: input, shape index: {}]
  %s1 = inlined_call_operand.hbm [shape: f32[49,256], index: 1, kind: input, shape index: {}]
  %s2 = inlined_call_operand.hbm [shape: f32[2,32,256], index: 2, kind: input, shape index: {}]
  %s3 = inlined_call_operand.hbm [shape: f32[2,1,256], index: 3, kind: output, shape index: {}]
  %s4 = sld [smem:[#allocation0]]
  $region42: #{tpu_custom_call.1} parent=0
    _
  %s6 = ssub.s32 1, %s4
  %s7 = scalar_select 0, %s6, %s4
  $region1: #{tpu_custom_call.1} parent=0
    #allocation5 [shape = 'u8[512]{0}', space=smem, size = 0x200, scoped, tag = 'input window, operand 0, single buffered']
    #allocation6 [shape = 's32[1]{0}', space=sflag, size = 0x4, scoped, tag = 'scoped memory for tpu_custom_call.1']
    #allocation7 [shape = 's32[1]{0}', space=sflag, size = 0x4, scoped, tag = 'scoped memory for tpu_custom_call.1']
    #allocation8 [shape = 's32[1]{0}', space=sflag, size = 0x4, scoped, tag = 'scoped memory for tpu_custom_call.1']
    #allocation9 [shape = 'u8[57344]{0}', space=vmem, size = 0xe000, scoped, tag = 'input window, operand 1, single buffered']
    #allocation10 [shape = 'u8[65536]{0}', space=vmem, size = 0x10000, scoped, tag = 'input window, operand 2, single buffered']
    #allocation11 [shape = 's32[1]{0}', space=sflag, size = 0x4, scoped, tag = 'scoped memory for tpu_custom_call.1']
    #allocation12 [shape = 'u8[2048]{0}', space=vmem, size = 0x800, scoped, tag = 'output window, operand 0, single buffered']
    %8 = vsyncpa [#allocation8], 0
    %9 = vsyncpa [#allocation6], 0
    %10 = vsyncpa [#allocation11], 0
    %11 = vsyncpa [#allocation7], 0
    // Predicated region
    $region2: #{tpu_custom_call.1} parent=1 // pred_check
      _
    $region3: #{tpu_custom_call.1} parent=1 // pred_check_branch
      %13 = sbr.rel (0) target = $region5
    $region4: #{tpu_custom_call.1} parent=1 // pred_region
      %15 = vsyncadd [#allocation8], 0
      %s17 = sshll.u32 %s0, 4
      %s18 = int_to_ptr.hbm [resolvable:$true] %s17
      %20 = dma.hbm_to_smem %s18, 16, [#allocation5], [#allocation8]
    $region5: #{tpu_custom_call.1} parent=1 // pred_fallthru
      _
    // Predicated region
    $region6: #{tpu_custom_call.1} parent=1 // pred_check
      _
    $region7: #{tpu_custom_call.1} parent=1 // pred_check_branch
      %22 = sbr.rel (0) target = $region9
    $region8: #{tpu_custom_call.1} parent=1 // pred_region
      %24 = vsyncadd [#allocation6], 0
      %s25 = sshll.u32 %s1, 4
      %s26 = int_to_ptr.hbm [resolvable:$true] %s25
      %s27 = sshll.u32 [#allocation9], 4
      %s28 = int_to_ptr.vmem [resolvable:$true] %s27
      %33 = dma.hbm_to_vmem [thread:$0]  %s26, 1792, %s28, [#allocation6], 256, 256, 16
    $region9: #{tpu_custom_call.1} parent=1 // pred_fallthru
      _
    // Predicated region
    $region10: #{tpu_custom_call.1} parent=1 // pred_check
      _
    $region11: #{tpu_custom_call.1} parent=1 // pred_check_branch
      %35 = sbr.rel (0) target = $region13
    $region12: #{tpu_custom_call.1} parent=1 // pred_region
      %37 = vsyncadd [#allocation11], 0
      %s38 = sshll.u32 %s2, 4
      %s39 = int_to_ptr.hbm [resolvable:$true] %s38
      %s40 = sshll.u32 [#allocation10], 4
      %s41 = int_to_ptr.vmem [resolvable:$true] %s40
      %46 = dma.hbm_to_vmem [thread:$0]  %s39, 2048, %s41, [#allocation11], 256, 256, 16
    $region13: #{tpu_custom_call.1} parent=1 // pred_fallthru
      _
    // Predicated region
    $region14: #{tpu_custom_call.1} parent=1 // pred_check
      _
    $region15: #{tpu_custom_call.1} parent=1 // pred_check_branch
      %48 = sbr.rel (0) target = $region17
    $region16: #{tpu_custom_call.1} parent=1 // pred_region
      %50 = dma.done [#allocation8], 16
    $region17: #{tpu_custom_call.1} parent=1 // pred_fallthru
      _
    // Predicated region
    $region18: #{tpu_custom_call.1} parent=1 // pred_check
      _
    $region19: #{tpu_custom_call.1} parent=1 // pred_check_branch
      %52 = sbr.rel (0) target = $region21
    $region20: #{tpu_custom_call.1} parent=1 // pred_region
      %54 = dma.done [#allocation6], 1792
    $region21: #{tpu_custom_call.1} parent=1 // pred_fallthru
      _
    // Predicated region
    $region22: #{tpu_custom_call.1} parent=1 // pred_check
      _
    $region23: #{tpu_custom_call.1} parent=1 // pred_check_branch
      %56 = sbr.rel (0) target = $region25
    $region24: #{tpu_custom_call.1} parent=1 // pred_region
      %58 = dma.done [#allocation11], 2048
    $region25: #{tpu_custom_call.1} parent=1 // pred_fallthru
      _
    %59 = sfence
    %p60 = scmp.eq.s32.totalorder 0, 0
    // Predicated region
    $region26: #{tpu_custom_call.1} parent=1 // pred_check
      %p61 = pneg %p60
    $region27: #{tpu_custom_call.1} parent=1 // pred_check_branch
      %63 = sbr.rel (%p61) target = $region29
    $region28: #{tpu_custom_call.1} parent=1 // pred_region
      %64 = vst [vmem:[#allocation2] sm:$0xf] 0.0
      %65 = vst [vmem:[#allocation3] sm:$0xf] -inf
    $region29: #{tpu_custom_call.1} parent=1 // pred_fallthru
      _
    %v66 = vld [vmem:[#allocation10] sm:$0xff]
    %v67 = vld [vmem:[#allocation10 + $0x8] sm:$0xff]
    %v68 = vld [vmem:[#allocation10 + $0x10] sm:$0xff]
    %v69 = vld [vmem:[#allocation10 + $0x18] sm:$0xff]
    %v70 = vld [vmem:[#allocation10 + $0x20] sm:$0xff]
    %v71 = vld [vmem:[#allocation10 + $0x28] sm:$0xff]
    %v72 = vld [vmem:[#allocation10 + $0x30] sm:$0xff]
    %v73 = vld [vmem:[#allocation10 + $0x38] sm:$0xff]
    %v74 = vld [vmem:[#allocation10 + $0x40] sm:$0xff]
    %v75 = vld [vmem:[#allocation10 + $0x48] sm:$0xff]
    %v76 = vld [vmem:[#allocation10 + $0x50] sm:$0xff]
    %v77 = vld [vmem:[#allocation10 + $0x58] sm:$0xff]
    %v78 = vld [vmem:[#allocation10 + $0x60] sm:$0xff]
    %v79 = vld [vmem:[#allocation10 + $0x68] sm:$0xff]
    %v80 = vld [vmem:[#allocation10 + $0x70] sm:$0xff]
    %v81 = vld [vmem:[#allocation10 + $0x78] sm:$0xff]
    %v82 = vld [vmem:[#allocation2] sm:$0xf]
    %v83 = vadd.f32 %v66, %v68
    %v84 = vadd.f32 %v83, %v70
    %v85 = vadd.f32 %v84, %v72
    %v86 = vrot.slane %v85, 4
    %v87 = vadd.f32 %v85, %v86
    %v88 = vrot.slane %v87, 2
    %v89 = vadd.f32 %v87, %v88
    %v90 = vrot.slane %v89, 1
    %v91 = vadd.f32 %v89, %v90
    %v92 = vadd.f32 %v67, %v69
    %v93 = vadd.f32 %v92, %v71
    %v94 = vadd.f32 %v93, %v73
    %v95 = vrot.slane %v94, 4
    %v96 = vadd.f32 %v94, %v95
    %v97 = vrot.slane %v96, 2
    %v98 = vadd.f32 %v96, %v97
    %v99 = vrot.slane %v98, 1
    %v100 = vadd.f32 %v98, %v99
    %v101 = vadd.f32 %v74, %v76
    %v102 = vadd.f32 %v101, %v78
    %v103 = vadd.f32 %v102, %v80
    %v104 = vrot.slane %v103, 4
    %v105 = vadd.f32 %v103, %v104
    %v106 = vrot.slane %v105, 2
    %v107 = vadd.f32 %v105, %v106
    %v108 = vrot.slane %v107, 1
    %v109 = vadd.f32 %v107, %v108
    %v110 = vadd.f32 %v75, %v77
    %v111 = vadd.f32 %v110, %v79
    %v112 = vadd.f32 %v111, %v81
    %v113 = vrot.slane %v112, 4
    %v114 = vadd.f32 %v112, %v113
    %v115 = vrot.slane %v114, 2
    %v116 = vadd.f32 %v114, %v115
    %v117 = vrot.slane %v116, 1
    %v118 = vadd.f32 %v116, %v117
    %v123 = vrot.slane %v100, 6
    %v124 = vrot.slane %v118, 6
    %vm125 = vcmask 1041408
    %v126 = vsel %vm125, %v91, %v123
    %v127 = vsel %vm125, %v109, %v124
    %vm128 = vcmask 1044484
    %v129 = vsel %vm128, %v126, %v126
    %vm130 = vcmask 1046534
    %v131 = vsel %vm130, %v126, %v129
    %v132 = vrot.slane %v127, 7
    %vm133 = vcmask 1041409
    %v134 = vsel %vm133, %v132, %v131
    %vm135 = vcmask 1043459
    %v136 = vsel %vm135, %v132, %v134
    %vm137 = vcmask 1045509
    %v138 = vsel %vm137, %v132, %v136
    %vm139 = vcmask 1047559
    %v140 = vsel %vm139, %v132, %v138
    %v142 = vadd.f32 %v82, %v140
    %143 = vst [vmem:[#allocation2] sm:$0xf] %v142
    %v144 = vld [vmem:[#allocation3] sm:$0xf]
    %v145 = vmax.f32 %v66, %v68
    %v146 = vmax.f32 %v145, %v70
    %v147 = vmax.f32 %v146, %v72
    %v148 = vrot.slane %v147, 4
    %v149 = vmax.f32 %v147, %v148
    %v150 = vrot.slane %v149, 2
    %v151 = vmax.f32 %v149, %v150
    %v152 = vrot.slane %v151, 1
    %v153 = vmax.f32 %v151, %v152
    %v154 = vmax.f32 %v67, %v69
    %v155 = vmax.f32 %v154, %v71
    %v156 = vmax.f32 %v155, %v73
    %v157 = vrot.slane %v156, 4
    %v158 = vmax.f32 %v156, %v157
    %v159 = vrot.slane %v158, 2
    %v160 = vmax.f32 %v158, %v159
    %v161 = vrot.slane %v160, 1
    %v162 = vmax.f32 %v160, %v161
    %v163 = vmax.f32 %v74, %v76
    %v164 = vmax.f32 %v163, %v78
    %v165 = vmax.f32 %v164, %v80
    %v166 = vrot.slane %v165, 4
    %v167 = vmax.f32 %v165, %v166
    %v168 = vrot.slane %v167, 2
    %v169 = vmax.f32 %v167, %v168
    %v170 = vrot.slane %v169, 1
    %v171 = vmax.f32 %v169, %v170
    %v172 = vmax.f32 %v75, %v77
    %v173 = vmax.f32 %v172, %v79
    %v174 = vmax.f32 %v173, %v81
    %v175 = vrot.slane %v174, 4
    %v176 = vmax.f32 %v174, %v175
    %v177 = vrot.slane %v176, 2
    %v178 = vmax.f32 %v176, %v177
    %v179 = vrot.slane %v178, 1
    %v180 = vmax.f32 %v178, %v179
    %v185 = vrot.slane %v162, 6
    %v186 = vrot.slane %v180, 6
    %v187 = vsel %vm125, %v153, %v185
    %v188 = vsel %vm125, %v171, %v186
    %v189 = vsel %vm128, %v187, %v187
    %v190 = vsel %vm130, %v187, %v189
    %v191 = vrot.slane %v188, 7
    %v192 = vsel %vm133, %v191, %v190
    %v193 = vsel %vm135, %v191, %v192
    %v194 = vsel %vm137, %v191, %v193
    %v195 = vsel %vm139, %v191, %v194
    %v197 = vmax.f32 %v144, %v195
    %198 = vst [vmem:[#allocation3] sm:$0xf] %v197
    // Predicated region
    $region30: #{tpu_custom_call.1} parent=1 // pred_check
      %p199 = pneg %p60
    $region31: #{tpu_custom_call.1} parent=1 // pred_check_branch
      %201 = sbr.rel (%p199) target = $region33
    $region32: #{tpu_custom_call.1} parent=1 // pred_region
      %202 = vst [vmem:[#allocation4] sm:$0xff] 0.0
      %203 = vst [vmem:[#allocation4 + $0x8] sm:$0xff] 0.0
      %v204 = vld [vmem:[#allocation2] sm:$0xf]
      %v205 = vmul.f32 %v204, 0.03125
      %206 = vst [vmem:[#allocation4 + $0x2] sm:$0xf] %v205
      %v207 = vld [vmem:[#allocation3] sm:$0xf]
      %s208 = scalar_lea.vmem [#allocation4], 8
      %209 = vst [vmem:[%s208 + $0x2] sm:$0xf] %v207
      %v210 = vld [vmem:[#allocation9] ss:$8 sm:$0x3]
      %v211 = vld [vmem:[#allocation4] sm:$0x3f]
      %v212 = vld [vmem:[%s208] sm:$0x3f]
      %s213 = sld [smem:[#allocation5]]
      %v214 = vstv %s213
      %v215 = vmul.f32 %v214, %v211
      %s216 = sld [smem:[#allocation5 + $0x31]]
      %v217 = vstv %s216
      %v218 = vmul.f32 %v217, %v212
      %v219 = vadd.f32 %v215, %v218
      %v221 = vperm.slane %v210, 0
      %v222 = vperm.slane %v210, 1
      %226 = vst [vmem:[#allocation1] ss:$4 sm:$0xff] %v219
      %v227 = vld.sshfl [vmem:[#allocation1] sm:$0xff pattern:$0x73625140]
      %v228 = vld.sshfl [vmem:[#allocation1 + $0x8] sm:$0xff pattern:$0x73625140]
      %v229 = vld.sshfl [vmem:[#allocation1 + $0x10] sm:$0xff pattern:$0x73625140]
      %230 = vrot.lane.b32.xlu0 %v227, 51
      %v231 = vpop.permute.xlu0 %230
      %232 = vrot.lane.b32.xlu0 %v228, 51
      %v233 = vpop.permute.xlu0 %232
      %234 = vrot.lane.b32.xlu0 %v229, 51
      %v235 = vpop.permute.xlu0 %234
      %vm236 = vcmask 416768
      %v237 = vsel %vm236, %v231, %v233
      %v238 = vsel %vm236, %v233, %v235
      %v241 = vmul.f32 %v221, %v237
      %v242 = vmul.f32 %v222, %v238
      %v243 = vadd.f32 %v241, 0.0
      %v244 = vadd.f32 %v242, 0.0
      %s245 = scalar_lea.vmem [#allocation9], 1
      %v246 = vld [vmem:[%s245] ss:$8 sm:$0x3]
      %v247 = vld [vmem:[#allocation4] sm:$0x3f]
      %v248 = vld [vmem:[%s208] sm:$0x3f]
      %s249 = sld [smem:[#allocation5 + $0x1]]
      %v250 = vstv %s249
      %v251 = vmul.f32 %v250, %v247
      %s252 = sld [smem:[#allocation5 + $0x32]]
      %v253 = vstv %s252
      %v254 = vmul.f32 %v253, %v248
      %v255 = vadd.f32 %v251, %v254
      %v257 = vperm.slane %v246, 0
      %v258 = vperm.slane %v246, 1
      %262 = vst [vmem:[#allocation1] ss:$4 sm:$0xff] %v255
      %v263 = vld.sshfl [vmem:[#allocation1] sm:$0xff pattern:$0x73625140]
      %v264 = vld.sshfl [vmem:[#allocation1 + $0x8] sm:$0xff pattern:$0x73625140]
      %v265 = vld.sshfl [vmem:[#allocation1 + $0x10] sm:$0xff pattern:$0x73625140]
      %266 = vrot.lane.b32.xlu0 %v263, 50
      %v267 = vpop.permute.xlu0 %266
      %268 = vrot.lane.b32.xlu0 %v264, 50
      %v269 = vpop.permute.xlu0 %268
      %270 = vrot.lane.b32.xlu0 %v265, 50
      %v271 = vpop.permute.xlu0 %270
      %vm272 = vcmask 408576
      %v273 = vsel %vm272, %v267, %v269
      %v274 = vsel %vm272, %v269, %v271
      %v277 = vmul.f32 %v257, %v273
      %v278 = vmul.f32 %v258, %v274
      %v279 = vadd.f32 %v243, %v277
      %v280 = vadd.f32 %v244, %v278
      %s281 = scalar_lea.vmem [#allocation9], 2
      %v282 = vld [vmem:[%s281] ss:$8 sm:$0x3]
      %v283 = vld [vmem:[#allocation4] sm:$0x3f]
      %v284 = vld [vmem:[%s208] sm:$0x3f]
      %s285 = sld [smem:[#allocation5 + $0x2]]
      %v286 = vstv %s285
      %v287 = vmul.f32 %v286, %v283
      %s288 = sld [smem:[#allocation5 + $0x33]]
      %v289 = vstv %s288
      %v290 = vmul.f32 %v289, %v284
      %v291 = vadd.f32 %v287, %v290
      %v293 = vperm.slane %v282, 0
      %v294 = vperm.slane %v282, 1
      %298 = vst [vmem:[#allocation1] ss:$4 sm:$0xff] %v291
      %v299 = vld.sshfl [vmem:[#allocation1] sm:$0xff pattern:$0x73625140]
      %v300 = vld.sshfl [vmem:[#allocation1 + $0x8] sm:$0xff pattern:$0x73625140]
      %v301 = vld.sshfl [vmem:[#allocation1 + $0x10] sm:$0xff pattern:$0x73625140]
      %302 = vrot.lane.b32.xlu0 %v299, 49
      %v303 = vpop.permute.xlu0 %302
      %304 = vrot.lane.b32.xlu0 %v300, 49
      %v305 = vpop.permute.xlu0 %304
      %306 = vrot.lane.b32.xlu0 %v301, 49
      %v307 = vpop.permute.xlu0 %306
      %vm308 = vcmask 400384
      %v309 = vsel %vm308, %v303, %v305
      %v310 = vsel %vm308, %v305, %v307
      %v313 = vmul.f32 %v293, %v309
      %v314 = vmul.f32 %v294, %v310
      %v315 = vadd.f32 %v279, %v313
      %v316 = vadd.f32 %v280, %v314
      %s317 = scalar_lea.vmem [#allocation9], 3
      %v318 = vld [vmem:[%s317] ss:$8 sm:$0x3]
      %v319 = vld [vmem:[#allocation4] sm:$0x3f]
      %v320 = vld [vmem:[%s208] sm:$0x3f]
      %s321 = sld [smem:[#allocation5 + $0x3]]
      %v322 = vstv %s321
      %v323 = vmul.f32 %v322, %v319
      %s324 = sld [smem:[#allocation5 + $0x34]]
      %v325 = vstv %s324
      %v326 = vmul.f32 %v325, %v320
      %v327 = vadd.f32 %v323, %v326
      %v329 = vperm.slane %v318, 0
      %v330 = vperm.slane %v318, 1
      %334 = vst [vmem:[#allocation1] ss:$4 sm:$0xff] %v327
      %v335 = vld.sshfl [vmem:[#allocation1] sm:$0xff pattern:$0x73625140]
      %v336 = vld.sshfl [vmem:[#allocation1 + $0x8] sm:$0xff pattern:$0x73625140]
      %v337 = vld.sshfl [vmem:[#allocation1 + $0x10] sm:$0xff pattern:$0x73625140]
      %338 = vrot.lane.b32.xlu0 %v335, 48
      %v339 = vpop.permute.xlu0 %338
      %340 = vrot.lane.b32.xlu0 %v336, 48
      %v341 = vpop.permute.xlu0 %340
      %342 = vrot.lane.b32.xlu0 %v337, 48
      %v343 = vpop.permute.xlu0 %342
      %vm344 = vcmask 392192
      %v345 = vsel %vm344, %v339, %v341
      %v346 = vsel %vm344, %v341, %v343
      %v349 = vmul.f32 %v329, %v345
      %v350 = vmul.f32 %v330, %v346
      %v351 = vadd.f32 %v315, %v349
      %v352 = vadd.f32 %v316, %v350
      %s353 = scalar_lea.vmem [#allocation9], 4
      %v354 = vld [vmem:[%s353] ss:$8 sm:$0x3]
      %v355 = vld [vmem:[#allocation4] sm:$0x3f]
      %v356 = vld [vmem:[%s208] sm:$0x3f]
      %s357 = sld [smem:[#allocation5 + $0x4]]
      %v358 = vstv %s357
      %v359 = vmul.f32 %v358, %v355
      %s360 = sld [smem:[#allocation5 + $0x35]]
      %v361 = vstv %s360
      %v362 = vmul.f32 %v361, %v356
      %v363 = vadd.f32 %v359, %v362
      %v365 = vperm.slane %v354, 0
      %v366 = vperm.slane %v354, 1
      %370 = vst [vmem:[#allocation1] ss:$4 sm:$0xff] %v363
      %v371 = vld.sshfl [vmem:[#allocation1] sm:$0xff pattern:$0x73625140]
      %v372 = vld.sshfl [vmem:[#allocation1 + $0x8] sm:$0xff pattern:$0x73625140]
      %v373 = vld.sshfl [vmem:[#allocation1 + $0x10] sm:$0xff pattern:$0x73625140]
      %374 = vrot.lane.b32.xlu0 %v371, 47
      %v375 = vpop.permute.xlu0 %374
      %376 = vrot.lane.b32.xlu0 %v372, 47
      %v377 = vpop.permute.xlu0 %376
      %378 = vrot.lane.b32.xlu0 %v373, 47
      %v379 = vpop.permute.xlu0 %378
      %vm380 = vcmask 384000
      %v381 = vsel %vm380, %v375, %v377
      %v382 = vsel %vm380, %v377, %v379
      %v385 = vmul.f32 %v365, %v381
      %v386 = vmul.f32 %v366, %v382
      %v387 = vadd.f32 %v351, %v385
      %v388 = vadd.f32 %v352, %v386
      %s389 = scalar_lea.vmem [#allocation9], 5
      %v390 = vld [vmem:[%s389] ss:$8 sm:$0x3]
      %v391 = vld [vmem:[#allocation4] sm:$0x3f]
      %v392 = vld [vmem:[%s208] sm:$0x3f]
      %s393 = sld [smem:[#allocation5 + $0x5]]
      %v394 = vstv %s393
      %v395 = vmul.f32 %v394, %v391
      %s396 = sld [smem:[#allocation5 + $0x36]]
      %v397 = vstv %s396
      %v398 = vmul.f32 %v397, %v392
      %v399 = vadd.f32 %v395, %v398
      %v401 = vperm.slane %v390, 0
      %v402 = vperm.slane %v390, 1
      %406 = vst [vmem:[#allocation1] ss:$4 sm:$0xff] %v399
      %v407 = vld.sshfl [vmem:[#allocation1] sm:$0xff pattern:$0x73625140]
      %v408 = vld.sshfl [vmem:[#allocation1 + $0x8] sm:$0xff pattern:$0x73625140]
      %v409 = vld.sshfl [vmem:[#allocation1 + $0x10] sm:$0xff pattern:$0x73625140]
      %410 = vrot.lane.b32.xlu0 %v407, 46
      %v411 = vpop.permute.xlu0 %410
      %412 = vrot.lane.b32.xlu0 %v408, 46
      %v413 = vpop.permute.xlu0 %412
      %414 = vrot.lane.b32.xlu0 %v409, 46
      %v415 = vpop.permute.xlu0 %414
      %vm416 = vcmask 375808
      %v417 = vsel %vm416, %v411, %v413
      %v418 = vsel %vm416, %v413, %v415
      %v421 = vmul.f32 %v401, %v417
      %v422 = vmul.f32 %v402, %v418
      %v423 = vadd.f32 %v387, %v421
      %v424 = vadd.f32 %v388, %v422
      %s425 = scalar_lea.vmem [#allocation9], 6
      %v426 = vld [vmem:[%s425] ss:$8 sm:$0x3]
      %v427 = vld [vmem:[#allocation4] sm:$0x3f]
      %v428 = vld [vmem:[%s208] sm:$0x3f]
      %s429 = sld [smem:[#allocation5 + $0x6]]
      %v430 = vstv %s429
      %v431 = vmul.f32 %v430, %v427
      %s432 = sld [smem:[#allocation5 + $0x37]]
      %v433 = vstv %s432
      %v434 = vmul.f32 %v433, %v428
      %v435 = vadd.f32 %v431, %v434
      %v437 = vperm.slane %v426, 0
      %v438 = vperm.slane %v426, 1
      %442 = vst [vmem:[#allocation1] ss:$4 sm:$0xff] %v435
      %v443 = vld.sshfl [vmem:[#allocation1] sm:$0xff pattern:$0x73625140]
      %v444 = vld.sshfl [vmem:[#allocation1 + $0x8] sm:$0xff pattern:$0x73625140]
      %v445 = vld.sshfl [vmem:[#allocation1 + $0x10] sm:$0xff pattern:$0x73625140]
      %446 = vrot.lane.b32.xlu0 %v443, 45
      %v447 = vpop.permute.xlu0 %446
      %448 = vrot.lane.b32.xlu0 %v444, 45
      %v449 = vpop.permute.xlu0 %448
      %450 = vrot.lane.b32.xlu0 %v445, 45
      %v451 = vpop.permute.xlu0 %450
      %vm452 = vcmask 367616
      %v453 = vsel %vm452, %v447, %v449
      %v454 = vsel %vm452, %v449, %v451
      %v457 = vmul.f32 %v437, %v453
      %v458 = vmul.f32 %v438, %v454
      %v459 = vadd.f32 %v423, %v457
      %v460 = vadd.f32 %v424, %v458
      %s461 = scalar_lea.vmem [#allocation9], 7
      %v462 = vld [vmem:[%s461] ss:$8 sm:$0x3]
      %v463 = vld [vmem:[#allocation4] sm:$0x3f]
      %v464 = vld [vmem:[%s208] sm:$0x3f]
      %s465 = sld [smem:[#allocation5 + $0x7]]
      %v466 = vstv %s465
      %v467 = vmul.f32 %v466, %v463
      %s468 = sld [smem:[#allocation5 + $0x38]]
      %v469 = vstv %s468
      %v470 = vmul.f32 %v469, %v464
      %v471 = vadd.f32 %v467, %v470
      %v473 = vperm.slane %v462, 0
      %v474 = vperm.slane %v462, 1
      %478 = vst [vmem:[#allocation1] ss:$4 sm:$0xff] %v471
      %v479 = vld.sshfl [vmem:[#allocation1] sm:$0xff pattern:$0x73625140]
      %v480 = vld.sshfl [vmem:[#allocation1 + $0x8] sm:$0xff pattern:$0x73625140]
      %v481 = vld.sshfl [vmem:[#allocation1 + $0x10] sm:$0xff pattern:$0x73625140]
      %482 = vrot.lane.b32.xlu0 %v479, 35
      %v483 = vpop.permute.xlu0 %482
      %484 = vrot.lane.b32.xlu0 %v480, 35
      %v485 = vpop.permute.xlu0 %484
      %486 = vrot.lane.b32.xlu0 %v481, 35
      %v487 = vpop.permute.xlu0 %486
      %vm488 = vcmask 285696
      %v489 = vsel %vm488, %v483, %v485
      %v490 = vsel %vm488, %v485, %v487
      %v493 = vmul.f32 %v473, %v489
      %v494 = vmul.f32 %v474, %v490
      %v495 = vadd.f32 %v459, %v493
      %v496 = vadd.f32 %v460, %v494
      %s497 = scalar_lea.vmem [#allocation9], 16
      %v498 = vld [vmem:[%s497] ss:$8 sm:$0x3]
      %v499 = vld [vmem:[#allocation4] sm:$0x3f]
      %v500 = vld [vmem:[%s208] sm:$0x3f]
      %s501 = sld [smem:[#allocation5 + $0x8]]
      %v502 = vstv %s501
      %v503 = vmul.f32 %v502, %v499
      %s504 = sld [smem:[#allocation5 + $0x39]]
      %v505 = vstv %s504
      %v506 = vmul.f32 %v505, %v500
      %v507 = vadd.f32 %v503, %v506
      %v509 = vperm.slane %v498, 0
      %v510 = vperm.slane %v498, 1
      %514 = vst [vmem:[#allocation1] ss:$4 sm:$0xff] %v507
      %v515 = vld.sshfl [vmem:[#allocation1] sm:$0xff pattern:$0x73625140]
      %v516 = vld.sshfl [vmem:[#allocation1 + $0x8] sm:$0xff pattern:$0x73625140]
      %v517 = vld.sshfl [vmem:[#allocation1 + $0x10] sm:$0xff pattern:$0x73625140]
      %518 = vrot.lane.b32.xlu0 %v515, 34
      %v519 = vpop.permute.xlu0 %518
      %520 = vrot.lane.b32.xlu0 %v516, 34
      %v521 = vpop.permute.xlu0 %520
      %522 = vrot.lane.b32.xlu0 %v517, 34
      %v523 = vpop.permute.xlu0 %522
      %vm524 = vcmask 277504
      %v525 = vsel %vm524, %v519, %v521
      %v526 = vsel %vm524, %v521, %v523
      %v529 = vmul.f32 %v509, %v525
      %v530 = vmul.f32 %v510, %v526
      %v531 = vadd.f32 %v495, %v529
      %v532 = vadd.f32 %v496, %v530
      %s533 = scalar_lea.vmem [#allocation9], 17
      %v534 = vld [vmem:[%s533] ss:$8 sm:$0x3]
      %v535 = vld [vmem:[#allocation4] sm:$0x3f]
      %v536 = vld [vmem:[%s208] sm:$0x3f]
      %s537 = sld [smem:[#allocation5 + $0x9]]
      %v538 = vstv %s537
      %v539 = vmul.f32 %v538, %v535
      %s540 = sld [smem:[#allocation5 + $0x3a]]
      %v541 = vstv %s540
      %v542 = vmul.f32 %v541, %v536
      %v543 = vadd.f32 %v539, %v542
      %v545 = vperm.slane %v534, 0
      %v546 = vperm.slane %v534, 1
      %550 = vst [vmem:[#allocation1] ss:$4 sm:$0xff] %v543
      %v551 = vld.sshfl [vmem:[#allocation1] sm:$0xff pattern:$0x73625140]
      %v552 = vld.sshfl [vmem:[#allocation1 + $0x8] sm:$0xff pattern:$0x73625140]
      %v553 = vld.sshfl [vmem:[#allocation1 + $0x10] sm:$0xff pattern:$0x73625140]
      %554 = vrot.lane.b32.xlu0 %v551, 33
      %v555 = vpop.permute.xlu0 %554
      %556 = vrot.lane.b32.xlu0 %v552, 33
      %v557 = vpop.permute.xlu0 %556
      %558 = vrot.lane.b32.xlu0 %v553, 33
      %v559 = vpop.permute.xlu0 %558
      %vm560 = vcmask 269312
      %v561 = vsel %vm560, %v555, %v557
      %v562 = vsel %vm560, %v557, %v559
      %v565 = vmul.f32 %v545, %v561
      %v566 = vmul.f32 %v546, %v562
      %v567 = vadd.f32 %v531, %v565
      %v568 = vadd.f32 %v532, %v566
      %s569 = scalar_lea.vmem [#allocation9], 18
      %v570 = vld [vmem:[%s569] ss:$8 sm:$0x3]
      %v571 = vld [vmem:[#allocation4] sm:$0x3f]
      %v572 = vld [vmem:[%s208] sm:$0x3f]
      %s573 = sld [smem:[#allocation5 + $0xa]]
      %v574 = vstv %s573
      %v575 = vmul.f32 %v574, %v571
      %s576 = sld [smem:[#allocation5 + $0x3b]]
      %v577 = vstv %s576
      %v578 = vmul.f32 %v577, %v572
      %v579 = vadd.f32 %v575, %v578
      %v581 = vperm.slane %v570, 0
      %v582 = vperm.slane %v570, 1
      %586 = vst [vmem:[#allocation1] ss:$4 sm:$0xff] %v579
      %v587 = vld.sshfl [vmem:[#allocation1] sm:$0xff pattern:$0x73625140]
      %v588 = vld.sshfl [vmem:[#allocation1 + $0x8] sm:$0xff pattern:$0x73625140]
      %v589 = vld.sshfl [vmem:[#allocation1 + $0x10] sm:$0xff pattern:$0x73625140]
      %590 = vrot.lane.b32.xlu0 %v587, 32
      %v591 = vpop.permute.xlu0 %590
      %592 = vrot.lane.b32.xlu0 %v588, 32
      %v593 = vpop.permute.xlu0 %592
      %594 = vrot.lane.b32.xlu0 %v589, 32
      %v595 = vpop.permute.xlu0 %594
      %vm596 = vcmask 261120
      %v597 = vsel %vm596, %v591, %v593
      %v598 = vsel %vm596, %v593, %v595
      %v601 = vmul.f32 %v581, %v597
      %v602 = vmul.f32 %v582, %v598
      %v603 = vadd.f32 %v567, %v601
      %v604 = vadd.f32 %v568, %v602
      %s605 = scalar_lea.vmem [#allocation9], 19
      %v606 = vld [vmem:[%s605] ss:$8 sm:$0x3]
      %v607 = vld [vmem:[#allocation4] sm:$0x3f]
      %v608 = vld [vmem:[%s208] sm:$0x3f]
      %s609 = sld [smem:[#allocation5 + $0xb]]
      %v610 = vstv %s609
      %v611 = vmul.f32 %v610, %v607
      %s612 = sld [smem:[#allocation5 + $0x3c]]
      %v613 = vstv %s612
      %v614 = vmul.f32 %v613, %v608
      %v615 = vadd.f32 %v611, %v614
      %v617 = vperm.slane %v606, 0
      %v618 = vperm.slane %v606, 1
      %622 = vst [vmem:[#allocation1] ss:$4 sm:$0xff] %v615
      %v623 = vld.sshfl [vmem:[#allocation1] sm:$0xff pattern:$0x73625140]
      %v624 = vld.sshfl [vmem:[#allocation1 + $0x8] sm:$0xff pattern:$0x73625140]
      %v625 = vld.sshfl [vmem:[#allocation1 + $0x10] sm:$0xff pattern:$0x73625140]
      %626 = vrot.lane.b32.xlu0 %v623, 31
      %v627 = vpop.permute.xlu0 %626
      %628 = vrot.lane.b32.xlu0 %v624, 31
      %v629 = vpop.permute.xlu0 %628
      %630 = vrot.lane.b32.xlu0 %v625, 31
      %v631 = vpop.permute.xlu0 %630
      %vm632 = vcmask 252928
      %v633 = vsel %vm632, %v627, %v629
      %v634 = vsel %vm632, %v629, %v631
      %v637 = vmul.f32 %v617, %v633
      %v638 = vmul.f32 %v618, %v634
      %v639 = vadd.f32 %v603, %v637
      %v640 = vadd.f32 %v604, %v638
      %s641 = scalar_lea.vmem [#allocation9], 20
      %v642 = vld [vmem:[%s641] ss:$8 sm:$0x3]
      %v643 = vld [vmem:[#allocation4] sm:$0x3f]
      %v644 = vld [vmem:[%s208] sm:$0x3f]
      %s645 = sld [smem:[#allocation5 + $0xc]]
      %v646 = vstv %s645
      %v647 = vmul.f32 %v646, %v643
      %s648 = sld [smem:[#allocation5 + $0x3d]]
      %v649 = vstv %s648
      %v650 = vmul.f32 %v649, %v644
      %v651 = vadd.f32 %v647, %v650
      %v653 = vperm.slane %v642, 0
      %v654 = vperm.slane %v642, 1
      %658 = vst [vmem:[#allocation1] ss:$4 sm:$0xff] %v651
      %v659 = vld.sshfl [vmem:[#allocation1] sm:$0xff pattern:$0x73625140]
      %v660 = vld.sshfl [vmem:[#allocation1 + $0x8] sm:$0xff pattern:$0x73625140]
      %v661 = vld.sshfl [vmem:[#allocation1 + $0x10] sm:$0xff pattern:$0x73625140]
      %662 = vrot.lane.b32.xlu0 %v659, 30
      %v663 = vpop.permute.xlu0 %662
      %664 = vrot.lane.b32.xlu0 %v660, 30
      %v665 = vpop.permute.xlu0 %664
      %666 = vrot.lane.b32.xlu0 %v661, 30
      %v667 = vpop.permute.xlu0 %666
      %vm668 = vcmask 244736
      %v669 = vsel %vm668, %v663, %v665
      %v670 = vsel %vm668, %v665, %v667
      %v673 = vmul.f32 %v653, %v669
      %v674 = vmul.f32 %v654, %v670
      %v675 = vadd.f32 %v639, %v673
      %v676 = vadd.f32 %v640, %v674
      %s677 = scalar_lea.vmem [#allocation9], 21
      %v678 = vld [vmem:[%s677] ss:$8 sm:$0x3]
      %v679 = vld [vmem:[#allocation4] sm:$0x3f]
      %v680 = vld [vmem:[%s208] sm:$0x3f]
      %s681 = sld [smem:[#allocation5 + $0xd]]
      %v682 = vstv %s681
      %v683 = vmul.f32 %v682, %v679
      %s684 = sld [smem:[#allocation5 + $0x3e]]
      %v685 = vstv %s684
      %v686 = vmul.f32 %v685, %v680
      %v687 = vadd.f32 %v683, %v686
      %v689 = vperm.slane %v678, 0
      %v690 = vperm.slane %v678, 1
      %694 = vst [vmem:[#allocation1] ss:$4 sm:$0xff] %v687
      %v695 = vld.sshfl [vmem:[#allocation1] sm:$0xff pattern:$0x73625140]
      %v696 = vld.sshfl [vmem:[#allocation1 + $0x8] sm:$0xff pattern:$0x73625140]
      %v697 = vld.sshfl [vmem:[#allocation1 + $0x10] sm:$0xff pattern:$0x73625140]
      %698 = vrot.lane.b32.xlu0 %v695, 29
      %v699 = vpop.permute.xlu0 %698
      %700 = vrot.lane.b32.xlu0 %v696, 29
      %v701 = vpop.permute.xlu0 %700
      %702 = vrot.lane.b32.xlu0 %v697, 29
      %v703 = vpop.permute.xlu0 %702
      %vm704 = vcmask 236544
      %v705 = vsel %vm704, %v699, %v701
      %v706 = vsel %vm704, %v701, %v703
      %v709 = vmul.f32 %v689, %v705
      %v710 = vmul.f32 %v690, %v706
      %v711 = vadd.f32 %v675, %v709
      %v712 = vadd.f32 %v676, %v710
      %s713 = scalar_lea.vmem [#allocation9], 22
      %v714 = vld [vmem:[%s713] ss:$8 sm:$0x3]
      %v715 = vld [vmem:[#allocation4] sm:$0x3f]
      %v716 = vld [vmem:[%s208] sm:$0x3f]
      %s717 = sld [smem:[#allocation5 + $0xe]]
      %v718 = vstv %s717
      %v719 = vmul.f32 %v718, %v715
      %s720 = sld [smem:[#allocation5 + $0x3f]]
      %v721 = vstv %s720
      %v722 = vmul.f32 %v721, %v716
      %v723 = vadd.f32 %v719, %v722
      %v725 = vperm.slane %v714, 0
      %v726 = vperm.slane %v714, 1
      %730 = vst [vmem:[#allocation1] ss:$4 sm:$0xff] %v723
      %v731 = vld.sshfl [vmem:[#allocation1] sm:$0xff pattern:$0x73625140]
      %v732 = vld.sshfl [vmem:[#allocation1 + $0x8] sm:$0xff pattern:$0x73625140]
      %v733 = vld.sshfl [vmem:[#allocation1 + $0x10] sm:$0xff pattern:$0x73625140]
      %734 = vrot.lane.b32.xlu0 %v731, 19
      %v735 = vpop.permute.xlu0 %734
      %736 = vrot.lane.b32.xlu0 %v732, 19
      %v737 = vpop.permute.xlu0 %736
      %738 = vrot.lane.b32.xlu0 %v733, 19
      %v739 = vpop.permute.xlu0 %738
      %vm740 = vcmask 154624
      %v741 = vsel %vm740, %v735, %v737
      %v742 = vsel %vm740, %v737, %v739
      %v745 = vmul.f32 %v725, %v741
      %v746 = vmul.f32 %v726, %v742
      %v747 = vadd.f32 %v711, %v745
      %v748 = vadd.f32 %v712, %v746
      %s749 = scalar_lea.vmem [#allocation9], 23
      %v750 = vld [vmem:[%s749] ss:$8 sm:$0x3]
      %v751 = vld [vmem:[#allocation4] sm:$0x3f]
      %v752 = vld [vmem:[%s208] sm:$0x3f]
      %s753 = sld [smem:[#allocation5 + $0xf]]
      %v754 = vstv %s753
      %v755 = vmul.f32 %v754, %v751
      %s756 = sld [smem:[#allocation5 + $0x40]]
      %v757 = vstv %s756
      %v758 = vmul.f32 %v757, %v752
      %v759 = vadd.f32 %v755, %v758
      %v761 = vperm.slane %v750, 0
      %v762 = vperm.slane %v750, 1
      %766 = vst [vmem:[#allocation1] ss:$4 sm:$0xff] %v759
      %v767 = vld.sshfl [vmem:[#allocation1] sm:$0xff pattern:$0x73625140]
      %v768 = vld.sshfl [vmem:[#allocation1 + $0x8] sm:$0xff pattern:$0x73625140]
      %v769 = vld.sshfl [vmem:[#allocation1 + $0x10] sm:$0xff pattern:$0x73625140]
      %770 = vrot.lane.b32.xlu0 %v767, 18
      %v771 = vpop.permute.xlu0 %770
      %772 = vrot.lane.b32.xlu0 %v768, 18
      %v773 = vpop.permute.xlu0 %772
      %774 = vrot.lane.b32.xlu0 %v769, 18
      %v775 = vpop.permute.xlu0 %774
      %vm776 = vcmask 146432
      %v777 = vsel %vm776, %v771, %v773
      %v778 = vsel %vm776, %v773, %v775
      %v781 = vmul.f32 %v761, %v777
      %v782 = vmul.f32 %v762, %v778
      %v783 = vadd.f32 %v747, %v781
      %v784 = vadd.f32 %v748, %v782
      %s785 = scalar_lea.vmem [#allocation9], 32
      %v786 = vld [vmem:[%s785] ss:$8 sm:$0x3]
      %v787 = vld [vmem:[#allocation4] sm:$0x3f]
      %v788 = vld [vmem:[%s208] sm:$0x3f]
      %s789 = sld [smem:[#allocation5 + $0x10]]
      %v790 = vstv %s789
      %v791 = vmul.f32 %v790, %v787
      %s792 = sld [smem:[#allocation5 + $0x41]]
      %v793 = vstv %s792
      %v794 = vmul.f32 %v793, %v788
      %v795 = vadd.f32 %v791, %v794
      %v797 = vperm.slane %v786, 0
      %v798 = vperm.slane %v786, 1
      %802 = vst [vmem:[#allocation1] ss:$4 sm:$0xff] %v795
      %v803 = vld.sshfl [vmem:[#allocation1] sm:$0xff pattern:$0x73625140]
      %v804 = vld.sshfl [vmem:[#allocation1 + $0x8] sm:$0xff pattern:$0x73625140]
      %v805 = vld.sshfl [vmem:[#allocation1 + $0x10] sm:$0xff pattern:$0x73625140]
      %806 = vrot.lane.b32.xlu0 %v803, 17
      %v807 = vpop.permute.xlu0 %806
      %808 = vrot.lane.b32.xlu0 %v804, 17
      %v809 = vpop.permute.xlu0 %808
      %810 = vrot.lane.b32.xlu0 %v805, 17
      %v811 = vpop.permute.xlu0 %810
      %vm812 = vcmask 138240
      %v813 = vsel %vm812, %v807, %v809
      %v814 = vsel %vm812, %v809, %v811
      %v817 = vmul.f32 %v797, %v813
      %v818 = vmul.f32 %v798, %v814
      %v819 = vadd.f32 %v783, %v817
      %v820 = vadd.f32 %v784, %v818
      %s821 = scalar_lea.vmem [#allocation9], 33
      %v822 = vld [vmem:[%s821] ss:$8 sm:$0x3]
      %v823 = vld [vmem:[#allocation4] sm:$0x3f]
      %v824 = vld [vmem:[%s208] sm:$0x3f]
      %s825 = sld [smem:[#allocation5 + $0x11]]
      %v826 = vstv %s825
      %v827 = vmul.f32 %v826, %v823
      %s828 = sld [smem:[#allocation5 + $0x42]]
      %v829 = vstv %s828
      %v830 = vmul.f32 %v829, %v824
      %v831 = vadd.f32 %v827, %v830
      %v833 = vperm.slane %v822, 0
      %v834 = vperm.slane %v822, 1
      %838 = vst [vmem:[#allocation1] ss:$4 sm:$0xff] %v831
      %v839 = vld.sshfl [vmem:[#allocation1] sm:$0xff pattern:$0x73625140]
      %v840 = vld.sshfl [vmem:[#allocation1 + $0x8] sm:$0xff pattern:$0x73625140]
      %v841 = vld.sshfl [vmem:[#allocation1 + $0x10] sm:$0xff pattern:$0x73625140]
      %842 = vrot.lane.b32.xlu0 %v839, 16
      %v843 = vpop.permute.xlu0 %842
      %844 = vrot.lane.b32.xlu0 %v840, 16
      %v845 = vpop.permute.xlu0 %844
      %846 = vrot.lane.b32.xlu0 %v841, 16
      %v847 = vpop.permute.xlu0 %846
      %vm848 = vcmask 130048
      %v849 = vsel %vm848, %v843, %v845
      %v850 = vsel %vm848, %v845, %v847
      %v853 = vmul.f32 %v833, %v849
      %v854 = vmul.f32 %v834, %v850
      %v855 = vadd.f32 %v819, %v853
      %v856 = vadd.f32 %v820, %v854
      %s857 = scalar_lea.vmem [#allocation9], 34
      %v858 = vld [vmem:[%s857] ss:$8 sm:$0x3]
      %v859 = vld [vmem:[#allocation4] sm:$0x3f]
      %v860 = vld [vmem:[%s208] sm:$0x3f]
      %s861 = sld [smem:[#allocation5 + $0x12]]
      %v862 = vstv %s861
      %v863 = vmul.f32 %v862, %v859
      %s864 = sld [smem:[#allocation5 + $0x43]]
      %v865 = vstv %s864
      %v866 = vmul.f32 %v865, %v860
      %v867 = vadd.f32 %v863, %v866
      %v869 = vperm.slane %v858, 0
      %v870 = vperm.slane %v858, 1
      %874 = vst [vmem:[#allocation1] ss:$4 sm:$0xff] %v867
      %v875 = vld.sshfl [vmem:[#allocation1] sm:$0xff pattern:$0x73625140]
      %v876 = vld.sshfl [vmem:[#allocation1 + $0x8] sm:$0xff pattern:$0x73625140]
      %v877 = vld.sshfl [vmem:[#allocation1 + $0x10] sm:$0xff pattern:$0x73625140]
      %878 = vrot.lane.b32.xlu0 %v875, 15
      %v879 = vpop.permute.xlu0 %878
      %880 = vrot.lane.b32.xlu0 %v876, 15
      %v881 = vpop.permute.xlu0 %880
      %882 = vrot.lane.b32.xlu0 %v877, 15
      %v883 = vpop.permute.xlu0 %882
      %vm884 = vcmask 121856
      %v885 = vsel %vm884, %v879, %v881
      %v886 = vsel %vm884, %v881, %v883
      %v889 = vmul.f32 %v869, %v885
      %v890 = vmul.f32 %v870, %v886
      %v891 = vadd.f32 %v855, %v889
      %v892 = vadd.f32 %v856, %v890
      %s893 = scalar_lea.vmem [#allocation9], 35
      %v894 = vld [vmem:[%s893] ss:$8 sm:$0x3]
      %v895 = vld [vmem:[#allocation4] sm:$0x3f]
      %v896 = vld [vmem:[%s208] sm:$0x3f]
      %s897 = sld [smem:[#allocation5 + $0x13]]
      %v898 = vstv %s897
      %v899 = vmul.f32 %v898, %v895
      %s900 = sld [smem:[#allocation5 + $0x44]]
      %v901 = vstv %s900
      %v902 = vmul.f32 %v901, %v896
      %v903 = vadd.f32 %v899, %v902
      %v905 = vperm.slane %v894, 0
      %v906 = vperm.slane %v894, 1
      %910 = vst [vmem:[#allocation1] ss:$4 sm:$0xff] %v903
      %v911 = vld.sshfl [vmem:[#allocation1] sm:$0xff pattern:$0x73625140]
      %v912 = vld.sshfl [vmem:[#allocation1 + $0x8] sm:$0xff pattern:$0x73625140]
      %v913 = vld.sshfl [vmem:[#allocation1 + $0x10] sm:$0xff pattern:$0x73625140]
      %914 = vrot.lane.b32.xlu0 %v911, 14
      %v915 = vpop.permute.xlu0 %914
      %916 = vrot.lane.b32.xlu0 %v912, 14
      %v917 = vpop.permute.xlu0 %916
      %918 = vrot.lane.b32.xlu0 %v913, 14
      %v919 = vpop.permute.xlu0 %918
      %vm920 = vcmask 113664
      %v921 = vsel %vm920, %v915, %v917
      %v922 = vsel %vm920, %v917, %v919
      %v925 = vmul.f32 %v905, %v921
      %v926 = vmul.f32 %v906, %v922
      %v927 = vadd.f32 %v891, %v925
      %v928 = vadd.f32 %v892, %v926
      %s929 = scalar_lea.vmem [#allocation9], 36
      %v930 = vld [vmem:[%s929] ss:$8 sm:$0x3]
      %v931 = vld [vmem:[#allocation4] sm:$0x3f]
      %v932 = vld [vmem:[%s208] sm:$0x3f]
      %s933 = sld [smem:[#allocation5 + $0x14]]
      %v934 = vstv %s933
      %v935 = vmul.f32 %v934, %v931
      %s936 = sld [smem:[#allocation5 + $0x45]]
      %v937 = vstv %s936
      %v938 = vmul.f32 %v937, %v932
      %v939 = vadd.f32 %v935, %v938
      %v941 = vperm.slane %v930, 0
      %v942 = vperm.slane %v930, 1
      %946 = vst [vmem:[#allocation1] ss:$4 sm:$0xff] %v939
      %v947 = vld.sshfl [vmem:[#allocation1] sm:$0xff pattern:$0x73625140]
      %v948 = vld.sshfl [vmem:[#allocation1 + $0x8] sm:$0xff pattern:$0x73625140]
      %v949 = vld.sshfl [vmem:[#allocation1 + $0x10] sm:$0xff pattern:$0x73625140]
      %950 = vrot.lane.b32.xlu0 %v947, 13
      %v951 = vpop.permute.xlu0 %950
      %952 = vrot.lane.b32.xlu0 %v948, 13
      %v953 = vpop.permute.xlu0 %952
      %954 = vrot.lane.b32.xlu0 %v949, 13
      %v955 = vpop.permute.xlu0 %954
      %vm956 = vcmask 105472
      %v957 = vsel %vm956, %v951, %v953
      %v958 = vsel %vm956, %v953, %v955
      %v961 = vmul.f32 %v941, %v957
      %v962 = vmul.f32 %v942, %v958
      %v963 = vadd.f32 %v927, %v961
      %v964 = vadd.f32 %v928, %v962
      %s965 = scalar_lea.vmem [#allocation9], 37
      %v966 = vld [vmem:[%s965] ss:$8 sm:$0x3]
      %v967 = vld [vmem:[#allocation4] sm:$0x3f]
      %v968 = vld [vmem:[%s208] sm:$0x3f]
      %s969 = sld [smem:[#allocation5 + $0x15]]
      %v970 = vstv %s969
      %v971 = vmul.f32 %v970, %v967
      %s972 = sld [smem:[#allocation5 + $0x46]]
      %v973 = vstv %s972
      %v974 = vmul.f32 %v973, %v968
      %v975 = vadd.f32 %v971, %v974
      %v977 = vperm.slane %v966, 0
      %v978 = vperm.slane %v966, 1
      %982 = vst [vmem:[#allocation1] ss:$4 sm:$0xff] %v975
      %v983 = vld.sshfl [vmem:[#allocation1] sm:$0xff pattern:$0x73625140]
      %v984 = vld.sshfl [vmem:[#allocation1 + $0x8] sm:$0xff pattern:$0x73625140]
      %v985 = vld.sshfl [vmem:[#allocation1 + $0x10] sm:$0xff pattern:$0x73625140]
      %986 = vrot.lane.b32.xlu0 %v983, 3
      %v987 = vpop.permute.xlu0 %986
      %988 = vrot.lane.b32.xlu0 %v984, 3
      %v989 = vpop.permute.xlu0 %988
      %990 = vrot.lane.b32.xlu0 %v985, 3
      %v991 = vpop.permute.xlu0 %990
      %vm992 = vcmask 23552
      %v993 = vsel %vm992, %v987, %v989
      %v994 = vsel %vm992, %v989, %v991
      %v997 = vmul.f32 %v977, %v993
      %v998 = vmul.f32 %v978, %v994
      %v999 = vadd.f32 %v963, %v997
      %v1000 = vadd.f32 %v964, %v998
      %s1001 = scalar_lea.vmem [#allocation9], 38
      %v1002 = vld [vmem:[%s1001] ss:$8 sm:$0x3]
      %v1003 = vld [vmem:[#allocation4] sm:$0x3f]
      %v1004 = vld [vmem:[%s208] sm:$0x3f]
      %s1005 = sld [smem:[#allocation5 + $0x16]]
      %v1006 = vstv %s1005
      %v1007 = vmul.f32 %v1006, %v1003
      %s1008 = sld [smem:[#allocation5 + $0x47]]
      %v1009 = vstv %s1008
      %v1010 = vmul.f32 %v1009, %v1004
      %v1011 = vadd.f32 %v1007, %v1010
      %v1013 = vperm.slane %v1002, 0
      %v1014 = vperm.slane %v1002, 1
      %1018 = vst [vmem:[#allocation1] ss:$4 sm:$0xff] %v1011
      %v1019 = vld.sshfl [vmem:[#allocation1] sm:$0xff pattern:$0x73625140]
      %v1020 = vld.sshfl [vmem:[#allocation1 + $0x8] sm:$0xff pattern:$0x73625140]
      %v1021 = vld.sshfl [vmem:[#allocation1 + $0x10] sm:$0xff pattern:$0x73625140]
      %1022 = vrot.lane.b32.xlu0 %v1019, 2
      %v1023 = vpop.permute.xlu0 %1022
      %1024 = vrot.lane.b32.xlu0 %v1020, 2
      %v1025 = vpop.permute.xlu0 %1024
      %1026 = vrot.lane.b32.xlu0 %v1021, 2
      %v1027 = vpop.permute.xlu0 %1026
      %vm1028 = vcmask 15360
      %v1029 = vsel %vm1028, %v1023, %v1025
      %v1030 = vsel %vm1028, %v1025, %v1027
      %v1033 = vmul.f32 %v1013, %v1029
      %v1034 = vmul.f32 %v1014, %v1030
      %v1035 = vadd.f32 %v999, %v1033
      %v1036 = vadd.f32 %v1000, %v1034
      %s1037 = scalar_lea.vmem [#allocation9], 39
      %v1038 = vld [vmem:[%s1037] ss:$8 sm:$0x3]
      %v1039 = vld [vmem:[#allocation4] sm:$0x3f]
      %v1040 = vld [vmem:[%s208] sm:$0x3f]
      %s1041 = sld [smem:[#allocation5 + $0x17]]
      %v1042 = vstv %s1041
      %v1043 = vmul.f32 %v1042, %v1039
      %s1044 = sld [smem:[#allocation5 + $0x48]]
      %v1045 = vstv %s1044
      %v1046 = vmul.f32 %v1045, %v1040
      %v1047 = vadd.f32 %v1043, %v1046
      %v1049 = vperm.slane %v1038, 0
      %v1050 = vperm.slane %v1038, 1
      %1054 = vst [vmem:[#allocation1] ss:$4 sm:$0xff] %v1047
      %v1055 = vld.sshfl [vmem:[#allocation1] sm:$0xff pattern:$0x73625140]
      %v1056 = vld.sshfl [vmem:[#allocation1 + $0x8] sm:$0xff pattern:$0x73625140]
      %v1057 = vld.sshfl [vmem:[#allocation1 + $0x10] sm:$0xff pattern:$0x73625140]
      %1058 = vrot.lane.b32.xlu0 %v1055, 1
      %v1059 = vpop.permute.xlu0 %1058
      %1060 = vrot.lane.b32.xlu0 %v1056, 1
      %v1061 = vpop.permute.xlu0 %1060
      %1062 = vrot.lane.b32.xlu0 %v1057, 1
      %v1063 = vpop.permute.xlu0 %1062
      %vm1064 = vcmask 7168
      %v1065 = vsel %vm1064, %v1059, %v1061
      %v1066 = vsel %vm1064, %v1061, %v1063
      %v1069 = vmul.f32 %v1049, %v1065
      %v1070 = vmul.f32 %v1050, %v1066
      %v1071 = vadd.f32 %v1035, %v1069
      %v1072 = vadd.f32 %v1036, %v1070
      %s1073 = scalar_lea.vmem [#allocation9], 48
      %v1074 = vld [vmem:[%s1073] ss:$8 sm:$0x3]
      %v1075 = vld [vmem:[#allocation4 + $0x2] sm:$0xf]
      %v1076 = vld [vmem:[%s208 + $0x2] sm:$0xf]
      %s1077 = sld [smem:[#allocation5 + $0x18]]
      %v1078 = vstv %s1077
      %v1079 = vmul.f32 %v1078, %v1075
      %s1080 = sld [smem:[#allocation5 + $0x49]]
      %v1081 = vstv %s1080
      %v1082 = vmul.f32 %v1081, %v1076
      %v1083 = vadd.f32 %v1079, %v1082
      %v1085 = vperm.slane %v1074, 0
      %v1086 = vperm.slane %v1074, 1
      %1090 = vst [vmem:[#allocation1] ss:$4 sm:$0xff] %v1083
      %v1091 = vld.sshfl [vmem:[#allocation1] sm:$0xff pattern:$0x73625140]
      %v1092 = vld.sshfl [vmem:[#allocation1 + $0x8] sm:$0xff pattern:$0x73625140]
      %v1095 = vmul.f32 %v1085, %v1091
      %v1096 = vmul.f32 %v1086, %v1092
      %v1097 = vadd.f32 %v1071, %v1095
      %v1098 = vadd.f32 %v1072, %v1096
      %s1099 = scalar_lea.vmem [#allocation9], 49
      %v1100 = vld [vmem:[%s1099] ss:$8 sm:$0x3]
      %v1101 = vld [vmem:[#allocation4 + $0x2] sm:$0x3f]
      %v1102 = vld [vmem:[%s208 + $0x2] sm:$0x3f]
      %s1103 = sld [smem:[#allocation5 + $0x19]]
      %v1104 = vstv %s1103
      %v1105 = vmul.f32 %v1104, %v1101
      %s1106 = sld [smem:[#allocation5 + $0x4a]]
      %v1107 = vstv %s1106
      %v1108 = vmul.f32 %v1107, %v1102
      %v1109 = vadd.f32 %v1105, %v1108
      %v1111 = vperm.slane %v1100, 0
      %v1112 = vperm.slane %v1100, 1
      %1116 = vst [vmem:[#allocation1] ss:$4 sm:$0xff] %v1109
      %v1117 = vld.sshfl [vmem:[#allocation1] sm:$0xff pattern:$0x73625140]
      %v1118 = vld.sshfl [vmem:[#allocation1 + $0x8] sm:$0xff pattern:$0x73625140]
      %v1119 = vld.sshfl [vmem:[#allocation1 + $0x10] sm:$0xff pattern:$0x73625140]
      %1120 = vrot.lane.b32.xlu0 %v1117, 127
      %v1121 = vpop.permute.xlu0 %1120
      %1122 = vrot.lane.b32.xlu0 %v1118, 127
      %v1123 = vpop.permute.xlu0 %1122
      %1124 = vrot.lane.b32.xlu0 %v1119, 127
      %v1125 = vpop.permute.xlu0 %1124
      %vm1126 = vcmask 1039360
      %v1127 = vsel %vm1126, %v1121, %v1123
      %v1128 = vsel %vm1126, %v1123, %v1125
      %v1131 = vmul.f32 %v1111, %v1127
      %v1132 = vmul.f32 %v1112, %v1128
      %v1133 = vadd.f32 %v1097, %v1131
      %v1134 = vadd.f32 %v1098, %v1132
      %s1135 = scalar_lea.vmem [#allocation9], 50
      %v1136 = vld [vmem:[%s1135] ss:$8 sm:$0x3]
      %v1137 = vld [vmem:[#allocation4 + $0x2] sm:$0x3f]
      %v1138 = vld [vmem:[%s208 + $0x2] sm:$0x3f]
      %s1139 = sld [smem:[#allocation5 + $0x1a]]
      %v1140 = vstv %s1139
      %v1141 = vmul.f32 %v1140, %v1137
      %s1142 = sld [smem:[#allocation5 + $0x4b]]
      %v1143 = vstv %s1142
      %v1144 = vmul.f32 %v1143, %v1138
      %v1145 = vadd.f32 %v1141, %v1144
      %v1147 = vperm.slane %v1136, 0
      %v1148 = vperm.slane %v1136, 1
      %1152 = vst [vmem:[#allocation1] ss:$4 sm:$0xff] %v1145
      %v1153 = vld.sshfl [vmem:[#allocation1] sm:$0xff pattern:$0x73625140]
      %v1154 = vld.sshfl [vmem:[#allocation1 + $0x8] sm:$0xff pattern:$0x73625140]
      %v1155 = vld.sshfl [vmem:[#allocation1 + $0x10] sm:$0xff pattern:$0x73625140]
      %1156 = vrot.lane.b32.xlu0 %v1153, 126
      %v1157 = vpop.permute.xlu0 %1156
      %1158 = vrot.lane.b32.xlu0 %v1154, 126
      %v1159 = vpop.permute.xlu0 %1158
      %1160 = vrot.lane.b32.xlu0 %v1155, 126
      %v1161 = vpop.permute.xlu0 %1160
      %vm1162 = vcmask 1031168
      %v1163 = vsel %vm1162, %v1157, %v1159
      %v1164 = vsel %vm1162, %v1159, %v1161
      %v1167 = vmul.f32 %v1147, %v1163
      %v1168 = vmul.f32 %v1148, %v1164
      %v1169 = vadd.f32 %v1133, %v1167
      %v1170 = vadd.f32 %v1134, %v1168
      %s1171 = scalar_lea.vmem [#allocation9], 51
      %v1172 = vld [vmem:[%s1171] ss:$8 sm:$0x3]
      %v1173 = vld [vmem:[#allocation4 + $0x2] sm:$0x3f]
      %v1174 = vld [vmem:[%s208 + $0x2] sm:$0x3f]
      %s1175 = sld [smem:[#allocation5 + $0x1b]]
      %v1176 = vstv %s1175
      %v1177 = vmul.f32 %v1176, %v1173
      %s1178 = sld [smem:[#allocation5 + $0x4c]]
      %v1179 = vstv %s1178
      %v1180 = vmul.f32 %v1179, %v1174
      %v1181 = vadd.f32 %v1177, %v1180
      %v1183 = vperm.slane %v1172, 0
      %v1184 = vperm.slane %v1172, 1
      %1188 = vst [vmem:[#allocation1] ss:$4 sm:$0xff] %v1181
      %v1189 = vld.sshfl [vmem:[#allocation1] sm:$0xff pattern:$0x73625140]
      %v1190 = vld.sshfl [vmem:[#allocation1 + $0x8] sm:$0xff pattern:$0x73625140]
      %v1191 = vld.sshfl [vmem:[#allocation1 + $0x10] sm:$0xff pattern:$0x73625140]
      %1192 = vrot.lane.b32.xlu0 %v1189, 125
      %v1193 = vpop.permute.xlu0 %1192
      %1194 = vrot.lane.b32.xlu0 %v1190, 125
      %v1195 = vpop.permute.xlu0 %1194
      %1196 = vrot.lane.b32.xlu0 %v1191, 125
      %v1197 = vpop.permute.xlu0 %1196
      %vm1198 = vcmask 1022976
      %v1199 = vsel %vm1198, %v1193, %v1195
      %v1200 = vsel %vm1198, %v1195, %v1197
      %v1203 = vmul.f32 %v1183, %v1199
      %v1204 = vmul.f32 %v1184, %v1200
      %v1205 = vadd.f32 %v1169, %v1203
      %v1206 = vadd.f32 %v1170, %v1204
      %s1207 = scalar_lea.vmem [#allocation9], 52
      %v1208 = vld [vmem:[%s1207] ss:$8 sm:$0x3]
      %v1209 = vld [vmem:[#allocation4 + $0x2] sm:$0x3f]
      %v1210 = vld [vmem:[%s208 + $0x2] sm:$0x3f]
      %s1211 = sld [smem:[#allocation5 + $0x1c]]
      %v1212 = vstv %s1211
      %v1213 = vmul.f32 %v1212, %v1209
      %s1214 = sld [smem:[#allocation5 + $0x4d]]
      %v1215 = vstv %s1214
      %v1216 = vmul.f32 %v1215, %v1210
      %v1217 = vadd.f32 %v1213, %v1216
      %v1219 = vperm.slane %v1208, 0
      %v1220 = vperm.slane %v1208, 1
      %1224 = vst [vmem:[#allocation1] ss:$4 sm:$0xff] %v1217
      %v1225 = vld.sshfl [vmem:[#allocation1] sm:$0xff pattern:$0x73625140]
      %v1226 = vld.sshfl [vmem:[#allocation1 + $0x8] sm:$0xff pattern:$0x73625140]
      %v1227 = vld.sshfl [vmem:[#allocation1 + $0x10] sm:$0xff pattern:$0x73625140]
      %1228 = vrot.lane.b32.xlu0 %v1225, 115
      %v1229 = vpop.permute.xlu0 %1228
      %1230 = vrot.lane.b32.xlu0 %v1226, 115
      %v1231 = vpop.permute.xlu0 %1230
      %1232 = vrot.lane.b32.xlu0 %v1227, 115
      %v1233 = vpop.permute.xlu0 %1232
      %vm1234 = vcmask 941056
      %v1235 = vsel %vm1234, %v1229, %v1231
      %v1236 = vsel %vm1234, %v1231, %v1233
      %v1239 = vmul.f32 %v1219, %v1235
      %v1240 = vmul.f32 %v1220, %v1236
      %v1241 = vadd.f32 %v1205, %v1239
      %v1242 = vadd.f32 %v1206, %v1240
      %s1243 = scalar_lea.vmem [#allocation9], 53
      %v1244 = vld [vmem:[%s1243] ss:$8 sm:$0x3]
      %v1245 = vld [vmem:[#allocation4 + $0x2] sm:$0x3f]
      %v1246 = vld [vmem:[%s208 + $0x2] sm:$0x3f]
      %s1247 = sld [smem:[#allocation5 + $0x1d]]
      %v1248 = vstv %s1247
      %v1249 = vmul.f32 %v1248, %v1245
      %s1250 = sld [smem:[#allocation5 + $0x4e]]
      %v1251 = vstv %s1250
      %v1252 = vmul.f32 %v1251, %v1246
      %v1253 = vadd.f32 %v1249, %v1252
      %v1255 = vperm.slane %v1244, 0
      %v1256 = vperm.slane %v1244, 1
      %1260 = vst [vmem:[#allocation1] ss:$4 sm:$0xff] %v1253
      %v1261 = vld.sshfl [vmem:[#allocation1] sm:$0xff pattern:$0x73625140]
      %v1262 = vld.sshfl [vmem:[#allocation1 + $0x8] sm:$0xff pattern:$0x73625140]
      %v1263 = vld.sshfl [vmem:[#allocation1 + $0x10] sm:$0xff pattern:$0x73625140]
      %1264 = vrot.lane.b32.xlu0 %v1261, 114
      %v1265 = vpop.permute.xlu0 %1264
      %1266 = vrot.lane.b32.xlu0 %v1262, 114
      %v1267 = vpop.permute.xlu0 %1266
      %1268 = vrot.lane.b32.xlu0 %v1263, 114
      %v1269 = vpop.permute.xlu0 %1268
      %vm1270 = vcmask 932864
      %v1271 = vsel %vm1270, %v1265, %v1267
      %v1272 = vsel %vm1270, %v1267, %v1269
      %v1275 = vmul.f32 %v1255, %v1271
      %v1276 = vmul.f32 %v1256, %v1272
      %v1277 = vadd.f32 %v1241, %v1275
      %v1278 = vadd.f32 %v1242, %v1276
      %s1279 = scalar_lea.vmem [#allocation9], 54
      %v1280 = vld [vmem:[%s1279] ss:$8 sm:$0x3]
      %v1281 = vld [vmem:[#allocation4 + $0x2] sm:$0x3f]
      %v1282 = vld [vmem:[%s208 + $0x2] sm:$0x3f]
      %s1283 = sld [smem:[#allocation5 + $0x1e]]
      %v1284 = vstv %s1283
      %v1285 = vmul.f32 %v1284, %v1281
      %s1286 = sld [smem:[#allocation5 + $0x4f]]
      %v1287 = vstv %s1286
      %v1288 = vmul.f32 %v1287, %v1282
      %v1289 = vadd.f32 %v1285, %v1288
      %v1291 = vperm.slane %v1280, 0
      %v1292 = vperm.slane %v1280, 1
      %1296 = vst [vmem:[#allocation1] ss:$4 sm:$0xff] %v1289
      %v1297 = vld.sshfl [vmem:[#allocation1] sm:$0xff pattern:$0x73625140]
      %v1298 = vld.sshfl [vmem:[#allocation1 + $0x8] sm:$0xff pattern:$0x73625140]
      %v1299 = vld.sshfl [vmem:[#allocation1 + $0x10] sm:$0xff pattern:$0x73625140]
      %1300 = vrot.lane.b32.xlu0 %v1297, 113
      %v1301 = vpop.permute.xlu0 %1300
      %1302 = vrot.lane.b32.xlu0 %v1298, 113
      %v1303 = vpop.permute.xlu0 %1302
      %1304 = vrot.lane.b32.xlu0 %v1299, 113
      %v1305 = vpop.permute.xlu0 %1304
      %vm1306 = vcmask 924672
      %v1307 = vsel %vm1306, %v1301, %v1303
      %v1308 = vsel %vm1306, %v1303, %v1305
      %v1311 = vmul.f32 %v1291, %v1307
      %v1312 = vmul.f32 %v1292, %v1308
      %v1313 = vadd.f32 %v1277, %v1311
      %v1314 = vadd.f32 %v1278, %v1312
      %s1315 = scalar_lea.vmem [#allocation9], 55
      %v1316 = vld [vmem:[%s1315] ss:$8 sm:$0x3]
      %v1317 = vld [vmem:[#allocation4 + $0x2] sm:$0x3f]
      %v1318 = vld [vmem:[%s208 + $0x2] sm:$0x3f]
      %s1319 = sld [smem:[#allocation5 + $0x1f]]
      %v1320 = vstv %s1319
      %v1321 = vmul.f32 %v1320, %v1317
      %s1322 = sld [smem:[#allocation5 + $0x50]]
      %v1323 = vstv %s1322
      %v1324 = vmul.f32 %v1323, %v1318
      %v1325 = vadd.f32 %v1321, %v1324
      %v1327 = vperm.slane %v1316, 0
      %v1328 = vperm.slane %v1316, 1
      %1332 = vst [vmem:[#allocation1] ss:$4 sm:$0xff] %v1325
      %v1333 = vld.sshfl [vmem:[#allocation1] sm:$0xff pattern:$0x73625140]
      %v1334 = vld.sshfl [vmem:[#allocation1 + $0x8] sm:$0xff pattern:$0x73625140]
      %v1335 = vld.sshfl [vmem:[#allocation1 + $0x10] sm:$0xff pattern:$0x73625140]
      %1336 = vrot.lane.b32.xlu0 %v1333, 112
      %v1337 = vpop.permute.xlu0 %1336
      %1338 = vrot.lane.b32.xlu0 %v1334, 112
      %v1339 = vpop.permute.xlu0 %1338
      %1340 = vrot.lane.b32.xlu0 %v1335, 112
      %v1341 = vpop.permute.xlu0 %1340
      %vm1342 = vcmask 916480
      %v1343 = vsel %vm1342, %v1337, %v1339
      %v1344 = vsel %vm1342, %v1339, %v1341
      %v1347 = vmul.f32 %v1327, %v1343
      %v1348 = vmul.f32 %v1328, %v1344
      %v1349 = vadd.f32 %v1313, %v1347
      %v1350 = vadd.f32 %v1314, %v1348
      %s1351 = scalar_lea.vmem [#allocation9], 64
      %v1352 = vld [vmem:[%s1351] ss:$8 sm:$0x3]
      %v1353 = vld [vmem:[#allocation4 + $0x2] sm:$0x3f]
      %v1354 = vld [vmem:[%s208 + $0x2] sm:$0x3f]
      %s1355 = sld [smem:[#allocation5 + $0x20]]
      %v1356 = vstv %s1355
      %v1357 = vmul.f32 %v1356, %v1353
      %s1358 = sld [smem:[#allocation5 + $0x51]]
      %v1359 = vstv %s1358
      %v1360 = vmul.f32 %v1359, %v1354
      %v1361 = vadd.f32 %v1357, %v1360
      %v1363 = vperm.slane %v1352, 0
      %v1364 = vperm.slane %v1352, 1
      %1368 = vst [vmem:[#allocation1] ss:$4 sm:$0xff] %v1361
      %v1369 = vld.sshfl [vmem:[#allocation1] sm:$0xff pattern:$0x73625140]
      %v1370 = vld.sshfl [vmem:[#allocation1 + $0x8] sm:$0xff pattern:$0x73625140]
      %v1371 = vld.sshfl [vmem:[#allocation1 + $0x10] sm:$0xff pattern:$0x73625140]
      %1372 = vrot.lane.b32.xlu0 %v1369, 111
      %v1373 = vpop.permute.xlu0 %1372
      %1374 = vrot.lane.b32.xlu0 %v1370, 111
      %v1375 = vpop.permute.xlu0 %1374
      %1376 = vrot.lane.b32.xlu0 %v1371, 111
      %v1377 = vpop.permute.xlu0 %1376
      %vm1378 = vcmask 908288
      %v1379 = vsel %vm1378, %v1373, %v1375
      %v1380 = vsel %vm1378, %v1375, %v1377
      %v1383 = vmul.f32 %v1363, %v1379
      %v1384 = vmul.f32 %v1364, %v1380
      %v1385 = vadd.f32 %v1349, %v1383
      %v1386 = vadd.f32 %v1350, %v1384
      %s1387 = scalar_lea.vmem [#allocation9], 65
      %v1388 = vld [vmem:[%s1387] ss:$8 sm:$0x3]
      %v1389 = vld [vmem:[#allocation4 + $0x2] sm:$0x3f]
      %v1390 = vld [vmem:[%s208 + $0x2] sm:$0x3f]
      %s1391 = sld [smem:[#allocation5 + $0x21]]
      %v1392 = vstv %s1391
      %v1393 = vmul.f32 %v1392, %v1389
      %s1394 = sld [smem:[#allocation5 + $0x52]]
      %v1395 = vstv %s1394
      %v1396 = vmul.f32 %v1395, %v1390
      %v1397 = vadd.f32 %v1393, %v1396
      %v1399 = vperm.slane %v1388, 0
      %v1400 = vperm.slane %v1388, 1
      %1404 = vst [vmem:[#allocation1] ss:$4 sm:$0xff] %v1397
      %v1405 = vld.sshfl [vmem:[#allocation1] sm:$0xff pattern:$0x73625140]
      %v1406 = vld.sshfl [vmem:[#allocation1 + $0x8] sm:$0xff pattern:$0x73625140]
      %v1407 = vld.sshfl [vmem:[#allocation1 + $0x10] sm:$0xff pattern:$0x73625140]
      %1408 = vrot.lane.b32.xlu0 %v1405, 110
      %v1409 = vpop.permute.xlu0 %1408
      %1410 = vrot.lane.b32.xlu0 %v1406, 110
      %v1411 = vpop.permute.xlu0 %1410
      %1412 = vrot.lane.b32.xlu0 %v1407, 110
      %v1413 = vpop.permute.xlu0 %1412
      %vm1414 = vcmask 900096
      %v1415 = vsel %vm1414, %v1409, %v1411
      %v1416 = vsel %vm1414, %v1411, %v1413
      %v1419 = vmul.f32 %v1399, %v1415
      %v1420 = vmul.f32 %v1400, %v1416
      %v1421 = vadd.f32 %v1385, %v1419
      %v1422 = vadd.f32 %v1386, %v1420
      %s1423 = scalar_lea.vmem [#allocation9], 66
      %v1424 = vld [vmem:[%s1423] ss:$8 sm:$0x3]
      %v1425 = vld [vmem:[#allocation4 + $0x2] sm:$0x3f]
      %v1426 = vld [vmem:[%s208 + $0x2] sm:$0x3f]
      %s1427 = sld [smem:[#allocation5 + $0x22]]
      %v1428 = vstv %s1427
      %v1429 = vmul.f32 %v1428, %v1425
      %s1430 = sld [smem:[#allocation5 + $0x53]]
      %v1431 = vstv %s1430
      %v1432 = vmul.f32 %v1431, %v1426
      %v1433 = vadd.f32 %v1429, %v1432
      %v1435 = vperm.slane %v1424, 0
      %v1436 = vperm.slane %v1424, 1
      %1440 = vst [vmem:[#allocation1] ss:$4 sm:$0xff] %v1433
      %v1441 = vld.sshfl [vmem:[#allocation1] sm:$0xff pattern:$0x73625140]
      %v1442 = vld.sshfl [vmem:[#allocation1 + $0x8] sm:$0xff pattern:$0x73625140]
      %v1443 = vld.sshfl [vmem:[#allocation1 + $0x10] sm:$0xff pattern:$0x73625140]
      %1444 = vrot.lane.b32.xlu0 %v1441, 109
      %v1445 = vpop.permute.xlu0 %1444
      %1446 = vrot.lane.b32.xlu0 %v1442, 109
      %v1447 = vpop.permute.xlu0 %1446
      %1448 = vrot.lane.b32.xlu0 %v1443, 109
      %v1449 = vpop.permute.xlu0 %1448
      %vm1450 = vcmask 891904
      %v1451 = vsel %vm1450, %v1445, %v1447
      %v1452 = vsel %vm1450, %v1447, %v1449
      %v1455 = vmul.f32 %v1435, %v1451
      %v1456 = vmul.f32 %v1436, %v1452
      %v1457 = vadd.f32 %v1421, %v1455
      %v1458 = vadd.f32 %v1422, %v1456
      %s1459 = scalar_lea.vmem [#allocation9], 67
      %v1460 = vld [vmem:[%s1459] ss:$8 sm:$0x3]
      %v1461 = vld [vmem:[#allocation4 + $0x2] sm:$0x3f]
      %v1462 = vld [vmem:[%s208 + $0x2] sm:$0x3f]
      %s1463 = sld [smem:[#allocation5 + $0x23]]
      %v1464 = vstv %s1463
      %v1465 = vmul.f32 %v1464, %v1461
      %s1466 = sld [smem:[#allocation5 + $0x54]]
      %v1467 = vstv %s1466
      %v1468 = vmul.f32 %v1467, %v1462
      %v1469 = vadd.f32 %v1465, %v1468
      %v1471 = vperm.slane %v1460, 0
      %v1472 = vperm.slane %v1460, 1
      %1476 = vst [vmem:[#allocation1] ss:$4 sm:$0xff] %v1469
      %v1477 = vld.sshfl [vmem:[#allocation1] sm:$0xff pattern:$0x73625140]
      %v1478 = vld.sshfl [vmem:[#allocation1 + $0x8] sm:$0xff pattern:$0x73625140]
      %v1479 = vld.sshfl [vmem:[#allocation1 + $0x10] sm:$0xff pattern:$0x73625140]
      %1480 = vrot.lane.b32.xlu0 %v1477, 99
      %v1481 = vpop.permute.xlu0 %1480
      %1482 = vrot.lane.b32.xlu0 %v1478, 99
      %v1483 = vpop.permute.xlu0 %1482
      %1484 = vrot.lane.b32.xlu0 %v1479, 99
      %v1485 = vpop.permute.xlu0 %1484
      %vm1486 = vcmask 809984
      %v1487 = vsel %vm1486, %v1481, %v1483
      %v1488 = vsel %vm1486, %v1483, %v1485
      %v1491 = vmul.f32 %v1471, %v1487
      %v1492 = vmul.f32 %v1472, %v1488
      %v1493 = vadd.f32 %v1457, %v1491
      %v1494 = vadd.f32 %v1458, %v1492
      %s1495 = scalar_lea.vmem [#allocation9], 68
      %v1496 = vld [vmem:[%s1495] ss:$8 sm:$0x3]
      %v1497 = vld [vmem:[#allocation4 + $0x2] sm:$0x3f]
      %v1498 = vld [vmem:[%s208 + $0x2] sm:$0x3f]
      %s1499 = sld [smem:[#allocation5 + $0x24]]
      %v1500 = vstv %s1499
      %v1501 = vmul.f32 %v1500, %v1497
      %s1502 = sld [smem:[#allocation5 + $0x55]]
      %v1503 = vstv %s1502
      %v1504 = vmul.f32 %v1503, %v1498
      %v1505 = vadd.f32 %v1501, %v1504
      %v1507 = vperm.slane %v1496, 0
      %v1508 = vperm.slane %v1496, 1
      %1512 = vst [vmem:[#allocation1] ss:$4 sm:$0xff] %v1505
      %v1513 = vld.sshfl [vmem:[#allocation1] sm:$0xff pattern:$0x73625140]
      %v1514 = vld.sshfl [vmem:[#allocation1 + $0x8] sm:$0xff pattern:$0x73625140]
      %v1515 = vld.sshfl [vmem:[#allocation1 + $0x10] sm:$0xff pattern:$0x73625140]
      %1516 = vrot.lane.b32.xlu0 %v1513, 98
      %v1517 = vpop.permute.xlu0 %1516
      %1518 = vrot.lane.b32.xlu0 %v1514, 98
      %v1519 = vpop.permute.xlu0 %1518
      %1520 = vrot.lane.b32.xlu0 %v1515, 98
      %v1521 = vpop.permute.xlu0 %1520
      %vm1522 = vcmask 801792
      %v1523 = vsel %vm1522, %v1517, %v1519
      %v1524 = vsel %vm1522, %v1519, %v1521
      %v1527 = vmul.f32 %v1507, %v1523
      %v1528 = vmul.f32 %v1508, %v1524
      %v1529 = vadd.f32 %v1493, %v1527
      %v1530 = vadd.f32 %v1494, %v1528
      %s1531 = scalar_lea.vmem [#allocation9], 69
      %v1532 = vld [vmem:[%s1531] ss:$8 sm:$0x3]
      %v1533 = vld [vmem:[#allocation4 + $0x2] sm:$0x3f]
      %v1534 = vld [vmem:[%s208 + $0x2] sm:$0x3f]
      %s1535 = sld [smem:[#allocation5 + $0x25]]
      %v1536 = vstv %s1535
      %v1537 = vmul.f32 %v1536, %v1533
      %s1538 = sld [smem:[#allocation5 + $0x56]]
      %v1539 = vstv %s1538
      %v1540 = vmul.f32 %v1539, %v1534
      %v1541 = vadd.f32 %v1537, %v1540
      %v1543 = vperm.slane %v1532, 0
      %v1544 = vperm.slane %v1532, 1
      %1548 = vst [vmem:[#allocation1] ss:$4 sm:$0xff] %v1541
      %v1549 = vld.sshfl [vmem:[#allocation1] sm:$0xff pattern:$0x73625140]
      %v1550 = vld.sshfl [vmem:[#allocation1 + $0x8] sm:$0xff pattern:$0x73625140]
      %v1551 = vld.sshfl [vmem:[#allocation1 + $0x10] sm:$0xff pattern:$0x73625140]
      %1552 = vrot.lane.b32.xlu0 %v1549, 97
      %v1553 = vpop.permute.xlu0 %1552
      %1554 = vrot.lane.b32.xlu0 %v1550, 97
      %v1555 = vpop.permute.xlu0 %1554
      %1556 = vrot.lane.b32.xlu0 %v1551, 97
      %v1557 = vpop.permute.xlu0 %1556
      %vm1558 = vcmask 793600
      %v1559 = vsel %vm1558, %v1553, %v1555
      %v1560 = vsel %vm1558, %v1555, %v1557
      %v1563 = vmul.f32 %v1543, %v1559
      %v1564 = vmul.f32 %v1544, %v1560
      %v1565 = vadd.f32 %v1529, %v1563
      %v1566 = vadd.f32 %v1530, %v1564
      %s1567 = scalar_lea.vmem [#allocation9], 70
      %v1568 = vld [vmem:[%s1567] ss:$8 sm:$0x3]
      %v1569 = vld [vmem:[#allocation4 + $0x2] sm:$0x3f]
      %v1570 = vld [vmem:[%s208 + $0x2] sm:$0x3f]
      %s1571 = sld [smem:[#allocation5 + $0x26]]
      %v1572 = vstv %s1571
      %v1573 = vmul.f32 %v1572, %v1569
      %s1574 = sld [smem:[#allocation5 + $0x57]]
      %v1575 = vstv %s1574
      %v1576 = vmul.f32 %v1575, %v1570
      %v1577 = vadd.f32 %v1573, %v1576
      %v1579 = vperm.slane %v1568, 0
      %v1580 = vperm.slane %v1568, 1
      %1584 = vst [vmem:[#allocation1] ss:$4 sm:$0xff] %v1577
      %v1585 = vld.sshfl [vmem:[#allocation1] sm:$0xff pattern:$0x73625140]
      %v1586 = vld.sshfl [vmem:[#allocation1 + $0x8] sm:$0xff pattern:$0x73625140]
      %v1587 = vld.sshfl [vmem:[#allocation1 + $0x10] sm:$0xff pattern:$0x73625140]
      %1588 = vrot.lane.b32.xlu0 %v1585, 96
      %v1589 = vpop.permute.xlu0 %1588
      %1590 = vrot.lane.b32.xlu0 %v1586, 96
      %v1591 = vpop.permute.xlu0 %1590
      %1592 = vrot.lane.b32.xlu0 %v1587, 96
      %v1593 = vpop.permute.xlu0 %1592
      %vm1594 = vcmask 785408
      %v1595 = vsel %vm1594, %v1589, %v1591
      %v1596 = vsel %vm1594, %v1591, %v1593
      %v1599 = vmul.f32 %v1579, %v1595
      %v1600 = vmul.f32 %v1580, %v1596
      %v1601 = vadd.f32 %v1565, %v1599
      %v1602 = vadd.f32 %v1566, %v1600
      %s1603 = scalar_lea.vmem [#allocation9], 71
      %v1604 = vld [vmem:[%s1603] ss:$8 sm:$0x3]
      %v1605 = vld [vmem:[#allocation4 + $0x2] sm:$0x3f]
      %v1606 = vld [vmem:[%s208 + $0x2] sm:$0x3f]
      %s1607 = sld [smem:[#allocation5 + $0x27]]
      %v1608 = vstv %s1607
      %v1609 = vmul.f32 %v1608, %v1605
      %s1610 = sld [smem:[#allocation5 + $0x58]]
      %v1611 = vstv %s1610
      %v1612 = vmul.f32 %v1611, %v1606
      %v1613 = vadd.f32 %v1609, %v1612
      %v1615 = vperm.slane %v1604, 0
      %v1616 = vperm.slane %v1604, 1
      %1620 = vst [vmem:[#allocation1] ss:$4 sm:$0xff] %v1613
      %v1621 = vld.sshfl [vmem:[#allocation1] sm:$0xff pattern:$0x73625140]
      %v1622 = vld.sshfl [vmem:[#allocation1 + $0x8] sm:$0xff pattern:$0x73625140]
      %v1623 = vld.sshfl [vmem:[#allocation1 + $0x10] sm:$0xff pattern:$0x73625140]
      %1624 = vrot.lane.b32.xlu0 %v1621, 95
      %v1625 = vpop.permute.xlu0 %1624
      %1626 = vrot.lane.b32.xlu0 %v1622, 95
      %v1627 = vpop.permute.xlu0 %1626
      %1628 = vrot.lane.b32.xlu0 %v1623, 95
      %v1629 = vpop.permute.xlu0 %1628
      %vm1630 = vcmask 777216
      %v1631 = vsel %vm1630, %v1625, %v1627
      %v1632 = vsel %vm1630, %v1627, %v1629
      %v1635 = vmul.f32 %v1615, %v1631
      %v1636 = vmul.f32 %v1616, %v1632
      %v1637 = vadd.f32 %v1601, %v1635
      %v1638 = vadd.f32 %v1602, %v1636
      %s1639 = scalar_lea.vmem [#allocation9], 80
      %v1640 = vld [vmem:[%s1639] ss:$8 sm:$0x3]
      %v1641 = vld [vmem:[#allocation4 + $0x2] sm:$0x3f]
      %v1642 = vld [vmem:[%s208 + $0x2] sm:$0x3f]
      %s1643 = sld [smem:[#allocation5 + $0x28]]
      %v1644 = vstv %s1643
      %v1645 = vmul.f32 %v1644, %v1641
      %s1646 = sld [smem:[#allocation5 + $0x59]]
      %v1647 = vstv %s1646
      %v1648 = vmul.f32 %v1647, %v1642
      %v1649 = vadd.f32 %v1645, %v1648
      %v1651 = vperm.slane %v1640, 0
      %v1652 = vperm.slane %v1640, 1
      %1656 = vst [vmem:[#allocation1] ss:$4 sm:$0xff] %v1649
      %v1657 = vld.sshfl [vmem:[#allocation1] sm:$0xff pattern:$0x73625140]
      %v1658 = vld.sshfl [vmem:[#allocation1 + $0x8] sm:$0xff pattern:$0x73625140]
      %v1659 = vld.sshfl [vmem:[#allocation1 + $0x10] sm:$0xff pattern:$0x73625140]
      %1660 = vrot.lane.b32.xlu0 %v1657, 94
      %v1661 = vpop.permute.xlu0 %1660
      %1662 = vrot.lane.b32.xlu0 %v1658, 94
      %v1663 = vpop.permute.xlu0 %1662
      %1664 = vrot.lane.b32.xlu0 %v1659, 94
      %v1665 = vpop.permute.xlu0 %1664
      %vm1666 = vcmask 769024
      %v1667 = vsel %vm1666, %v1661, %v1663
      %v1668 = vsel %vm1666, %v1663, %v1665
      %v1671 = vmul.f32 %v1651, %v1667
      %v1672 = vmul.f32 %v1652, %v1668
      %v1673 = vadd.f32 %v1637, %v1671
      %v1674 = vadd.f32 %v1638, %v1672
      %s1675 = scalar_lea.vmem [#allocation9], 81
      %v1676 = vld [vmem:[%s1675] ss:$8 sm:$0x3]
      %v1677 = vld [vmem:[#allocation4 + $0x2] sm:$0x3f]
      %v1678 = vld [vmem:[%s208 + $0x2] sm:$0x3f]
      %s1679 = sld [smem:[#allocation5 + $0x29]]
      %v1680 = vstv %s1679
      %v1681 = vmul.f32 %v1680, %v1677
      %s1682 = sld [smem:[#allocation5 + $0x5a]]
      %v1683 = vstv %s1682
      %v1684 = vmul.f32 %v1683, %v1678
      %v1685 = vadd.f32 %v1681, %v1684
      %v1687 = vperm.slane %v1676, 0
      %v1688 = vperm.slane %v1676, 1
      %1692 = vst [vmem:[#allocation1] ss:$4 sm:$0xff] %v1685
      %v1693 = vld.sshfl [vmem:[#allocation1] sm:$0xff pattern:$0x73625140]
      %v1694 = vld.sshfl [vmem:[#allocation1 + $0x8] sm:$0xff pattern:$0x73625140]
      %v1695 = vld.sshfl [vmem:[#allocation1 + $0x10] sm:$0xff pattern:$0x73625140]
      %1696 = vrot.lane.b32.xlu0 %v1693, 93
      %v1697 = vpop.permute.xlu0 %1696
      %1698 = vrot.lane.b32.xlu0 %v1694, 93
      %v1699 = vpop.permute.xlu0 %1698
      %1700 = vrot.lane.b32.xlu0 %v1695, 93
      %v1701 = vpop.permute.xlu0 %1700
      %vm1702 = vcmask 760832
      %v1703 = vsel %vm1702, %v1697, %v1699
      %v1704 = vsel %vm1702, %v1699, %v1701
      %v1707 = vmul.f32 %v1687, %v1703
      %v1708 = vmul.f32 %v1688, %v1704
      %v1709 = vadd.f32 %v1673, %v1707
      %v1710 = vadd.f32 %v1674, %v1708
      %s1711 = scalar_lea.vmem [#allocation9], 82
      %v1712 = vld [vmem:[%s1711] ss:$8 sm:$0x3]
      %v1713 = vld [vmem:[#allocation4 + $0x2] sm:$0x3f]
      %v1714 = vld [vmem:[%s208 + $0x2] sm:$0x3f]
      %s1715 = sld [smem:[#allocation5 + $0x2a]]
      %v1716 = vstv %s1715
      %v1717 = vmul.f32 %v1716, %v1713
      %s1718 = sld [smem:[#allocation5 + $0x5b]]
      %v1719 = vstv %s1718
      %v1720 = vmul.f32 %v1719, %v1714
      %v1721 = vadd.f32 %v1717, %v1720
      %v1723 = vperm.slane %v1712, 0
      %v1724 = vperm.slane %v1712, 1
      %1728 = vst [vmem:[#allocation1] ss:$4 sm:$0xff] %v1721
      %v1729 = vld.sshfl [vmem:[#allocation1] sm:$0xff pattern:$0x73625140]
      %v1730 = vld.sshfl [vmem:[#allocation1 + $0x8] sm:$0xff pattern:$0x73625140]
      %v1731 = vld.sshfl [vmem:[#allocation1 + $0x10] sm:$0xff pattern:$0x73625140]
      %1732 = vrot.lane.b32.xlu0 %v1729, 83
      %v1733 = vpop.permute.xlu0 %1732
      %1734 = vrot.lane.b32.xlu0 %v1730, 83
      %v1735 = vpop.permute.xlu0 %1734
      %1736 = vrot.lane.b32.xlu0 %v1731, 83
      %v1737 = vpop.permute.xlu0 %1736
      %vm1738 = vcmask 678912
      %v1739 = vsel %vm1738, %v1733, %v1735
      %v1740 = vsel %vm1738, %v1735, %v1737
      %v1743 = vmul.f32 %v1723, %v1739
      %v1744 = vmul.f32 %v1724, %v1740
      %v1745 = vadd.f32 %v1709, %v1743
      %v1746 = vadd.f32 %v1710, %v1744
      %s1747 = scalar_lea.vmem [#allocation9], 83
      %v1748 = vld [vmem:[%s1747] ss:$8 sm:$0x3]
      %v1749 = vld [vmem:[#allocation4 + $0x2] sm:$0x3f]
      %v1750 = vld [vmem:[%s208 + $0x2] sm:$0x3f]
      %s1751 = sld [smem:[#allocation5 + $0x2b]]
      %v1752 = vstv %s1751
      %v1753 = vmul.f32 %v1752, %v1749
      %s1754 = sld [smem:[#allocation5 + $0x5c]]
      %v1755 = vstv %s1754
      %v1756 = vmul.f32 %v1755, %v1750
      %v1757 = vadd.f32 %v1753, %v1756
      %v1759 = vperm.slane %v1748, 0
      %v1760 = vperm.slane %v1748, 1
      %1764 = vst [vmem:[#allocation1] ss:$4 sm:$0xff] %v1757
      %v1765 = vld.sshfl [vmem:[#allocation1] sm:$0xff pattern:$0x73625140]
      %v1766 = vld.sshfl [vmem:[#allocation1 + $0x8] sm:$0xff pattern:$0x73625140]
      %v1767 = vld.sshfl [vmem:[#allocation1 + $0x10] sm:$0xff pattern:$0x73625140]
      %1768 = vrot.lane.b32.xlu0 %v1765, 82
      %v1769 = vpop.permute.xlu0 %1768
      %1770 = vrot.lane.b32.xlu0 %v1766, 82
      %v1771 = vpop.permute.xlu0 %1770
      %1772 = vrot.lane.b32.xlu0 %v1767, 82
      %v1773 = vpop.permute.xlu0 %1772
      %vm1774 = vcmask 670720
      %v1775 = vsel %vm1774, %v1769, %v1771
      %v1776 = vsel %vm1774, %v1771, %v1773
      %v1779 = vmul.f32 %v1759, %v1775
      %v1780 = vmul.f32 %v1760, %v1776
      %v1781 = vadd.f32 %v1745, %v1779
      %v1782 = vadd.f32 %v1746, %v1780
      %s1783 = scalar_lea.vmem [#allocation9], 84
      %v1784 = vld [vmem:[%s1783] ss:$8 sm:$0x3]
      %v1785 = vld [vmem:[#allocation4 + $0x2] sm:$0x3f]
      %v1786 = vld [vmem:[%s208 + $0x2] sm:$0x3f]
      %s1787 = sld [smem:[#allocation5 + $0x2c]]
      %v1788 = vstv %s1787
      %v1789 = vmul.f32 %v1788, %v1785
      %s1790 = sld [smem:[#allocation5 + $0x5d]]
      %v1791 = vstv %s1790
      %v1792 = vmul.f32 %v1791, %v1786
      %v1793 = vadd.f32 %v1789, %v1792
      %v1795 = vperm.slane %v1784, 0
      %v1796 = vperm.slane %v1784, 1
      %1800 = vst [vmem:[#allocation1] ss:$4 sm:$0xff] %v1793
      %v1801 = vld.sshfl [vmem:[#allocation1] sm:$0xff pattern:$0x73625140]
      %v1802 = vld.sshfl [vmem:[#allocation1 + $0x8] sm:$0xff pattern:$0x73625140]
      %v1803 = vld.sshfl [vmem:[#allocation1 + $0x10] sm:$0xff pattern:$0x73625140]
      %1804 = vrot.lane.b32.xlu0 %v1801, 81
      %v1805 = vpop.permute.xlu0 %1804
      %1806 = vrot.lane.b32.xlu0 %v1802, 81
      %v1807 = vpop.permute.xlu0 %1806
      %1808 = vrot.lane.b32.xlu0 %v1803, 81
      %v1809 = vpop.permute.xlu0 %1808
      %vm1810 = vcmask 662528
      %v1811 = vsel %vm1810, %v1805, %v1807
      %v1812 = vsel %vm1810, %v1807, %v1809
      %v1815 = vmul.f32 %v1795, %v1811
      %v1816 = vmul.f32 %v1796, %v1812
      %v1817 = vadd.f32 %v1781, %v1815
      %v1818 = vadd.f32 %v1782, %v1816
      %s1819 = scalar_lea.vmem [#allocation9], 85
      %v1820 = vld [vmem:[%s1819] ss:$8 sm:$0x3]
      %v1821 = vld [vmem:[#allocation4 + $0x2] sm:$0x3f]
      %v1822 = vld [vmem:[%s208 + $0x2] sm:$0x3f]
      %s1823 = sld [smem:[#allocation5 + $0x2d]]
      %v1824 = vstv %s1823
      %v1825 = vmul.f32 %v1824, %v1821
      %s1826 = sld [smem:[#allocation5 + $0x5e]]
      %v1827 = vstv %s1826
      %v1828 = vmul.f32 %v1827, %v1822
      %v1829 = vadd.f32 %v1825, %v1828
      %v1831 = vperm.slane %v1820, 0
      %v1832 = vperm.slane %v1820, 1
      %1836 = vst [vmem:[#allocation1] ss:$4 sm:$0xff] %v1829
      %v1837 = vld.sshfl [vmem:[#allocation1] sm:$0xff pattern:$0x73625140]
      %v1838 = vld.sshfl [vmem:[#allocation1 + $0x8] sm:$0xff pattern:$0x73625140]
      %v1839 = vld.sshfl [vmem:[#allocation1 + $0x10] sm:$0xff pattern:$0x73625140]
      %1840 = vrot.lane.b32.xlu0 %v1837, 80
      %v1841 = vpop.permute.xlu0 %1840
      %1842 = vrot.lane.b32.xlu0 %v1838, 80
      %v1843 = vpop.permute.xlu0 %1842
      %1844 = vrot.lane.b32.xlu0 %v1839, 80
      %v1845 = vpop.permute.xlu0 %1844
      %vm1846 = vcmask 654336
      %v1847 = vsel %vm1846, %v1841, %v1843
      %v1848 = vsel %vm1846, %v1843, %v1845
      %v1851 = vmul.f32 %v1831, %v1847
      %v1852 = vmul.f32 %v1832, %v1848
      %v1853 = vadd.f32 %v1817, %v1851
      %v1854 = vadd.f32 %v1818, %v1852
      %s1855 = scalar_lea.vmem [#allocation9], 86
      %v1856 = vld [vmem:[%s1855] ss:$8 sm:$0x3]
      %v1857 = vld [vmem:[#allocation4 + $0x2] sm:$0x3f]
      %v1858 = vld [vmem:[%s208 + $0x2] sm:$0x3f]
      %s1859 = sld [smem:[#allocation5 + $0x2e]]
      %v1860 = vstv %s1859
      %v1861 = vmul.f32 %v1860, %v1857
      %s1862 = sld [smem:[#allocation5 + $0x5f]]
      %v1863 = vstv %s1862
      %v1864 = vmul.f32 %v1863, %v1858
      %v1865 = vadd.f32 %v1861, %v1864
      %v1867 = vperm.slane %v1856, 0
      %v1868 = vperm.slane %v1856, 1
      %1872 = vst [vmem:[#allocation1] ss:$4 sm:$0xff] %v1865
      %v1873 = vld.sshfl [vmem:[#allocation1] sm:$0xff pattern:$0x73625140]
      %v1874 = vld.sshfl [vmem:[#allocation1 + $0x8] sm:$0xff pattern:$0x73625140]
      %v1875 = vld.sshfl [vmem:[#allocation1 + $0x10] sm:$0xff pattern:$0x73625140]
      %1876 = vrot.lane.b32.xlu0 %v1873, 79
      %v1877 = vpop.permute.xlu0 %1876
      %1878 = vrot.lane.b32.xlu0 %v1874, 79
      %v1879 = vpop.permute.xlu0 %1878
      %1880 = vrot.lane.b32.xlu0 %v1875, 79
      %v1881 = vpop.permute.xlu0 %1880
      %vm1882 = vcmask 646144
      %v1883 = vsel %vm1882, %v1877, %v1879
      %v1884 = vsel %vm1882, %v1879, %v1881
      %v1887 = vmul.f32 %v1867, %v1883
      %v1888 = vmul.f32 %v1868, %v1884
      %v1889 = vadd.f32 %v1853, %v1887
      %v1890 = vadd.f32 %v1854, %v1888
      %s1891 = scalar_lea.vmem [#allocation9], 87
      %v1892 = vld [vmem:[%s1891] ss:$8 sm:$0x3]
      %v1893 = vld [vmem:[#allocation4 + $0x2] sm:$0x3f]
      %v1894 = vld [vmem:[%s208 + $0x2] sm:$0x3f]
      %s1895 = sld [smem:[#allocation5 + $0x2f]]
      %v1896 = vstv %s1895
      %v1897 = vmul.f32 %v1896, %v1893
      %s1898 = sld [smem:[#allocation5 + $0x60]]
      %v1899 = vstv %s1898
      %v1900 = vmul.f32 %v1899, %v1894
      %v1901 = vadd.f32 %v1897, %v1900
      %v1903 = vperm.slane %v1892, 0
      %v1904 = vperm.slane %v1892, 1
      %1908 = vst [vmem:[#allocation1] ss:$4 sm:$0xff] %v1901
      %v1909 = vld.sshfl [vmem:[#allocation1] sm:$0xff pattern:$0x73625140]
      %v1910 = vld.sshfl [vmem:[#allocation1 + $0x8] sm:$0xff pattern:$0x73625140]
      %v1911 = vld.sshfl [vmem:[#allocation1 + $0x10] sm:$0xff pattern:$0x73625140]
      %1912 = vrot.lane.b32.xlu0 %v1909, 78
      %v1913 = vpop.permute.xlu0 %1912
      %1914 = vrot.lane.b32.xlu0 %v1910, 78
      %v1915 = vpop.permute.xlu0 %1914
      %1916 = vrot.lane.b32.xlu0 %v1911, 78
      %v1917 = vpop.permute.xlu0 %1916
      %vm1918 = vcmask 637952
      %v1919 = vsel %vm1918, %v1913, %v1915
      %v1920 = vsel %vm1918, %v1915, %v1917
      %v1923 = vmul.f32 %v1903, %v1919
      %v1924 = vmul.f32 %v1904, %v1920
      %v1925 = vadd.f32 %v1889, %v1923
      %v1926 = vadd.f32 %v1890, %v1924
      %s1927 = scalar_lea.vmem [#allocation9], 96
      %v1928 = vld [vmem:[%s1927] ss:$8 sm:$0x3]
      %v1929 = vld [vmem:[#allocation4 + $0x2] sm:$0x3f]
      %v1930 = vld [vmem:[%s208 + $0x2] sm:$0x3f]
      %s1931 = sld [smem:[#allocation5 + $0x30]]
      %v1932 = vstv %s1931
      %v1933 = vmul.f32 %v1932, %v1929
      %s1934 = sld [smem:[#allocation5 + $0x61]]
      %v1935 = vstv %s1934
      %v1936 = vmul.f32 %v1935, %v1930
      %v1937 = vadd.f32 %v1933, %v1936
      %v1939 = vperm.slane %v1928, 0
      %v1940 = vperm.slane %v1928, 1
      %1944 = vst [vmem:[#allocation1] ss:$4 sm:$0xff] %v1937
      %v1945 = vld.sshfl [vmem:[#allocation1] sm:$0xff pattern:$0x73625140]
      %v1946 = vld.sshfl [vmem:[#allocation1 + $0x8] sm:$0xff pattern:$0x73625140]
      %v1947 = vld.sshfl [vmem:[#allocation1 + $0x10] sm:$0xff pattern:$0x73625140]
      %1948 = vrot.lane.b32.xlu0 %v1945, 77
      %v1949 = vpop.permute.xlu0 %1948
      %1950 = vrot.lane.b32.xlu0 %v1946, 77
      %v1951 = vpop.permute.xlu0 %1950
      %1952 = vrot.lane.b32.xlu0 %v1947, 77
      %v1953 = vpop.permute.xlu0 %1952
      %vm1954 = vcmask 629760
      %v1955 = vsel %vm1954, %v1949, %v1951
      %v1956 = vsel %vm1954, %v1951, %v1953
      %v1959 = vmul.f32 %v1939, %v1955
      %v1960 = vmul.f32 %v1940, %v1956
      %v1961 = vadd.f32 %v1925, %v1959
      %v1962 = vadd.f32 %v1926, %v1960
      %v1963 = vxor.u32 %v1961, 2147483648
      %v1964 = vxor.u32 %v1962, 2147483648
      %v1965 = vmul.f32 %v1963, 1.442695
      %v1966 = vpow.pop %v1965
      %v1967 = vmul.f32 %v1964, 1.442695
      %v1968 = vpow.pop %v1967
      %v1969 = vadd.f32 %v1966, 1.0
      %v1970 = vadd.f32 %v1968, 1.0
      %v1971 = vrcp.pop %v1969
      %v1972 = vmul.f32 %v1969, %v1971
      %v1973 = vsub.f32 1.0, %v1972
      %v1974 = vmul.f32 %v1971, %v1973
      %v1975 = vadd.f32 %v1971, %v1974
      %vm1976 = vweird.f32 %v1969
      %vm1977 = vweird.f32 %v1971
      %vm1978 = vmor %vm1976, %vm1977
      %v1979 = vsel %vm1978, %v1971, %v1975
      %v1980 = vand.u32 2147483647, %v1969
      %vm1981 = vcmp.eq.f32.partialorder %v1980, 8.507059e+37
      %v1982 = vand.u32 %v1969, 2147483648
      %v1983 = vor.u32 1.1754944e-38, %v1982
      %v1984 = vsel %vm1981, %v1983, %v1979
      %v1985 = vmul.f32 1.0, %v1984
      %v1986 = vrcp.pop %v1970
      %v1987 = vmul.f32 %v1970, %v1986
      %v1988 = vsub.f32 1.0, %v1987
      %v1989 = vmul.f32 %v1986, %v1988
      %v1990 = vadd.f32 %v1986, %v1989
      %vm1991 = vweird.f32 %v1970
      %vm1992 = vweird.f32 %v1986
      %vm1993 = vmor %vm1991, %vm1992
      %v1994 = vsel %vm1993, %v1986, %v1990
      %v1995 = vand.u32 2147483647, %v1970
      %vm1996 = vcmp.eq.f32.partialorder %v1995, 8.507059e+37
      %v1997 = vand.u32 %v1970, 2147483648
      %v1998 = vor.u32 1.1754944e-38, %v1997
      %v1999 = vsel %vm1996, %v1998, %v1994
      %v2000 = vmul.f32 1.0, %v1999
      %v2003 = vrot.slane %v2000, 7
      %vm2004 = vcmask 1040384
      %v2005 = vsel %vm2004, %v1985, %v2003
      %v2006 = vsel %vm133, %v1985, %v2003
      %v2007 = vrot.slane %v2006, 1
      %v2010 = vlaneseq
      %vm2011 = vcmp.ge.s32.totalorder %v2010, 0
      %vm2012 = vcmp.lt.s32.totalorder %v2010, 256
      %vm2013 = vmand %vm2011, %vm2012
      %2014 = vst.msk [vmem:[#allocation12] sm:$0x3] %vm2013, %v2005
      %2015 = vst.msk [vmem:[#allocation12 + $0x2] sm:$0x3] %vm2013, %v2007
    $region33: #{tpu_custom_call.1} parent=1 // pred_fallthru
      _
    // Predicated region
    $region34: #{tpu_custom_call.1} parent=1 // pred_check
      _
    $region35: #{tpu_custom_call.1} parent=1 // pred_check_branch
      %2017 = sbr.rel (0) target = $region37
    $region36: #{tpu_custom_call.1} parent=1 // pred_region
      %2019 = vsyncadd [#allocation7], 0
      %s2020 = sshll.u32 [#allocation12], 4
      %s2021 = int_to_ptr.vmem [resolvable:$true] %s2020
      %s2022 = sshll.u32 %s3, 4
      %s2023 = int_to_ptr.hbm [resolvable:$true] %s2022
      %2028 = dma.vmem_to_hbm [thread:$0]  %s2021, 64, %s2023, [#allocation7], 32, 32, 2
    $region37: #{tpu_custom_call.1} parent=1 // pred_fallthru
      _
    // Predicated region
    $region38: #{tpu_custom_call.1} parent=1 // pred_check
      _
    $region39: #{tpu_custom_call.1} parent=1 // pred_check_branch
      %2030 = sbr.rel (0) target = $region41
    $region40: #{tpu_custom_call.1} parent=1 // pred_region
      %2032 = dma.done [#allocation7], 64
    $region41: #{tpu_custom_call.1} parent=1 // pred_fallthru
      _
    %2033 = vsyncpa [#allocation6], 1
    %2034 = vsyncpa [#allocation11], 1
    %2035 = vsyncpa [#allocation7], 1
    %2036 = vsyncpa [#allocation8], 1

</llo_original>
